<compile_context>
chip_gen: v6e
topology: v6e:2x2x1
jax: 0.10.0
libtpu: 0.0.40
codegen_flags: <defaults>
</compile_context>

<pallas_src>
import functools

import jax
import jax.numpy as jnp
from jax.experimental import pallas as pl
from jax.experimental.pallas import tpu as pltpu

NUM_MATH_LAYERS = 4      # math_layer(inputs) + 3 hidden math_layer()
NUM_HIDDEN_ADJ = 6       # adjusters t = 0..5 feed math layers i = 1..3
NUM_OUT_ADJ = 4          # adjusters t = 6..9 feed the output layer (folded)
NUM_ADJ = NUM_HIDDEN_ADJ + NUM_OUT_ADJ
K_SIN = 1.0
EXP_CLIP = 4.0
LOG_CLIP = 0.005
CHUNK_ROWS = 8           # inner sub-chunk height (one f32 sublane group)


def _linear4(w_ref, base, rows):
    """y[o] = sum_c W[o, c] * rows[c]; W scalars from flat SMEM (row-major 4x4)."""
    out = []
    for o in range(4):
        acc = w_ref[base + 4 * o] * rows[0]
        for c in range(1, 4):
            acc = acc + w_ref[base + 4 * o + c] * rows[c]
        out.append(acc)
    return out


def jump_kernel(x_ref, wfc_ref, wadj_ref, vout_ref, bout_ref, o_ref):
    # x_ref: (4, block_rows, lanes); o_ref: (block_rows, lanes).
    n_chunks = x_ref.shape[1] // CHUNK_ROWS

    # Inner loop over (8, lanes) sub-chunks bounds the live vreg set (~48 regs)
    # so the full skip-connected layer stack stays in registers (no spills).
    @pl.loop(0, n_chunks)
    def _(ci):
        off = pl.multiple_of(ci * CHUNK_ROWS, CHUNK_ROWS)
        acts = [[x_ref[f, pl.ds(off, CHUNK_ROWS), :] for f in range(4)]]
        t = 0
        for i in range(NUM_MATH_LAYERS):
            inp = list(acts[-1])
            # skip-adjust connections: PyTorch `input_x += adjuster[t](inputs[j])`
            for j in range(i):
                adj = _linear4(wadj_ref, 16 * t, acts[j])
                for o in range(4):
                    inp[o] = inp[o] + adj[o]
                t += 1
            acts[-1] = inp                      # mimic in-place `+=` aliasing
            h = _linear4(wfc_ref, 16 * i, inp)
            # math_act: row0 identity, row1 clipped exp, row2 sin, row3 clipped log
            h[1] = jnp.exp(jnp.minimum(h[1], EXP_CLIP))
            s2 = jnp.sin(h[2])
            h[2] = s2 if K_SIN == 1.0 else K_SIN * s2
            h[3] = jnp.log(jnp.maximum(h[3], LOG_CLIP))
            acts.append(h)

        # Output layer with the i==4 adjusters folded into vout on the host:
        #   out = bias + sum_{j=0..3} (wout @ Wadj[6+j]) . acts[j] + wout . acts[4]
        # acts[j] here are the already-adjusted (aliased) values -> exact match.
        a4 = acts[NUM_MATH_LAYERS]
        out = vout_ref[16] * a4[0] + bout_ref[0]    # bias folded into the chain start
        for c in range(1, 4):
            out = out + vout_ref[16 + c] * a4[c]
        for j in range(4):
            for c in range(4):
                out = out + vout_ref[4 * j + c] * acts[j][c]
        o_ref[pl.ds(off, CHUNK_ROWS), :] = out.astype(o_ref.dtype)


def _choose_tiling(B, lanes, *, max_block_rows=256):
    """Pick (num_blocks, block_rows) from B: low padding, amortized step
    overhead, and >=2 (even) blocks so both v7x TensorCores are used."""
    rows = -(-B // lanes)                          # batch rows of width `lanes`
    rows = max(-(-rows // CHUNK_ROWS) * CHUNK_ROWS, CHUNK_ROWS)
    if rows >= 2 * CHUNK_ROWS:
        num_blocks = 2
        while -(-rows // num_blocks) > max_block_rows:
            num_blocks += 2
    else:
        num_blocks = 1
    block_rows = -(-rows // num_blocks)
    block_rows = -(-block_rows // CHUNK_ROWS) * CHUNK_ROWS
    return num_blocks, block_rows


def jump_model_forward(x, wfc, wadj, wout, bout, *, lanes=256, max_block_rows=256):
    """x: (B, 4); wfc: (4,4,4); wadj: (10,4,4); wout: (1,4); bout: (1,) -> (B, 1)."""
    B, F = x.shape
    assert F == 4
    assert lanes in (128, 256)                     # chunk lane width bounds live vregs
    num_blocks, block_rows = _choose_tiling(B, lanes, max_block_rows=max_block_rows)
    total_rows = num_blocks * block_rows
    Bp = total_rows * lanes

    # Feature-major relayout + pad (single fused HBM copy).
    # TODO(synk): on v5e, accept x already in (4, B) feature-major layout from the
    # producer to save this extra HBM pass (~30-40% of end-to-end there).
    xt = jnp.pad(x.astype(jnp.float32).T, ((0, 0), (0, Bp - B)))
    xt = xt.reshape(4, total_rows, lanes)

    wfc_flat = wfc.astype(jnp.float32).reshape(-1)               # (64,)
    wadj_f = wadj.astype(jnp.float32)
    wadj_hidden = wadj_f[:NUM_HIDDEN_ADJ].reshape(-1)            # (96,)
    wout_row = wout.astype(jnp.float32).reshape(4)
    # Fold the output-layer adjusters (t = 6..9) into the output weights.
    dot = functools.partial(jnp.dot, precision=jax.lax.Precision.HIGHEST)
    v = [dot(wout_row, wadj_f[NUM_HIDDEN_ADJ + j]) for j in range(NUM_OUT_ADJ)]
    vout = jnp.concatenate(v + [wout_row])                       # (20,)
    bout_flat = bout.astype(jnp.float32).reshape(-1)             # (1,)

    out2d = pl.pallas_call(
        jump_kernel,
        out_shape=jax.ShapeDtypeStruct((total_rows, lanes), jnp.float32),
        grid_spec=pltpu.PrefetchScalarGridSpec(
            num_scalar_prefetch=0,
            grid=(num_blocks,),
            in_specs=[
                pl.BlockSpec((4, block_rows, lanes), lambda i: (0, i, 0)),
                pl.BlockSpec(memory_space=pltpu.MemorySpace.SMEM),  # wfc   (64,)
                pl.BlockSpec(memory_space=pltpu.MemorySpace.SMEM),  # wadj  (96,)
                pl.BlockSpec(memory_space=pltpu.MemorySpace.SMEM),  # vout  (20,)
                pl.BlockSpec(memory_space=pltpu.MemorySpace.SMEM),  # bout  (1,)
            ],
            out_specs=pl.BlockSpec((block_rows, lanes), lambda i: (i, 0)),
        ),
        compiler_params=pltpu.CompilerParams(
            dimension_semantics=("parallel",)),
    )(xt, wfc_flat, wadj_hidden, vout, bout_flat)
    return out2d.reshape(Bp)[:B].reshape(B, 1)


# ----------------------------- pure-JAX reference ----------------------------
def _math_act_ref(x):
    col = jax.lax.broadcasted_iota(jnp.int32, x.shape, 1)
    exp_b = jnp.exp(jnp.minimum(x, EXP_CLIP))
    sin_b = K_SIN * jnp.sin(x)
    log_b = jnp.log(jnp.maximum(x, LOG_CLIP))
    return jnp.where(col == 1, exp_b,
           jnp.where(col == 2, sin_b,
           jnp.where(col == 3, log_b, x)))


def jump_model_ref(x, wfc, wadj, wout, bout):
    dot = functools.partial(jnp.dot, precision=jax.lax.Precision.HIGHEST)
    acts = [x]
    t = 0
    for i in range(NUM_MATH_LAYERS + 1):
        inp = acts[-1]
        for j in range(i):
            inp = inp + dot(acts[j], wadj[t].T)
            t += 1
        acts[-1] = inp                      # mirror PyTorch in-place aliasing
        if i < NUM_MATH_LAYERS:
            acts.append(_math_act_ref(dot(inp, wfc[i].T)))
        else:
            return dot(inp, wout.T) + bout
    return None


if __name__ == "__main__":
    key = jax.random.PRNGKey(0)
    ks = jax.random.split(key, 5)
    B = 5000  # non-multiple of the tile -> padding + 2 grid blocks + multi-chunk loop
    x = jax.random.normal(ks[0], (B, 4), jnp.float32)
    wfc = jax.random.normal(ks[1], (NUM_MATH_LAYERS, 4, 4), jnp.float32) * 0.5
    wadj = jax.random.normal(ks[2], (NUM_ADJ, 4, 4), jnp.float32) * 0.5
    wout = jax.random.normal(ks[3], (1, 4), jnp.float32) * 0.5
    bout = jax.random.normal(ks[4], (1,), jnp.float32) * 0.5

    out = jax.block_until_ready(jump_model_forward(x, wfc, wadj, wout, bout))
    ref = jump_model_ref(x, wfc, wadj, wout, bout)
    assert out.shape == (B, 1)
    max_err = float(jnp.max(jnp.abs(out - ref)))
    assert jnp.allclose(out, ref, atol=5e-3, rtol=5e-4), max_err
    print("KERNEL_OK")
</pallas_src>

<mosaic_0001>
module attributes {stable_mosaic.version = 11 : i64} {
  func.func @jump_kernel(%arg0: i32, %arg1: memref<4x16x256xf32, #tpu.memory_space<vmem>>, %arg2: memref<64xf32, #tpu.memory_space<smem>>, %arg3: memref<96xf32, #tpu.memory_space<smem>>, %arg4: memref<20xf32, #tpu.memory_space<smem>>, %arg5: memref<1xf32, #tpu.memory_space<smem>>, %arg6: memref<16x256xf32, #tpu.memory_space<vmem>>) attributes {dimension_semantics = [#tpu.dimension_semantics<parallel>], iteration_bounds = array<i64: 2>, scalar_prefetch = 0 : i64, scratch_operands = 0 : i64, tpu.core_type = #tpu.core_type<tc>, window_params = [{transform_indices = @transform_0, window_bounds = array<i64: 4, 16, 256>}, {transform_indices = @transform_1, window_bounds = array<i64: 64>}, {transform_indices = @transform_2, window_bounds = array<i64: 96>}, {transform_indices = @transform_3, window_bounds = array<i64: 20>}, {transform_indices = @transform_4, window_bounds = array<i64: 1>}, {transform_indices = @transform_5, window_bounds = array<i64: 16, 256>}]} {
    %c0_i32 = arith.constant 0 : i32
    %c2_i32 = arith.constant 2 : i32
    %0 = arith.addi %c0_i32, %c2_i32 : i32
    %c1_i32 = arith.constant 1 : i32
    scf.for %arg7 = %c0_i32 to %0 step %c1_i32  : i32 {
      %c1_i32_1 = arith.constant 1 : i32
      %1 = arith.muli %arg7, %c1_i32_1 : i32
      %c0_i32_2 = arith.constant 0 : i32
      %2 = arith.addi %c0_i32_2, %1 : i32
      %c8_i32 = arith.constant 8 : i32
      %3 = arith.muli %2, %c8_i32 : i32
      %4 = tpu.assume_multiple %3, 8 : i32
      %c0 = arith.constant 0 : index
      %5 = arith.index_cast %4 : i32 to index
      %c0_3 = arith.constant 0 : index
      %6 = vector.load %arg1[%c0, %5, %c0_3] : memref<4x16x256xf32, #tpu.memory_space<vmem>>, vector<1x8x256xf32>
      %7 = vector.shape_cast %6 : vector<1x8x256xf32> to vector<8x256xf32>
      %c1 = arith.constant 1 : index
      %8 = arith.index_cast %4 : i32 to index
      %c0_4 = arith.constant 0 : index
      %9 = vector.load %arg1[%c1, %8, %c0_4] : memref<4x16x256xf32, #tpu.memory_space<vmem>>, vector<1x8x256xf32>
      %10 = vector.shape_cast %9 : vector<1x8x256xf32> to vector<8x256xf32>
      %c2 = arith.constant 2 : index
      %11 = arith.index_cast %4 : i32 to index
      %c0_5 = arith.constant 0 : index
      %12 = vector.load %arg1[%c2, %11, %c0_5] : memref<4x16x256xf32, #tpu.memory_space<vmem>>, vector<1x8x256xf32>
      %13 = vector.shape_cast %12 : vector<1x8x256xf32> to vector<8x256xf32>
      %c3 = arith.constant 3 : index
      %14 = arith.index_cast %4 : i32 to index
      %c0_6 = arith.constant 0 : index
      %15 = vector.load %arg1[%c3, %14, %c0_6] : memref<4x16x256xf32, #tpu.memory_space<vmem>>, vector<1x8x256xf32>
      %16 = vector.shape_cast %15 : vector<1x8x256xf32> to vector<8x256xf32>
      %c0_7 = arith.constant 0 : index
      %17 = memref.load %arg2[%c0_7] : memref<64xf32, #tpu.memory_space<smem>>
      %18 = vector.broadcast %17 : f32 to vector<8x256xf32>
      %19 = arith.mulf %18, %7 : vector<8x256xf32>
      %c1_8 = arith.constant 1 : index
      %20 = memref.load %arg2[%c1_8] : memref<64xf32, #tpu.memory_space<smem>>
      %21 = vector.broadcast %20 : f32 to vector<8x256xf32>
      %22 = arith.mulf %21, %10 : vector<8x256xf32>
      %23 = arith.addf %19, %22 : vector<8x256xf32>
      %c2_9 = arith.constant 2 : index
      %24 = memref.load %arg2[%c2_9] : memref<64xf32, #tpu.memory_space<smem>>
      %25 = vector.broadcast %24 : f32 to vector<8x256xf32>
      %26 = arith.mulf %25, %13 : vector<8x256xf32>
      %27 = arith.addf %23, %26 : vector<8x256xf32>
      %c3_10 = arith.constant 3 : index
      %28 = memref.load %arg2[%c3_10] : memref<64xf32, #tpu.memory_space<smem>>
      %29 = vector.broadcast %28 : f32 to vector<8x256xf32>
      %30 = arith.mulf %29, %16 : vector<8x256xf32>
      %31 = arith.addf %27, %30 : vector<8x256xf32>
      %c4 = arith.constant 4 : index
      %32 = memref.load %arg2[%c4] : memref<64xf32, #tpu.memory_space<smem>>
      %33 = vector.broadcast %32 : f32 to vector<8x256xf32>
      %34 = arith.mulf %33, %7 : vector<8x256xf32>
      %c5 = arith.constant 5 : index
      %35 = memref.load %arg2[%c5] : memref<64xf32, #tpu.memory_space<smem>>
      %36 = vector.broadcast %35 : f32 to vector<8x256xf32>
      %37 = arith.mulf %36, %10 : vector<8x256xf32>
      %38 = arith.addf %34, %37 : vector<8x256xf32>
      %c6 = arith.constant 6 : index
      %39 = memref.load %arg2[%c6] : memref<64xf32, #tpu.memory_space<smem>>
      %40 = vector.broadcast %39 : f32 to vector<8x256xf32>
      %41 = arith.mulf %40, %13 : vector<8x256xf32>
      %42 = arith.addf %38, %41 : vector<8x256xf32>
      %c7 = arith.constant 7 : index
      %43 = memref.load %arg2[%c7] : memref<64xf32, #tpu.memory_space<smem>>
      %44 = vector.broadcast %43 : f32 to vector<8x256xf32>
      %45 = arith.mulf %44, %16 : vector<8x256xf32>
      %46 = arith.addf %42, %45 : vector<8x256xf32>
      %c8 = arith.constant 8 : index
      %47 = memref.load %arg2[%c8] : memref<64xf32, #tpu.memory_space<smem>>
      %48 = vector.broadcast %47 : f32 to vector<8x256xf32>
      %49 = arith.mulf %48, %7 : vector<8x256xf32>
      %c9 = arith.constant 9 : index
      %50 = memref.load %arg2[%c9] : memref<64xf32, #tpu.memory_space<smem>>
      %51 = vector.broadcast %50 : f32 to vector<8x256xf32>
      %52 = arith.mulf %51, %10 : vector<8x256xf32>
      %53 = arith.addf %49, %52 : vector<8x256xf32>
      %c10 = arith.constant 10 : index
      %54 = memref.load %arg2[%c10] : memref<64xf32, #tpu.memory_space<smem>>
      %55 = vector.broadcast %54 : f32 to vector<8x256xf32>
      %56 = arith.mulf %55, %13 : vector<8x256xf32>
      %57 = arith.addf %53, %56 : vector<8x256xf32>
      %c11 = arith.constant 11 : index
      %58 = memref.load %arg2[%c11] : memref<64xf32, #tpu.memory_space<smem>>
      %59 = vector.broadcast %58 : f32 to vector<8x256xf32>
      %60 = arith.mulf %59, %16 : vector<8x256xf32>
      %61 = arith.addf %57, %60 : vector<8x256xf32>
      %c12 = arith.constant 12 : index
      %62 = memref.load %arg2[%c12] : memref<64xf32, #tpu.memory_space<smem>>
      %63 = vector.broadcast %62 : f32 to vector<8x256xf32>
      %64 = arith.mulf %63, %7 : vector<8x256xf32>
      %c13 = arith.constant 13 : index
      %65 = memref.load %arg2[%c13] : memref<64xf32, #tpu.memory_space<smem>>
      %66 = vector.broadcast %65 : f32 to vector<8x256xf32>
      %67 = arith.mulf %66, %10 : vector<8x256xf32>
      %68 = arith.addf %64, %67 : vector<8x256xf32>
      %c14 = arith.constant 14 : index
      %69 = memref.load %arg2[%c14] : memref<64xf32, #tpu.memory_space<smem>>
      %70 = vector.broadcast %69 : f32 to vector<8x256xf32>
      %71 = arith.mulf %70, %13 : vector<8x256xf32>
      %72 = arith.addf %68, %71 : vector<8x256xf32>
      %c15 = arith.constant 15 : index
      %73 = memref.load %arg2[%c15] : memref<64xf32, #tpu.memory_space<smem>>
      %74 = vector.broadcast %73 : f32 to vector<8x256xf32>
      %75 = arith.mulf %74, %16 : vector<8x256xf32>
      %76 = arith.addf %72, %75 : vector<8x256xf32>
      %cst = arith.constant 4.000000e+00 : f32
      %77 = vector.broadcast %cst : f32 to vector<8x256xf32>
      %78 = arith.minimumf %46, %77 : vector<8x256xf32>
      %79 = math.exp %78 : vector<8x256xf32>
      %80 = math.sin %61 : vector<8x256xf32>
      %cst_11 = arith.constant 5.000000e-03 : f32
      %81 = vector.broadcast %cst_11 : f32 to vector<8x256xf32>
      %82 = arith.maximumf %76, %81 : vector<8x256xf32>
      %83 = math.log %82 : vector<8x256xf32>
      %c0_12 = arith.constant 0 : index
      %84 = memref.load %arg3[%c0_12] : memref<96xf32, #tpu.memory_space<smem>>
      %85 = vector.broadcast %84 : f32 to vector<8x256xf32>
      %86 = arith.mulf %85, %7 : vector<8x256xf32>
      %c1_13 = arith.constant 1 : index
      %87 = memref.load %arg3[%c1_13] : memref<96xf32, #tpu.memory_space<smem>>
      %88 = vector.broadcast %87 : f32 to vector<8x256xf32>
      %89 = arith.mulf %88, %10 : vector<8x256xf32>
      %90 = arith.addf %86, %89 : vector<8x256xf32>
      %c2_14 = arith.constant 2 : index
      %91 = memref.load %arg3[%c2_14] : memref<96xf32, #tpu.memory_space<smem>>
      %92 = vector.broadcast %91 : f32 to vector<8x256xf32>
      %93 = arith.mulf %92, %13 : vector<8x256xf32>
      %94 = arith.addf %90, %93 : vector<8x256xf32>
      %c3_15 = arith.constant 3 : index
      %95 = memref.load %arg3[%c3_15] : memref<96xf32, #tpu.memory_space<smem>>
      %96 = vector.broadcast %95 : f32 to vector<8x256xf32>
      %97 = arith.mulf %96, %16 : vector<8x256xf32>
      %98 = arith.addf %94, %97 : vector<8x256xf32>
      %c4_16 = arith.constant 4 : index
      %99 = memref.load %arg3[%c4_16] : memref<96xf32, #tpu.memory_space<smem>>
      %100 = vector.broadcast %99 : f32 to vector<8x256xf32>
      %101 = arith.mulf %100, %7 : vector<8x256xf32>
      %c5_17 = arith.constant 5 : index
      %102 = memref.load %arg3[%c5_17] : memref<96xf32, #tpu.memory_space<smem>>
      %103 = vector.broadcast %102 : f32 to vector<8x256xf32>
      %104 = arith.mulf %103, %10 : vector<8x256xf32>
      %105 = arith.addf %101, %104 : vector<8x256xf32>
      %c6_18 = arith.constant 6 : index
      %106 = memref.load %arg3[%c6_18] : memref<96xf32, #tpu.memory_space<smem>>
      %107 = vector.broadcast %106 : f32 to vector<8x256xf32>
      %108 = arith.mulf %107, %13 : vector<8x256xf32>
      %109 = arith.addf %105, %108 : vector<8x256xf32>
      %c7_19 = arith.constant 7 : index
      %110 = memref.load %arg3[%c7_19] : memref<96xf32, #tpu.memory_space<smem>>
      %111 = vector.broadcast %110 : f32 to vector<8x256xf32>
      %112 = arith.mulf %111, %16 : vector<8x256xf32>
      %113 = arith.addf %109, %112 : vector<8x256xf32>
      %c8_20 = arith.constant 8 : index
      %114 = memref.load %arg3[%c8_20] : memref<96xf32, #tpu.memory_space<smem>>
      %115 = vector.broadcast %114 : f32 to vector<8x256xf32>
      %116 = arith.mulf %115, %7 : vector<8x256xf32>
      %c9_21 = arith.constant 9 : index
      %117 = memref.load %arg3[%c9_21] : memref<96xf32, #tpu.memory_space<smem>>
      %118 = vector.broadcast %117 : f32 to vector<8x256xf32>
      %119 = arith.mulf %118, %10 : vector<8x256xf32>
      %120 = arith.addf %116, %119 : vector<8x256xf32>
      %c10_22 = arith.constant 10 : index
      %121 = memref.load %arg3[%c10_22] : memref<96xf32, #tpu.memory_space<smem>>
      %122 = vector.broadcast %121 : f32 to vector<8x256xf32>
      %123 = arith.mulf %122, %13 : vector<8x256xf32>
      %124 = arith.addf %120, %123 : vector<8x256xf32>
      %c11_23 = arith.constant 11 : index
      %125 = memref.load %arg3[%c11_23] : memref<96xf32, #tpu.memory_space<smem>>
      %126 = vector.broadcast %125 : f32 to vector<8x256xf32>
      %127 = arith.mulf %126, %16 : vector<8x256xf32>
      %128 = arith.addf %124, %127 : vector<8x256xf32>
      %c12_24 = arith.constant 12 : index
      %129 = memref.load %arg3[%c12_24] : memref<96xf32, #tpu.memory_space<smem>>
      %130 = vector.broadcast %129 : f32 to vector<8x256xf32>
      %131 = arith.mulf %130, %7 : vector<8x256xf32>
      %c13_25 = arith.constant 13 : index
      %132 = memref.load %arg3[%c13_25] : memref<96xf32, #tpu.memory_space<smem>>
      %133 = vector.broadcast %132 : f32 to vector<8x256xf32>
      %134 = arith.mulf %133, %10 : vector<8x256xf32>
      %135 = arith.addf %131, %134 : vector<8x256xf32>
      %c14_26 = arith.constant 14 : index
      %136 = memref.load %arg3[%c14_26] : memref<96xf32, #tpu.memory_space<smem>>
      %137 = vector.broadcast %136 : f32 to vector<8x256xf32>
      %138 = arith.mulf %137, %13 : vector<8x256xf32>
      %139 = arith.addf %135, %138 : vector<8x256xf32>
      %c15_27 = arith.constant 15 : index
      %140 = memref.load %arg3[%c15_27] : memref<96xf32, #tpu.memory_space<smem>>
      %141 = vector.broadcast %140 : f32 to vector<8x256xf32>
      %142 = arith.mulf %141, %16 : vector<8x256xf32>
      %143 = arith.addf %139, %142 : vector<8x256xf32>
      %144 = arith.addf %31, %98 : vector<8x256xf32>
      %145 = arith.addf %79, %113 : vector<8x256xf32>
      %146 = arith.addf %80, %128 : vector<8x256xf32>
      %147 = arith.addf %83, %143 : vector<8x256xf32>
      %c16 = arith.constant 16 : index
      %148 = memref.load %arg2[%c16] : memref<64xf32, #tpu.memory_space<smem>>
      %149 = vector.broadcast %148 : f32 to vector<8x256xf32>
      %150 = arith.mulf %149, %144 : vector<8x256xf32>
      %c17 = arith.constant 17 : index
      %151 = memref.load %arg2[%c17] : memref<64xf32, #tpu.memory_space<smem>>
      %152 = vector.broadcast %151 : f32 to vector<8x256xf32>
      %153 = arith.mulf %152, %145 : vector<8x256xf32>
      %154 = arith.addf %150, %153 : vector<8x256xf32>
      %c18 = arith.constant 18 : index
      %155 = memref.load %arg2[%c18] : memref<64xf32, #tpu.memory_space<smem>>
      %156 = vector.broadcast %155 : f32 to vector<8x256xf32>
      %157 = arith.mulf %156, %146 : vector<8x256xf32>
      %158 = arith.addf %154, %157 : vector<8x256xf32>
      %c19 = arith.constant 19 : index
      %159 = memref.load %arg2[%c19] : memref<64xf32, #tpu.memory_space<smem>>
      %160 = vector.broadcast %159 : f32 to vector<8x256xf32>
      %161 = arith.mulf %160, %147 : vector<8x256xf32>
      %162 = arith.addf %158, %161 : vector<8x256xf32>
      %c20 = arith.constant 20 : index
      %163 = memref.load %arg2[%c20] : memref<64xf32, #tpu.memory_space<smem>>
      %164 = vector.broadcast %163 : f32 to vector<8x256xf32>
      %165 = arith.mulf %164, %144 : vector<8x256xf32>
      %c21 = arith.constant 21 : index
      %166 = memref.load %arg2[%c21] : memref<64xf32, #tpu.memory_space<smem>>
      %167 = vector.broadcast %166 : f32 to vector<8x256xf32>
      %168 = arith.mulf %167, %145 : vector<8x256xf32>
      %169 = arith.addf %165, %168 : vector<8x256xf32>
      %c22 = arith.constant 22 : index
      %170 = memref.load %arg2[%c22] : memref<64xf32, #tpu.memory_space<smem>>
      %171 = vector.broadcast %170 : f32 to vector<8x256xf32>
      %172 = arith.mulf %171, %146 : vector<8x256xf32>
      %173 = arith.addf %169, %172 : vector<8x256xf32>
      %c23 = arith.constant 23 : index
      %174 = memref.load %arg2[%c23] : memref<64xf32, #tpu.memory_space<smem>>
      %175 = vector.broadcast %174 : f32 to vector<8x256xf32>
      %176 = arith.mulf %175, %147 : vector<8x256xf32>
      %177 = arith.addf %173, %176 : vector<8x256xf32>
      %c24 = arith.constant 24 : index
      %178 = memref.load %arg2[%c24] : memref<64xf32, #tpu.memory_space<smem>>
      %179 = vector.broadcast %178 : f32 to vector<8x256xf32>
      %180 = arith.mulf %179, %144 : vector<8x256xf32>
      %c25 = arith.constant 25 : index
      %181 = memref.load %arg2[%c25] : memref<64xf32, #tpu.memory_space<smem>>
      %182 = vector.broadcast %181 : f32 to vector<8x256xf32>
      %183 = arith.mulf %182, %145 : vector<8x256xf32>
      %184 = arith.addf %180, %183 : vector<8x256xf32>
      %c26 = arith.constant 26 : index
      %185 = memref.load %arg2[%c26] : memref<64xf32, #tpu.memory_space<smem>>
      %186 = vector.broadcast %185 : f32 to vector<8x256xf32>
      %187 = arith.mulf %186, %146 : vector<8x256xf32>
      %188 = arith.addf %184, %187 : vector<8x256xf32>
      %c27 = arith.constant 27 : index
      %189 = memref.load %arg2[%c27] : memref<64xf32, #tpu.memory_space<smem>>
      %190 = vector.broadcast %189 : f32 to vector<8x256xf32>
      %191 = arith.mulf %190, %147 : vector<8x256xf32>
      %192 = arith.addf %188, %191 : vector<8x256xf32>
      %c28 = arith.constant 28 : index
      %193 = memref.load %arg2[%c28] : memref<64xf32, #tpu.memory_space<smem>>
      %194 = vector.broadcast %193 : f32 to vector<8x256xf32>
      %195 = arith.mulf %194, %144 : vector<8x256xf32>
      %c29 = arith.constant 29 : index
      %196 = memref.load %arg2[%c29] : memref<64xf32, #tpu.memory_space<smem>>
      %197 = vector.broadcast %196 : f32 to vector<8x256xf32>
      %198 = arith.mulf %197, %145 : vector<8x256xf32>
      %199 = arith.addf %195, %198 : vector<8x256xf32>
      %c30 = arith.constant 30 : index
      %200 = memref.load %arg2[%c30] : memref<64xf32, #tpu.memory_space<smem>>
      %201 = vector.broadcast %200 : f32 to vector<8x256xf32>
      %202 = arith.mulf %201, %146 : vector<8x256xf32>
      %203 = arith.addf %199, %202 : vector<8x256xf32>
      %c31 = arith.constant 31 : index
      %204 = memref.load %arg2[%c31] : memref<64xf32, #tpu.memory_space<smem>>
      %205 = vector.broadcast %204 : f32 to vector<8x256xf32>
      %206 = arith.mulf %205, %147 : vector<8x256xf32>
      %207 = arith.addf %203, %206 : vector<8x256xf32>
      %cst_28 = arith.constant 4.000000e+00 : f32
      %208 = vector.broadcast %cst_28 : f32 to vector<8x256xf32>
      %209 = arith.minimumf %177, %208 : vector<8x256xf32>
      %210 = math.exp %209 : vector<8x256xf32>
      %211 = math.sin %192 : vector<8x256xf32>
      %cst_29 = arith.constant 5.000000e-03 : f32
      %212 = vector.broadcast %cst_29 : f32 to vector<8x256xf32>
      %213 = arith.maximumf %207, %212 : vector<8x256xf32>
      %214 = math.log %213 : vector<8x256xf32>
      %c16_30 = arith.constant 16 : index
      %215 = memref.load %arg3[%c16_30] : memref<96xf32, #tpu.memory_space<smem>>
      %216 = vector.broadcast %215 : f32 to vector<8x256xf32>
      %217 = arith.mulf %216, %7 : vector<8x256xf32>
      %c17_31 = arith.constant 17 : index
      %218 = memref.load %arg3[%c17_31] : memref<96xf32, #tpu.memory_space<smem>>
      %219 = vector.broadcast %218 : f32 to vector<8x256xf32>
      %220 = arith.mulf %219, %10 : vector<8x256xf32>
      %221 = arith.addf %217, %220 : vector<8x256xf32>
      %c18_32 = arith.constant 18 : index
      %222 = memref.load %arg3[%c18_32] : memref<96xf32, #tpu.memory_space<smem>>
      %223 = vector.broadcast %222 : f32 to vector<8x256xf32>
      %224 = arith.mulf %223, %13 : vector<8x256xf32>
      %225 = arith.addf %221, %224 : vector<8x256xf32>
      %c19_33 = arith.constant 19 : index
      %226 = memref.load %arg3[%c19_33] : memref<96xf32, #tpu.memory_space<smem>>
      %227 = vector.broadcast %226 : f32 to vector<8x256xf32>
      %228 = arith.mulf %227, %16 : vector<8x256xf32>
      %229 = arith.addf %225, %228 : vector<8x256xf32>
      %c20_34 = arith.constant 20 : index
      %230 = memref.load %arg3[%c20_34] : memref<96xf32, #tpu.memory_space<smem>>
      %231 = vector.broadcast %230 : f32 to vector<8x256xf32>
      %232 = arith.mulf %231, %7 : vector<8x256xf32>
      %c21_35 = arith.constant 21 : index
      %233 = memref.load %arg3[%c21_35] : memref<96xf32, #tpu.memory_space<smem>>
      %234 = vector.broadcast %233 : f32 to vector<8x256xf32>
      %235 = arith.mulf %234, %10 : vector<8x256xf32>
      %236 = arith.addf %232, %235 : vector<8x256xf32>
      %c22_36 = arith.constant 22 : index
      %237 = memref.load %arg3[%c22_36] : memref<96xf32, #tpu.memory_space<smem>>
      %238 = vector.broadcast %237 : f32 to vector<8x256xf32>
      %239 = arith.mulf %238, %13 : vector<8x256xf32>
      %240 = arith.addf %236, %239 : vector<8x256xf32>
      %c23_37 = arith.constant 23 : index
      %241 = memref.load %arg3[%c23_37] : memref<96xf32, #tpu.memory_space<smem>>
      %242 = vector.broadcast %241 : f32 to vector<8x256xf32>
      %243 = arith.mulf %242, %16 : vector<8x256xf32>
      %244 = arith.addf %240, %243 : vector<8x256xf32>
      %c24_38 = arith.constant 24 : index
      %245 = memref.load %arg3[%c24_38] : memref<96xf32, #tpu.memory_space<smem>>
      %246 = vector.broadcast %245 : f32 to vector<8x256xf32>
      %247 = arith.mulf %246, %7 : vector<8x256xf32>
      %c25_39 = arith.constant 25 : index
      %248 = memref.load %arg3[%c25_39] : memref<96xf32, #tpu.memory_space<smem>>
      %249 = vector.broadcast %248 : f32 to vector<8x256xf32>
      %250 = arith.mulf %249, %10 : vector<8x256xf32>
      %251 = arith.addf %247, %250 : vector<8x256xf32>
      %c26_40 = arith.constant 26 : index
      %252 = memref.load %arg3[%c26_40] : memref<96xf32, #tpu.memory_space<smem>>
      %253 = vector.broadcast %252 : f32 to vector<8x256xf32>
      %254 = arith.mulf %253, %13 : vector<8x256xf32>
      %255 = arith.addf %251, %254 : vector<8x256xf32>
      %c27_41 = arith.constant 27 : index
      %256 = memref.load %arg3[%c27_41] : memref<96xf32, #tpu.memory_space<smem>>
      %257 = vector.broadcast %256 : f32 to vector<8x256xf32>
      %258 = arith.mulf %257, %16 : vector<8x256xf32>
      %259 = arith.addf %255, %258 : vector<8x256xf32>
      %c28_42 = arith.constant 28 : index
      %260 = memref.load %arg3[%c28_42] : memref<96xf32, #tpu.memory_space<smem>>
      %261 = vector.broadcast %260 : f32 to vector<8x256xf32>
      %262 = arith.mulf %261, %7 : vector<8x256xf32>
      %c29_43 = arith.constant 29 : index
      %263 = memref.load %arg3[%c29_43] : memref<96xf32, #tpu.memory_space<smem>>
      %264 = vector.broadcast %263 : f32 to vector<8x256xf32>
      %265 = arith.mulf %264, %10 : vector<8x256xf32>
      %266 = arith.addf %262, %265 : vector<8x256xf32>
      %c30_44 = arith.constant 30 : index
      %267 = memref.load %arg3[%c30_44] : memref<96xf32, #tpu.memory_space<smem>>
      %268 = vector.broadcast %267 : f32 to vector<8x256xf32>
      %269 = arith.mulf %268, %13 : vector<8x256xf32>
      %270 = arith.addf %266, %269 : vector<8x256xf32>
      %c31_45 = arith.constant 31 : index
      %271 = memref.load %arg3[%c31_45] : memref<96xf32, #tpu.memory_space<smem>>
      %272 = vector.broadcast %271 : f32 to vector<8x256xf32>
      %273 = arith.mulf %272, %16 : vector<8x256xf32>
      %274 = arith.addf %270, %273 : vector<8x256xf32>
      %275 = arith.addf %162, %229 : vector<8x256xf32>
      %276 = arith.addf %210, %244 : vector<8x256xf32>
      %277 = arith.addf %211, %259 : vector<8x256xf32>
      %278 = arith.addf %214, %274 : vector<8x256xf32>
      %c32 = arith.constant 32 : index
      %279 = memref.load %arg3[%c32] : memref<96xf32, #tpu.memory_space<smem>>
      %280 = vector.broadcast %279 : f32 to vector<8x256xf32>
      %281 = arith.mulf %280, %144 : vector<8x256xf32>
      %c33 = arith.constant 33 : index
      %282 = memref.load %arg3[%c33] : memref<96xf32, #tpu.memory_space<smem>>
      %283 = vector.broadcast %282 : f32 to vector<8x256xf32>
      %284 = arith.mulf %283, %145 : vector<8x256xf32>
      %285 = arith.addf %281, %284 : vector<8x256xf32>
      %c34 = arith.constant 34 : index
      %286 = memref.load %arg3[%c34] : memref<96xf32, #tpu.memory_space<smem>>
      %287 = vector.broadcast %286 : f32 to vector<8x256xf32>
      %288 = arith.mulf %287, %146 : vector<8x256xf32>
      %289 = arith.addf %285, %288 : vector<8x256xf32>
      %c35 = arith.constant 35 : index
      %290 = memref.load %arg3[%c35] : memref<96xf32, #tpu.memory_space<smem>>
      %291 = vector.broadcast %290 : f32 to vector<8x256xf32>
      %292 = arith.mulf %291, %147 : vector<8x256xf32>
      %293 = arith.addf %289, %292 : vector<8x256xf32>
      %c36 = arith.constant 36 : index
      %294 = memref.load %arg3[%c36] : memref<96xf32, #tpu.memory_space<smem>>
      %295 = vector.broadcast %294 : f32 to vector<8x256xf32>
      %296 = arith.mulf %295, %144 : vector<8x256xf32>
      %c37 = arith.constant 37 : index
      %297 = memref.load %arg3[%c37] : memref<96xf32, #tpu.memory_space<smem>>
      %298 = vector.broadcast %297 : f32 to vector<8x256xf32>
      %299 = arith.mulf %298, %145 : vector<8x256xf32>
      %300 = arith.addf %296, %299 : vector<8x256xf32>
      %c38 = arith.constant 38 : index
      %301 = memref.load %arg3[%c38] : memref<96xf32, #tpu.memory_space<smem>>
      %302 = vector.broadcast %301 : f32 to vector<8x256xf32>
      %303 = arith.mulf %302, %146 : vector<8x256xf32>
      %304 = arith.addf %300, %303 : vector<8x256xf32>
      %c39 = arith.constant 39 : index
      %305 = memref.load %arg3[%c39] : memref<96xf32, #tpu.memory_space<smem>>
      %306 = vector.broadcast %305 : f32 to vector<8x256xf32>
      %307 = arith.mulf %306, %147 : vector<8x256xf32>
      %308 = arith.addf %304, %307 : vector<8x256xf32>
      %c40 = arith.constant 40 : index
      %309 = memref.load %arg3[%c40] : memref<96xf32, #tpu.memory_space<smem>>
      %310 = vector.broadcast %309 : f32 to vector<8x256xf32>
      %311 = arith.mulf %310, %144 : vector<8x256xf32>
      %c41 = arith.constant 41 : index
      %312 = memref.load %arg3[%c41] : memref<96xf32, #tpu.memory_space<smem>>
      %313 = vector.broadcast %312 : f32 to vector<8x256xf32>
      %314 = arith.mulf %313, %145 : vector<8x256xf32>
      %315 = arith.addf %311, %314 : vector<8x256xf32>
      %c42 = arith.constant 42 : index
      %316 = memref.load %arg3[%c42] : memref<96xf32, #tpu.memory_space<smem>>
      %317 = vector.broadcast %316 : f32 to vector<8x256xf32>
      %318 = arith.mulf %317, %146 : vector<8x256xf32>
      %319 = arith.addf %315, %318 : vector<8x256xf32>
      %c43 = arith.constant 43 : index
      %320 = memref.load %arg3[%c43] : memref<96xf32, #tpu.memory_space<smem>>
      %321 = vector.broadcast %320 : f32 to vector<8x256xf32>
      %322 = arith.mulf %321, %147 : vector<8x256xf32>
      %323 = arith.addf %319, %322 : vector<8x256xf32>
      %c44 = arith.constant 44 : index
      %324 = memref.load %arg3[%c44] : memref<96xf32, #tpu.memory_space<smem>>
      %325 = vector.broadcast %324 : f32 to vector<8x256xf32>
      %326 = arith.mulf %325, %144 : vector<8x256xf32>
      %c45 = arith.constant 45 : index
      %327 = memref.load %arg3[%c45] : memref<96xf32, #tpu.memory_space<smem>>
      %328 = vector.broadcast %327 : f32 to vector<8x256xf32>
      %329 = arith.mulf %328, %145 : vector<8x256xf32>
      %330 = arith.addf %326, %329 : vector<8x256xf32>
      %c46 = arith.constant 46 : index
      %331 = memref.load %arg3[%c46] : memref<96xf32, #tpu.memory_space<smem>>
      %332 = vector.broadcast %331 : f32 to vector<8x256xf32>
      %333 = arith.mulf %332, %146 : vector<8x256xf32>
      %334 = arith.addf %330, %333 : vector<8x256xf32>
      %c47 = arith.constant 47 : index
      %335 = memref.load %arg3[%c47] : memref<96xf32, #tpu.memory_space<smem>>
      %336 = vector.broadcast %335 : f32 to vector<8x256xf32>
      %337 = arith.mulf %336, %147 : vector<8x256xf32>
      %338 = arith.addf %334, %337 : vector<8x256xf32>
      %339 = arith.addf %275, %293 : vector<8x256xf32>
      %340 = arith.addf %276, %308 : vector<8x256xf32>
      %341 = arith.addf %277, %323 : vector<8x256xf32>
      %342 = arith.addf %278, %338 : vector<8x256xf32>
      %c32_46 = arith.constant 32 : index
      %343 = memref.load %arg2[%c32_46] : memref<64xf32, #tpu.memory_space<smem>>
      %344 = vector.broadcast %343 : f32 to vector<8x256xf32>
      %345 = arith.mulf %344, %339 : vector<8x256xf32>
      %c33_47 = arith.constant 33 : index
      %346 = memref.load %arg2[%c33_47] : memref<64xf32, #tpu.memory_space<smem>>
      %347 = vector.broadcast %346 : f32 to vector<8x256xf32>
      %348 = arith.mulf %347, %340 : vector<8x256xf32>
      %349 = arith.addf %345, %348 : vector<8x256xf32>
      %c34_48 = arith.constant 34 : index
      %350 = memref.load %arg2[%c34_48] : memref<64xf32, #tpu.memory_space<smem>>
      %351 = vector.broadcast %350 : f32 to vector<8x256xf32>
      %352 = arith.mulf %351, %341 : vector<8x256xf32>
      %353 = arith.addf %349, %352 : vector<8x256xf32>
      %c35_49 = arith.constant 35 : index
      %354 = memref.load %arg2[%c35_49] : memref<64xf32, #tpu.memory_space<smem>>
      %355 = vector.broadcast %354 : f32 to vector<8x256xf32>
      %356 = arith.mulf %355, %342 : vector<8x256xf32>
      %357 = arith.addf %353, %356 : vector<8x256xf32>
      %c36_50 = arith.constant 36 : index
      %358 = memref.load %arg2[%c36_50] : memref<64xf32, #tpu.memory_space<smem>>
      %359 = vector.broadcast %358 : f32 to vector<8x256xf32>
      %360 = arith.mulf %359, %339 : vector<8x256xf32>
      %c37_51 = arith.constant 37 : index
      %361 = memref.load %arg2[%c37_51] : memref<64xf32, #tpu.memory_space<smem>>
      %362 = vector.broadcast %361 : f32 to vector<8x256xf32>
      %363 = arith.mulf %362, %340 : vector<8x256xf32>
      %364 = arith.addf %360, %363 : vector<8x256xf32>
      %c38_52 = arith.constant 38 : index
      %365 = memref.load %arg2[%c38_52] : memref<64xf32, #tpu.memory_space<smem>>
      %366 = vector.broadcast %365 : f32 to vector<8x256xf32>
      %367 = arith.mulf %366, %341 : vector<8x256xf32>
      %368 = arith.addf %364, %367 : vector<8x256xf32>
      %c39_53 = arith.constant 39 : index
      %369 = memref.load %arg2[%c39_53] : memref<64xf32, #tpu.memory_space<smem>>
      %370 = vector.broadcast %369 : f32 to vector<8x256xf32>
      %371 = arith.mulf %370, %342 : vector<8x256xf32>
      %372 = arith.addf %368, %371 : vector<8x256xf32>
      %c40_54 = arith.constant 40 : index
      %373 = memref.load %arg2[%c40_54] : memref<64xf32, #tpu.memory_space<smem>>
      %374 = vector.broadcast %373 : f32 to vector<8x256xf32>
      %375 = arith.mulf %374, %339 : vector<8x256xf32>
      %c41_55 = arith.constant 41 : index
      %376 = memref.load %arg2[%c41_55] : memref<64xf32, #tpu.memory_space<smem>>
      %377 = vector.broadcast %376 : f32 to vector<8x256xf32>
      %378 = arith.mulf %377, %340 : vector<8x256xf32>
      %379 = arith.addf %375, %378 : vector<8x256xf32>
      %c42_56 = arith.constant 42 : index
      %380 = memref.load %arg2[%c42_56] : memref<64xf32, #tpu.memory_space<smem>>
      %381 = vector.broadcast %380 : f32 to vector<8x256xf32>
      %382 = arith.mulf %381, %341 : vector<8x256xf32>
      %383 = arith.addf %379, %382 : vector<8x256xf32>
      %c43_57 = arith.constant 43 : index
      %384 = memref.load %arg2[%c43_57] : memref<64xf32, #tpu.memory_space<smem>>
      %385 = vector.broadcast %384 : f32 to vector<8x256xf32>
      %386 = arith.mulf %385, %342 : vector<8x256xf32>
      %387 = arith.addf %383, %386 : vector<8x256xf32>
      %c44_58 = arith.constant 44 : index
      %388 = memref.load %arg2[%c44_58] : memref<64xf32, #tpu.memory_space<smem>>
      %389 = vector.broadcast %388 : f32 to vector<8x256xf32>
      %390 = arith.mulf %389, %339 : vector<8x256xf32>
      %c45_59 = arith.constant 45 : index
      %391 = memref.load %arg2[%c45_59] : memref<64xf32, #tpu.memory_space<smem>>
      %392 = vector.broadcast %391 : f32 to vector<8x256xf32>
      %393 = arith.mulf %392, %340 : vector<8x256xf32>
      %394 = arith.addf %390, %393 : vector<8x256xf32>
      %c46_60 = arith.constant 46 : index
      %395 = memref.load %arg2[%c46_60] : memref<64xf32, #tpu.memory_space<smem>>
      %396 = vector.broadcast %395 : f32 to vector<8x256xf32>
      %397 = arith.mulf %396, %341 : vector<8x256xf32>
      %398 = arith.addf %394, %397 : vector<8x256xf32>
      %c47_61 = arith.constant 47 : index
      %399 = memref.load %arg2[%c47_61] : memref<64xf32, #tpu.memory_space<smem>>
      %400 = vector.broadcast %399 : f32 to vector<8x256xf32>
      %401 = arith.mulf %400, %342 : vector<8x256xf32>
      %402 = arith.addf %398, %401 : vector<8x256xf32>
      %cst_62 = arith.constant 4.000000e+00 : f32
      %403 = vector.broadcast %cst_62 : f32 to vector<8x256xf32>
      %404 = arith.minimumf %372, %403 : vector<8x256xf32>
      %405 = math.exp %404 : vector<8x256xf32>
      %406 = math.sin %387 : vector<8x256xf32>
      %cst_63 = arith.constant 5.000000e-03 : f32
      %407 = vector.broadcast %cst_63 : f32 to vector<8x256xf32>
      %408 = arith.maximumf %402, %407 : vector<8x256xf32>
      %409 = math.log %408 : vector<8x256xf32>
      %c48 = arith.constant 48 : index
      %410 = memref.load %arg3[%c48] : memref<96xf32, #tpu.memory_space<smem>>
      %411 = vector.broadcast %410 : f32 to vector<8x256xf32>
      %412 = arith.mulf %411, %7 : vector<8x256xf32>
      %c49 = arith.constant 49 : index
      %413 = memref.load %arg3[%c49] : memref<96xf32, #tpu.memory_space<smem>>
      %414 = vector.broadcast %413 : f32 to vector<8x256xf32>
      %415 = arith.mulf %414, %10 : vector<8x256xf32>
      %416 = arith.addf %412, %415 : vector<8x256xf32>
      %c50 = arith.constant 50 : index
      %417 = memref.load %arg3[%c50] : memref<96xf32, #tpu.memory_space<smem>>
      %418 = vector.broadcast %417 : f32 to vector<8x256xf32>
      %419 = arith.mulf %418, %13 : vector<8x256xf32>
      %420 = arith.addf %416, %419 : vector<8x256xf32>
      %c51 = arith.constant 51 : index
      %421 = memref.load %arg3[%c51] : memref<96xf32, #tpu.memory_space<smem>>
      %422 = vector.broadcast %421 : f32 to vector<8x256xf32>
      %423 = arith.mulf %422, %16 : vector<8x256xf32>
      %424 = arith.addf %420, %423 : vector<8x256xf32>
      %c52 = arith.constant 52 : index
      %425 = memref.load %arg3[%c52] : memref<96xf32, #tpu.memory_space<smem>>
      %426 = vector.broadcast %425 : f32 to vector<8x256xf32>
      %427 = arith.mulf %426, %7 : vector<8x256xf32>
      %c53 = arith.constant 53 : index
      %428 = memref.load %arg3[%c53] : memref<96xf32, #tpu.memory_space<smem>>
      %429 = vector.broadcast %428 : f32 to vector<8x256xf32>
      %430 = arith.mulf %429, %10 : vector<8x256xf32>
      %431 = arith.addf %427, %430 : vector<8x256xf32>
      %c54 = arith.constant 54 : index
      %432 = memref.load %arg3[%c54] : memref<96xf32, #tpu.memory_space<smem>>
      %433 = vector.broadcast %432 : f32 to vector<8x256xf32>
      %434 = arith.mulf %433, %13 : vector<8x256xf32>
      %435 = arith.addf %431, %434 : vector<8x256xf32>
      %c55 = arith.constant 55 : index
      %436 = memref.load %arg3[%c55] : memref<96xf32, #tpu.memory_space<smem>>
      %437 = vector.broadcast %436 : f32 to vector<8x256xf32>
      %438 = arith.mulf %437, %16 : vector<8x256xf32>
      %439 = arith.addf %435, %438 : vector<8x256xf32>
      %c56 = arith.constant 56 : index
      %440 = memref.load %arg3[%c56] : memref<96xf32, #tpu.memory_space<smem>>
      %441 = vector.broadcast %440 : f32 to vector<8x256xf32>
      %442 = arith.mulf %441, %7 : vector<8x256xf32>
      %c57 = arith.constant 57 : index
      %443 = memref.load %arg3[%c57] : memref<96xf32, #tpu.memory_space<smem>>
      %444 = vector.broadcast %443 : f32 to vector<8x256xf32>
      %445 = arith.mulf %444, %10 : vector<8x256xf32>
      %446 = arith.addf %442, %445 : vector<8x256xf32>
      %c58 = arith.constant 58 : index
      %447 = memref.load %arg3[%c58] : memref<96xf32, #tpu.memory_space<smem>>
      %448 = vector.broadcast %447 : f32 to vector<8x256xf32>
      %449 = arith.mulf %448, %13 : vector<8x256xf32>
      %450 = arith.addf %446, %449 : vector<8x256xf32>
      %c59 = arith.constant 59 : index
      %451 = memref.load %arg3[%c59] : memref<96xf32, #tpu.memory_space<smem>>
      %452 = vector.broadcast %451 : f32 to vector<8x256xf32>
      %453 = arith.mulf %452, %16 : vector<8x256xf32>
      %454 = arith.addf %450, %453 : vector<8x256xf32>
      %c60 = arith.constant 60 : index
      %455 = memref.load %arg3[%c60] : memref<96xf32, #tpu.memory_space<smem>>
      %456 = vector.broadcast %455 : f32 to vector<8x256xf32>
      %457 = arith.mulf %456, %7 : vector<8x256xf32>
      %c61 = arith.constant 61 : index
      %458 = memref.load %arg3[%c61] : memref<96xf32, #tpu.memory_space<smem>>
      %459 = vector.broadcast %458 : f32 to vector<8x256xf32>
      %460 = arith.mulf %459, %10 : vector<8x256xf32>
      %461 = arith.addf %457, %460 : vector<8x256xf32>
      %c62 = arith.constant 62 : index
      %462 = memref.load %arg3[%c62] : memref<96xf32, #tpu.memory_space<smem>>
      %463 = vector.broadcast %462 : f32 to vector<8x256xf32>
      %464 = arith.mulf %463, %13 : vector<8x256xf32>
      %465 = arith.addf %461, %464 : vector<8x256xf32>
      %c63 = arith.constant 63 : index
      %466 = memref.load %arg3[%c63] : memref<96xf32, #tpu.memory_space<smem>>
      %467 = vector.broadcast %466 : f32 to vector<8x256xf32>
      %468 = arith.mulf %467, %16 : vector<8x256xf32>
      %469 = arith.addf %465, %468 : vector<8x256xf32>
      %470 = arith.addf %357, %424 : vector<8x256xf32>
      %471 = arith.addf %405, %439 : vector<8x256xf32>
      %472 = arith.addf %406, %454 : vector<8x256xf32>
      %473 = arith.addf %409, %469 : vector<8x256xf32>
      %c64 = arith.constant 64 : index
      %474 = memref.load %arg3[%c64] : memref<96xf32, #tpu.memory_space<smem>>
      %475 = vector.broadcast %474 : f32 to vector<8x256xf32>
      %476 = arith.mulf %475, %144 : vector<8x256xf32>
      %c65 = arith.constant 65 : index
      %477 = memref.load %arg3[%c65] : memref<96xf32, #tpu.memory_space<smem>>
      %478 = vector.broadcast %477 : f32 to vector<8x256xf32>
      %479 = arith.mulf %478, %145 : vector<8x256xf32>
      %480 = arith.addf %476, %479 : vector<8x256xf32>
      %c66 = arith.constant 66 : index
      %481 = memref.load %arg3[%c66] : memref<96xf32, #tpu.memory_space<smem>>
      %482 = vector.broadcast %481 : f32 to vector<8x256xf32>
      %483 = arith.mulf %482, %146 : vector<8x256xf32>
      %484 = arith.addf %480, %483 : vector<8x256xf32>
      %c67 = arith.constant 67 : index
      %485 = memref.load %arg3[%c67] : memref<96xf32, #tpu.memory_space<smem>>
      %486 = vector.broadcast %485 : f32 to vector<8x256xf32>
      %487 = arith.mulf %486, %147 : vector<8x256xf32>
      %488 = arith.addf %484, %487 : vector<8x256xf32>
      %c68 = arith.constant 68 : index
      %489 = memref.load %arg3[%c68] : memref<96xf32, #tpu.memory_space<smem>>
      %490 = vector.broadcast %489 : f32 to vector<8x256xf32>
      %491 = arith.mulf %490, %144 : vector<8x256xf32>
      %c69 = arith.constant 69 : index
      %492 = memref.load %arg3[%c69] : memref<96xf32, #tpu.memory_space<smem>>
      %493 = vector.broadcast %492 : f32 to vector<8x256xf32>
      %494 = arith.mulf %493, %145 : vector<8x256xf32>
      %495 = arith.addf %491, %494 : vector<8x256xf32>
      %c70 = arith.constant 70 : index
      %496 = memref.load %arg3[%c70] : memref<96xf32, #tpu.memory_space<smem>>
      %497 = vector.broadcast %496 : f32 to vector<8x256xf32>
      %498 = arith.mulf %497, %146 : vector<8x256xf32>
      %499 = arith.addf %495, %498 : vector<8x256xf32>
      %c71 = arith.constant 71 : index
      %500 = memref.load %arg3[%c71] : memref<96xf32, #tpu.memory_space<smem>>
      %501 = vector.broadcast %500 : f32 to vector<8x256xf32>
      %502 = arith.mulf %501, %147 : vector<8x256xf32>
      %503 = arith.addf %499, %502 : vector<8x256xf32>
      %c72 = arith.constant 72 : index
      %504 = memref.load %arg3[%c72] : memref<96xf32, #tpu.memory_space<smem>>
      %505 = vector.broadcast %504 : f32 to vector<8x256xf32>
      %506 = arith.mulf %505, %144 : vector<8x256xf32>
      %c73 = arith.constant 73 : index
      %507 = memref.load %arg3[%c73] : memref<96xf32, #tpu.memory_space<smem>>
      %508 = vector.broadcast %507 : f32 to vector<8x256xf32>
      %509 = arith.mulf %508, %145 : vector<8x256xf32>
      %510 = arith.addf %506, %509 : vector<8x256xf32>
      %c74 = arith.constant 74 : index
      %511 = memref.load %arg3[%c74] : memref<96xf32, #tpu.memory_space<smem>>
      %512 = vector.broadcast %511 : f32 to vector<8x256xf32>
      %513 = arith.mulf %512, %146 : vector<8x256xf32>
      %514 = arith.addf %510, %513 : vector<8x256xf32>
      %c75 = arith.constant 75 : index
      %515 = memref.load %arg3[%c75] : memref<96xf32, #tpu.memory_space<smem>>
      %516 = vector.broadcast %515 : f32 to vector<8x256xf32>
      %517 = arith.mulf %516, %147 : vector<8x256xf32>
      %518 = arith.addf %514, %517 : vector<8x256xf32>
      %c76 = arith.constant 76 : index
      %519 = memref.load %arg3[%c76] : memref<96xf32, #tpu.memory_space<smem>>
      %520 = vector.broadcast %519 : f32 to vector<8x256xf32>
      %521 = arith.mulf %520, %144 : vector<8x256xf32>
      %c77 = arith.constant 77 : index
      %522 = memref.load %arg3[%c77] : memref<96xf32, #tpu.memory_space<smem>>
      %523 = vector.broadcast %522 : f32 to vector<8x256xf32>
      %524 = arith.mulf %523, %145 : vector<8x256xf32>
      %525 = arith.addf %521, %524 : vector<8x256xf32>
      %c78 = arith.constant 78 : index
      %526 = memref.load %arg3[%c78] : memref<96xf32, #tpu.memory_space<smem>>
      %527 = vector.broadcast %526 : f32 to vector<8x256xf32>
      %528 = arith.mulf %527, %146 : vector<8x256xf32>
      %529 = arith.addf %525, %528 : vector<8x256xf32>
      %c79 = arith.constant 79 : index
      %530 = memref.load %arg3[%c79] : memref<96xf32, #tpu.memory_space<smem>>
      %531 = vector.broadcast %530 : f32 to vector<8x256xf32>
      %532 = arith.mulf %531, %147 : vector<8x256xf32>
      %533 = arith.addf %529, %532 : vector<8x256xf32>
      %534 = arith.addf %470, %488 : vector<8x256xf32>
      %535 = arith.addf %471, %503 : vector<8x256xf32>
      %536 = arith.addf %472, %518 : vector<8x256xf32>
      %537 = arith.addf %473, %533 : vector<8x256xf32>
      %c80 = arith.constant 80 : index
      %538 = memref.load %arg3[%c80] : memref<96xf32, #tpu.memory_space<smem>>
      %539 = vector.broadcast %538 : f32 to vector<8x256xf32>
      %540 = arith.mulf %539, %339 : vector<8x256xf32>
      %c81 = arith.constant 81 : index
      %541 = memref.load %arg3[%c81] : memref<96xf32, #tpu.memory_space<smem>>
      %542 = vector.broadcast %541 : f32 to vector<8x256xf32>
      %543 = arith.mulf %542, %340 : vector<8x256xf32>
      %544 = arith.addf %540, %543 : vector<8x256xf32>
      %c82 = arith.constant 82 : index
      %545 = memref.load %arg3[%c82] : memref<96xf32, #tpu.memory_space<smem>>
      %546 = vector.broadcast %545 : f32 to vector<8x256xf32>
      %547 = arith.mulf %546, %341 : vector<8x256xf32>
      %548 = arith.addf %544, %547 : vector<8x256xf32>
      %c83 = arith.constant 83 : index
      %549 = memref.load %arg3[%c83] : memref<96xf32, #tpu.memory_space<smem>>
      %550 = vector.broadcast %549 : f32 to vector<8x256xf32>
      %551 = arith.mulf %550, %342 : vector<8x256xf32>
      %552 = arith.addf %548, %551 : vector<8x256xf32>
      %c84 = arith.constant 84 : index
      %553 = memref.load %arg3[%c84] : memref<96xf32, #tpu.memory_space<smem>>
      %554 = vector.broadcast %553 : f32 to vector<8x256xf32>
      %555 = arith.mulf %554, %339 : vector<8x256xf32>
      %c85 = arith.constant 85 : index
      %556 = memref.load %arg3[%c85] : memref<96xf32, #tpu.memory_space<smem>>
      %557 = vector.broadcast %556 : f32 to vector<8x256xf32>
      %558 = arith.mulf %557, %340 : vector<8x256xf32>
      %559 = arith.addf %555, %558 : vector<8x256xf32>
      %c86 = arith.constant 86 : index
      %560 = memref.load %arg3[%c86] : memref<96xf32, #tpu.memory_space<smem>>
      %561 = vector.broadcast %560 : f32 to vector<8x256xf32>
      %562 = arith.mulf %561, %341 : vector<8x256xf32>
      %563 = arith.addf %559, %562 : vector<8x256xf32>
      %c87 = arith.constant 87 : index
      %564 = memref.load %arg3[%c87] : memref<96xf32, #tpu.memory_space<smem>>
      %565 = vector.broadcast %564 : f32 to vector<8x256xf32>
      %566 = arith.mulf %565, %342 : vector<8x256xf32>
      %567 = arith.addf %563, %566 : vector<8x256xf32>
      %c88 = arith.constant 88 : index
      %568 = memref.load %arg3[%c88] : memref<96xf32, #tpu.memory_space<smem>>
      %569 = vector.broadcast %568 : f32 to vector<8x256xf32>
      %570 = arith.mulf %569, %339 : vector<8x256xf32>
      %c89 = arith.constant 89 : index
      %571 = memref.load %arg3[%c89] : memref<96xf32, #tpu.memory_space<smem>>
      %572 = vector.broadcast %571 : f32 to vector<8x256xf32>
      %573 = arith.mulf %572, %340 : vector<8x256xf32>
      %574 = arith.addf %570, %573 : vector<8x256xf32>
      %c90 = arith.constant 90 : index
      %575 = memref.load %arg3[%c90] : memref<96xf32, #tpu.memory_space<smem>>
      %576 = vector.broadcast %575 : f32 to vector<8x256xf32>
      %577 = arith.mulf %576, %341 : vector<8x256xf32>
      %578 = arith.addf %574, %577 : vector<8x256xf32>
      %c91 = arith.constant 91 : index
      %579 = memref.load %arg3[%c91] : memref<96xf32, #tpu.memory_space<smem>>
      %580 = vector.broadcast %579 : f32 to vector<8x256xf32>
      %581 = arith.mulf %580, %342 : vector<8x256xf32>
      %582 = arith.addf %578, %581 : vector<8x256xf32>
      %c92 = arith.constant 92 : index
      %583 = memref.load %arg3[%c92] : memref<96xf32, #tpu.memory_space<smem>>
      %584 = vector.broadcast %583 : f32 to vector<8x256xf32>
      %585 = arith.mulf %584, %339 : vector<8x256xf32>
      %c93 = arith.constant 93 : index
      %586 = memref.load %arg3[%c93] : memref<96xf32, #tpu.memory_space<smem>>
      %587 = vector.broadcast %586 : f32 to vector<8x256xf32>
      %588 = arith.mulf %587, %340 : vector<8x256xf32>
      %589 = arith.addf %585, %588 : vector<8x256xf32>
      %c94 = arith.constant 94 : index
      %590 = memref.load %arg3[%c94] : memref<96xf32, #tpu.memory_space<smem>>
      %591 = vector.broadcast %590 : f32 to vector<8x256xf32>
      %592 = arith.mulf %591, %341 : vector<8x256xf32>
      %593 = arith.addf %589, %592 : vector<8x256xf32>
      %c95 = arith.constant 95 : index
      %594 = memref.load %arg3[%c95] : memref<96xf32, #tpu.memory_space<smem>>
      %595 = vector.broadcast %594 : f32 to vector<8x256xf32>
      %596 = arith.mulf %595, %342 : vector<8x256xf32>
      %597 = arith.addf %593, %596 : vector<8x256xf32>
      %598 = arith.addf %534, %552 : vector<8x256xf32>
      %599 = arith.addf %535, %567 : vector<8x256xf32>
      %600 = arith.addf %536, %582 : vector<8x256xf32>
      %601 = arith.addf %537, %597 : vector<8x256xf32>
      %c48_64 = arith.constant 48 : index
      %602 = memref.load %arg2[%c48_64] : memref<64xf32, #tpu.memory_space<smem>>
      %603 = vector.broadcast %602 : f32 to vector<8x256xf32>
      %604 = arith.mulf %603, %598 : vector<8x256xf32>
      %c49_65 = arith.constant 49 : index
      %605 = memref.load %arg2[%c49_65] : memref<64xf32, #tpu.memory_space<smem>>
      %606 = vector.broadcast %605 : f32 to vector<8x256xf32>
      %607 = arith.mulf %606, %599 : vector<8x256xf32>
      %608 = arith.addf %604, %607 : vector<8x256xf32>
      %c50_66 = arith.constant 50 : index
      %609 = memref.load %arg2[%c50_66] : memref<64xf32, #tpu.memory_space<smem>>
      %610 = vector.broadcast %609 : f32 to vector<8x256xf32>
      %611 = arith.mulf %610, %600 : vector<8x256xf32>
      %612 = arith.addf %608, %611 : vector<8x256xf32>
      %c51_67 = arith.constant 51 : index
      %613 = memref.load %arg2[%c51_67] : memref<64xf32, #tpu.memory_space<smem>>
      %614 = vector.broadcast %613 : f32 to vector<8x256xf32>
      %615 = arith.mulf %614, %601 : vector<8x256xf32>
      %616 = arith.addf %612, %615 : vector<8x256xf32>
      %c52_68 = arith.constant 52 : index
      %617 = memref.load %arg2[%c52_68] : memref<64xf32, #tpu.memory_space<smem>>
      %618 = vector.broadcast %617 : f32 to vector<8x256xf32>
      %619 = arith.mulf %618, %598 : vector<8x256xf32>
      %c53_69 = arith.constant 53 : index
      %620 = memref.load %arg2[%c53_69] : memref<64xf32, #tpu.memory_space<smem>>
      %621 = vector.broadcast %620 : f32 to vector<8x256xf32>
      %622 = arith.mulf %621, %599 : vector<8x256xf32>
      %623 = arith.addf %619, %622 : vector<8x256xf32>
      %c54_70 = arith.constant 54 : index
      %624 = memref.load %arg2[%c54_70] : memref<64xf32, #tpu.memory_space<smem>>
      %625 = vector.broadcast %624 : f32 to vector<8x256xf32>
      %626 = arith.mulf %625, %600 : vector<8x256xf32>
      %627 = arith.addf %623, %626 : vector<8x256xf32>
      %c55_71 = arith.constant 55 : index
      %628 = memref.load %arg2[%c55_71] : memref<64xf32, #tpu.memory_space<smem>>
      %629 = vector.broadcast %628 : f32 to vector<8x256xf32>
      %630 = arith.mulf %629, %601 : vector<8x256xf32>
      %631 = arith.addf %627, %630 : vector<8x256xf32>
      %c56_72 = arith.constant 56 : index
      %632 = memref.load %arg2[%c56_72] : memref<64xf32, #tpu.memory_space<smem>>
      %633 = vector.broadcast %632 : f32 to vector<8x256xf32>
      %634 = arith.mulf %633, %598 : vector<8x256xf32>
      %c57_73 = arith.constant 57 : index
      %635 = memref.load %arg2[%c57_73] : memref<64xf32, #tpu.memory_space<smem>>
      %636 = vector.broadcast %635 : f32 to vector<8x256xf32>
      %637 = arith.mulf %636, %599 : vector<8x256xf32>
      %638 = arith.addf %634, %637 : vector<8x256xf32>
      %c58_74 = arith.constant 58 : index
      %639 = memref.load %arg2[%c58_74] : memref<64xf32, #tpu.memory_space<smem>>
      %640 = vector.broadcast %639 : f32 to vector<8x256xf32>
      %641 = arith.mulf %640, %600 : vector<8x256xf32>
      %642 = arith.addf %638, %641 : vector<8x256xf32>
      %c59_75 = arith.constant 59 : index
      %643 = memref.load %arg2[%c59_75] : memref<64xf32, #tpu.memory_space<smem>>
      %644 = vector.broadcast %643 : f32 to vector<8x256xf32>
      %645 = arith.mulf %644, %601 : vector<8x256xf32>
      %646 = arith.addf %642, %645 : vector<8x256xf32>
      %c60_76 = arith.constant 60 : index
      %647 = memref.load %arg2[%c60_76] : memref<64xf32, #tpu.memory_space<smem>>
      %648 = vector.broadcast %647 : f32 to vector<8x256xf32>
      %649 = arith.mulf %648, %598 : vector<8x256xf32>
      %c61_77 = arith.constant 61 : index
      %650 = memref.load %arg2[%c61_77] : memref<64xf32, #tpu.memory_space<smem>>
      %651 = vector.broadcast %650 : f32 to vector<8x256xf32>
      %652 = arith.mulf %651, %599 : vector<8x256xf32>
      %653 = arith.addf %649, %652 : vector<8x256xf32>
      %c62_78 = arith.constant 62 : index
      %654 = memref.load %arg2[%c62_78] : memref<64xf32, #tpu.memory_space<smem>>
      %655 = vector.broadcast %654 : f32 to vector<8x256xf32>
      %656 = arith.mulf %655, %600 : vector<8x256xf32>
      %657 = arith.addf %653, %656 : vector<8x256xf32>
      %c63_79 = arith.constant 63 : index
      %658 = memref.load %arg2[%c63_79] : memref<64xf32, #tpu.memory_space<smem>>
      %659 = vector.broadcast %658 : f32 to vector<8x256xf32>
      %660 = arith.mulf %659, %601 : vector<8x256xf32>
      %661 = arith.addf %657, %660 : vector<8x256xf32>
      %cst_80 = arith.constant 4.000000e+00 : f32
      %662 = vector.broadcast %cst_80 : f32 to vector<8x256xf32>
      %663 = arith.minimumf %631, %662 : vector<8x256xf32>
      %664 = math.exp %663 : vector<8x256xf32>
      %665 = math.sin %646 : vector<8x256xf32>
      %cst_81 = arith.constant 5.000000e-03 : f32
      %666 = vector.broadcast %cst_81 : f32 to vector<8x256xf32>
      %667 = arith.maximumf %661, %666 : vector<8x256xf32>
      %668 = math.log %667 : vector<8x256xf32>
      %c16_82 = arith.constant 16 : index
      %669 = memref.load %arg4[%c16_82] : memref<20xf32, #tpu.memory_space<smem>>
      %670 = vector.broadcast %669 : f32 to vector<8x256xf32>
      %671 = arith.mulf %670, %616 : vector<8x256xf32>
      %c0_83 = arith.constant 0 : index
      %672 = memref.load %arg5[%c0_83] : memref<1xf32, #tpu.memory_space<smem>>
      %673 = vector.broadcast %672 : f32 to vector<8x256xf32>
      %674 = arith.addf %671, %673 : vector<8x256xf32>
      %c17_84 = arith.constant 17 : index
      %675 = memref.load %arg4[%c17_84] : memref<20xf32, #tpu.memory_space<smem>>
      %676 = vector.broadcast %675 : f32 to vector<8x256xf32>
      %677 = arith.mulf %676, %664 : vector<8x256xf32>
      %678 = arith.addf %674, %677 : vector<8x256xf32>
      %c18_85 = arith.constant 18 : index
      %679 = memref.load %arg4[%c18_85] : memref<20xf32, #tpu.memory_space<smem>>
      %680 = vector.broadcast %679 : f32 to vector<8x256xf32>
      %681 = arith.mulf %680, %665 : vector<8x256xf32>
      %682 = arith.addf %678, %681 : vector<8x256xf32>
      %c19_86 = arith.constant 19 : index
      %683 = memref.load %arg4[%c19_86] : memref<20xf32, #tpu.memory_space<smem>>
      %684 = vector.broadcast %683 : f32 to vector<8x256xf32>
      %685 = arith.mulf %684, %668 : vector<8x256xf32>
      %686 = arith.addf %682, %685 : vector<8x256xf32>
      %c0_87 = arith.constant 0 : index
      %687 = memref.load %arg4[%c0_87] : memref<20xf32, #tpu.memory_space<smem>>
      %688 = vector.broadcast %687 : f32 to vector<8x256xf32>
      %689 = arith.mulf %688, %7 : vector<8x256xf32>
      %690 = arith.addf %686, %689 : vector<8x256xf32>
      %c1_88 = arith.constant 1 : index
      %691 = memref.load %arg4[%c1_88] : memref<20xf32, #tpu.memory_space<smem>>
      %692 = vector.broadcast %691 : f32 to vector<8x256xf32>
      %693 = arith.mulf %692, %10 : vector<8x256xf32>
      %694 = arith.addf %690, %693 : vector<8x256xf32>
      %c2_89 = arith.constant 2 : index
      %695 = memref.load %arg4[%c2_89] : memref<20xf32, #tpu.memory_space<smem>>
      %696 = vector.broadcast %695 : f32 to vector<8x256xf32>
      %697 = arith.mulf %696, %13 : vector<8x256xf32>
      %698 = arith.addf %694, %697 : vector<8x256xf32>
      %c3_90 = arith.constant 3 : index
      %699 = memref.load %arg4[%c3_90] : memref<20xf32, #tpu.memory_space<smem>>
      %700 = vector.broadcast %699 : f32 to vector<8x256xf32>
      %701 = arith.mulf %700, %16 : vector<8x256xf32>
      %702 = arith.addf %698, %701 : vector<8x256xf32>
      %c4_91 = arith.constant 4 : index
      %703 = memref.load %arg4[%c4_91] : memref<20xf32, #tpu.memory_space<smem>>
      %704 = vector.broadcast %703 : f32 to vector<8x256xf32>
      %705 = arith.mulf %704, %144 : vector<8x256xf32>
      %706 = arith.addf %702, %705 : vector<8x256xf32>
      %c5_92 = arith.constant 5 : index
      %707 = memref.load %arg4[%c5_92] : memref<20xf32, #tpu.memory_space<smem>>
      %708 = vector.broadcast %707 : f32 to vector<8x256xf32>
      %709 = arith.mulf %708, %145 : vector<8x256xf32>
      %710 = arith.addf %706, %709 : vector<8x256xf32>
      %c6_93 = arith.constant 6 : index
      %711 = memref.load %arg4[%c6_93] : memref<20xf32, #tpu.memory_space<smem>>
      %712 = vector.broadcast %711 : f32 to vector<8x256xf32>
      %713 = arith.mulf %712, %146 : vector<8x256xf32>
      %714 = arith.addf %710, %713 : vector<8x256xf32>
      %c7_94 = arith.constant 7 : index
      %715 = memref.load %arg4[%c7_94] : memref<20xf32, #tpu.memory_space<smem>>
      %716 = vector.broadcast %715 : f32 to vector<8x256xf32>
      %717 = arith.mulf %716, %147 : vector<8x256xf32>
      %718 = arith.addf %714, %717 : vector<8x256xf32>
      %c8_95 = arith.constant 8 : index
      %719 = memref.load %arg4[%c8_95] : memref<20xf32, #tpu.memory_space<smem>>
      %720 = vector.broadcast %719 : f32 to vector<8x256xf32>
      %721 = arith.mulf %720, %339 : vector<8x256xf32>
      %722 = arith.addf %718, %721 : vector<8x256xf32>
      %c9_96 = arith.constant 9 : index
      %723 = memref.load %arg4[%c9_96] : memref<20xf32, #tpu.memory_space<smem>>
      %724 = vector.broadcast %723 : f32 to vector<8x256xf32>
      %725 = arith.mulf %724, %340 : vector<8x256xf32>
      %726 = arith.addf %722, %725 : vector<8x256xf32>
      %c10_97 = arith.constant 10 : index
      %727 = memref.load %arg4[%c10_97] : memref<20xf32, #tpu.memory_space<smem>>
      %728 = vector.broadcast %727 : f32 to vector<8x256xf32>
      %729 = arith.mulf %728, %341 : vector<8x256xf32>
      %730 = arith.addf %726, %729 : vector<8x256xf32>
      %c11_98 = arith.constant 11 : index
      %731 = memref.load %arg4[%c11_98] : memref<20xf32, #tpu.memory_space<smem>>
      %732 = vector.broadcast %731 : f32 to vector<8x256xf32>
      %733 = arith.mulf %732, %342 : vector<8x256xf32>
      %734 = arith.addf %730, %733 : vector<8x256xf32>
      %c12_99 = arith.constant 12 : index
      %735 = memref.load %arg4[%c12_99] : memref<20xf32, #tpu.memory_space<smem>>
      %736 = vector.broadcast %735 : f32 to vector<8x256xf32>
      %737 = arith.mulf %736, %598 : vector<8x256xf32>
      %738 = arith.addf %734, %737 : vector<8x256xf32>
      %c13_100 = arith.constant 13 : index
      %739 = memref.load %arg4[%c13_100] : memref<20xf32, #tpu.memory_space<smem>>
      %740 = vector.broadcast %739 : f32 to vector<8x256xf32>
      %741 = arith.mulf %740, %599 : vector<8x256xf32>
      %742 = arith.addf %738, %741 : vector<8x256xf32>
      %c14_101 = arith.constant 14 : index
      %743 = memref.load %arg4[%c14_101] : memref<20xf32, #tpu.memory_space<smem>>
      %744 = vector.broadcast %743 : f32 to vector<8x256xf32>
      %745 = arith.mulf %744, %600 : vector<8x256xf32>
      %746 = arith.addf %742, %745 : vector<8x256xf32>
      %c15_102 = arith.constant 15 : index
      %747 = memref.load %arg4[%c15_102] : memref<20xf32, #tpu.memory_space<smem>>
      %748 = vector.broadcast %747 : f32 to vector<8x256xf32>
      %749 = arith.mulf %748, %601 : vector<8x256xf32>
      %750 = arith.addf %746, %749 : vector<8x256xf32>
      %751 = arith.index_cast %4 : i32 to index
      %c0_103 = arith.constant 0 : index
      %752 = vector.load %arg6[%751, %c0_103] : memref<16x256xf32, #tpu.memory_space<vmem>>, vector<8x256xf32>
      tpu.vector_store %arg6[%751, %c0_103], %750 {strides = array<i32>} : memref<16x256xf32, #tpu.memory_space<vmem>>, vector<8x256xf32>,
    }
    %c2_i32_0 = arith.constant 2 : i32
    return
  }
  func.func @transform_0(%arg0: i32) -> (i32, i32, i32) {
    %c0_i32 = arith.constant 0 : i32
    %c0_i32_0 = arith.constant 0 : i32
    %c0_i32_1 = arith.constant 0 : i32
    return %c0_i32, %arg0, %c0_i32_0 : i32, i32, i32
  }
  func.func @transform_1(%arg0: i32) -> i32 {
    %c0_i32 = arith.constant 0 : i32
    %c0_i32_0 = arith.constant 0 : i32
    return %c0_i32 : i32
  }
  func.func @transform_2(%arg0: i32) -> i32 {
    %c0_i32 = arith.constant 0 : i32
    %c0_i32_0 = arith.constant 0 : i32
    return %c0_i32 : i32
  }
  func.func @transform_3(%arg0: i32) -> i32 {
    %c0_i32 = arith.constant 0 : i32
    %c0_i32_0 = arith.constant 0 : i32
    return %c0_i32 : i32
  }
  func.func @transform_4(%arg0: i32) -> i32 {
    %c0_i32 = arith.constant 0 : i32
    %c0_i32_0 = arith.constant 0 : i32
    return %c0_i32 : i32
  }
  func.func @transform_5(%arg0: i32) -> (i32, i32) {
    %c0_i32 = arith.constant 0 : i32
    %c0_i32_0 = arith.constant 0 : i32
    return %arg0, %c0_i32 : i32, i32
  }
}

</mosaic_0001>

<llo_original>
// kernel: tpu_custom_call.1
$region0: #{tpu_custom_call.1}
  #allocation0 [shape = 'u32[]', space=smem, size = 0x4, offset = 0x4, fixed_abs, tag = 'smem constant byte address 0x4 - core index']
  #allocation1 [shape = 'u32[144,128]{1,0:T(1,128)}', space=vmem, size = 0x12000, scoped, tag = 'internal scratch']
  #allocation2 [shape = 'f32[1]{0:T(128)S(6)}', space=smem, size = 0x200, scoped, tag = 'scoped memory for tpu_custom_call.1']
  #allocation12 [shape = 's32[]', space=sflag, size = 0x4, offset = 0, fixed_abs, tag = 'sflag constant byte address 0x0 - dummy sync flag']
  %s0 = inlined_call_operand.hbm [shape: f32[4,32,256], index: 0, kind: input, shape index: {}]
  %s1 = inlined_call_operand.vmem [shape: f32[64], index: 1, kind: input, shape index: {}]
  %s2 = inlined_call_operand.vmem [shape: f32[96], index: 2, kind: input, shape index: {}]
  %s3 = inlined_call_operand.vmem [shape: f32[20], index: 3, kind: input, shape index: {}]
  %s4 = inlined_call_operand.<no memory space> [shape: f32[1], index: 4, kind: input, shape index: {}]
  %s5 = inlined_call_operand.hbm [shape: f32[32,256], index: 5, kind: output, shape index: {}]
  %s6 = sld [smem:[#allocation0]]
  $region76: #{tpu_custom_call.1} parent=0
    _
  %s8 = ssub.s32 1, %s6
  %s9 = scalar_select 0, %s8, %s6
  %10 = sst [smem:[#allocation2]] %s4
  $region1: #{tpu_custom_call.1} parent=0
    #allocation3 [shape = 'u8[131072]{0}', space=vmem, size = 0x20000, scoped, tag = 'input window, operand 0']
    #allocation4 [shape = 's32[2]{0}', space=sflag, size = 0x8, scoped, tag = 'scoped memory for tpu_custom_call.1']
    #allocation5 [shape = 's32[2]{0}', space=sflag, size = 0x8, scoped, tag = 'scoped memory for tpu_custom_call.1']
    #allocation6 [shape = 's32[2]{0}', space=sflag, size = 0x8, scoped, tag = 'scoped memory for tpu_custom_call.1']
    #allocation7 [shape = 'u8[512]{0}', space=smem, size = 0x200, scoped, tag = 'input window, operand 1, single buffered']
    #allocation8 [shape = 'u8[512]{0}', space=smem, size = 0x200, scoped, tag = 'input window, operand 2, single buffered']
    #allocation9 [shape = 's32[1]{0}', space=sflag, size = 0x4, scoped, tag = 'scoped memory for tpu_custom_call.1']
    #allocation10 [shape = 'u8[512]{0}', space=smem, size = 0x200, scoped, tag = 'input window, operand 3, single buffered']
    #allocation11 [shape = 'u8[32768]{0}', space=vmem, size = 0x8000, scoped, tag = 'output window, operand 0']
    %11 = vsyncpa [#allocation4], 0
    %s12 = scalar_lea.sflag [#allocation4], 1
    %13 = vsyncpa %s12, 0
    %14 = vsyncpa [#allocation6], 0
    %15 = vsyncpa [#allocation9], 0
    %16 = vsyncpa [#allocation5], 0
    %s17 = scalar_lea.sflag [#allocation5], 1
    %18 = vsyncpa %s17, 0
    loop: start=0, step=1, limit=4
    $region2: #{tpu_custom_call.1} parent=1 // loop_pre_header
      _
    $region3: #{tpu_custom_call.1} parent=1 // loop_header
      %s20 = sphi 0, %s24
      %p21 = scmp.ge.s32.totalorder %s20, 4
      %s30 = sphi 0, %s32
      %s33 = sphi 0, %s30
      %s34 = sphi 0, %s33
      %s50 = sphi 0, %s34
      %s54 = sphi 0, %s54
      %s56 = sphi 0, %s54
      %s57 = sphi 0, %s56
      %s71 = sphi 0, %s57
      %s75 = sphi 0, %s75
      %s77 = sphi 0, %s75
      %s78 = sphi 0, %s77
      %s92 = sphi 0, %s78
      %s96 = sphi 0, %s96
      %s98 = sphi 0, %s96
      %s99 = sphi 0, %s98
      %s113 = sphi 0, %s99
      %s117 = sphi 0, %s117
      %s119 = sphi 0, %s117
      %s120 = sphi 0, %s119
      %s134 = sphi 0, %s120
      %s140 = sphi 0, %s142
      %s143 = sphi 0, %s140
      %s144 = sphi 0, %s143
      %s160 = sphi 0, %s144
    $region4: #{tpu_custom_call.1} parent=1 // loop_header_branch
      %23 = sbr.rel (%p21) target = $region8
    $region5: #{tpu_custom_call.1} parent=1 // loop_body
      %s25 = ssub.s32 %s20, 1
      %s26 = ssub.s32 %s20, 2
      %s27 = sadd.s32 %s20, 1
      %s28 = ssub.s32 %s20, %s27
      %p29 = scmp.eq.s32.totalorder %s28, 0
      %s31 = sadd.s32 %s30, 1
      %s32 = scalar_select %p29, %s30, %s31
      %p35 = pneg %p29
      %p36 = scmp.eq.s32.totalorder %s20, 1
      %p37 = por %p35, %p36
      %p38 = scmp.ne.s32.totalorder %s30, %s33
      %p39 = scmp.eq.s32.totalorder %s20, 0
      %p40 = por %p38, %p39
      %p41 = scmp.ne.s32.totalorder %s30, %s33
      %p42 = scmp.eq.s32.totalorder %s25, 1
      %p43 = por %p41, %p42
      %p44 = scmp.ne.s32.totalorder %s33, %s34
      %p45 = scmp.eq.s32.totalorder %s25, 0
      %p46 = por %p44, %p45
      %p47 = scmp.ne.s32.totalorder %s33, %s34
      %p48 = scmp.eq.s32.totalorder %s26, 1
      %p49 = por %p47, %p48
      %p51 = scmp.ne.s32.totalorder %s34, %s50
      %p52 = scmp.eq.s32.totalorder %s26, 0
      %p53 = por %p51, %p52
      %s55 = sadd.s32 %s54, 1
      %p58 = scmp.eq.s32.totalorder %s20, 1
      %p59 = scmp.ne.s32.totalorder %s54, %s56
      %p60 = scmp.eq.s32.totalorder %s20, 0
      %p61 = por %p59, %p60
      %p62 = scmp.ne.s32.totalorder %s54, %s56
      %p63 = scmp.eq.s32.totalorder %s25, 1
      %p64 = por %p62, %p63
      %p65 = scmp.ne.s32.totalorder %s56, %s57
      %p66 = scmp.eq.s32.totalorder %s25, 0
      %p67 = por %p65, %p66
      %p68 = scmp.ne.s32.totalorder %s56, %s57
      %p69 = scmp.eq.s32.totalorder %s26, 1
      %p70 = por %p68, %p69
      %p72 = scmp.ne.s32.totalorder %s57, %s71
      %p73 = scmp.eq.s32.totalorder %s26, 0
      %p74 = por %p72, %p73
      %s76 = sadd.s32 %s75, 1
      %p79 = scmp.eq.s32.totalorder %s20, 1
      %p80 = scmp.ne.s32.totalorder %s75, %s77
      %p81 = scmp.eq.s32.totalorder %s20, 0
      %p82 = por %p80, %p81
      %p83 = scmp.ne.s32.totalorder %s75, %s77
      %p84 = scmp.eq.s32.totalorder %s25, 1
      %p85 = por %p83, %p84
      %p86 = scmp.ne.s32.totalorder %s77, %s78
      %p87 = scmp.eq.s32.totalorder %s25, 0
      %p88 = por %p86, %p87
      %p89 = scmp.ne.s32.totalorder %s77, %s78
      %p90 = scmp.eq.s32.totalorder %s26, 1
      %p91 = por %p89, %p90
      %p93 = scmp.ne.s32.totalorder %s78, %s92
      %p94 = scmp.eq.s32.totalorder %s26, 0
      %p95 = por %p93, %p94
      %s97 = sadd.s32 %s96, 1
      %p100 = scmp.eq.s32.totalorder %s20, 1
      %p101 = scmp.ne.s32.totalorder %s96, %s98
      %p102 = scmp.eq.s32.totalorder %s20, 0
      %p103 = por %p101, %p102
      %p104 = scmp.ne.s32.totalorder %s96, %s98
      %p105 = scmp.eq.s32.totalorder %s25, 1
      %p106 = por %p104, %p105
      %p107 = scmp.ne.s32.totalorder %s98, %s99
      %p108 = scmp.eq.s32.totalorder %s25, 0
      %p109 = por %p107, %p108
      %p110 = scmp.ne.s32.totalorder %s98, %s99
      %p111 = scmp.eq.s32.totalorder %s26, 1
      %p112 = por %p110, %p111
      %p114 = scmp.ne.s32.totalorder %s99, %s113
      %p115 = scmp.eq.s32.totalorder %s26, 0
      %p116 = por %p114, %p115
      %s118 = sadd.s32 %s117, 1
      %p121 = scmp.eq.s32.totalorder %s20, 1
      %p122 = scmp.ne.s32.totalorder %s117, %s119
      %p123 = scmp.eq.s32.totalorder %s20, 0
      %p124 = por %p122, %p123
      %p125 = scmp.ne.s32.totalorder %s117, %s119
      %p126 = scmp.eq.s32.totalorder %s25, 1
      %p127 = por %p125, %p126
      %p128 = scmp.ne.s32.totalorder %s119, %s120
      %p129 = scmp.eq.s32.totalorder %s25, 0
      %p130 = por %p128, %p129
      %p131 = scmp.ne.s32.totalorder %s119, %s120
      %p132 = scmp.eq.s32.totalorder %s26, 1
      %p133 = por %p131, %p132
      %p135 = scmp.ne.s32.totalorder %s120, %s134
      %p136 = scmp.eq.s32.totalorder %s26, 0
      %p137 = por %p135, %p136
      %s138 = ssub.s32 %s20, %s27
      %p139 = scmp.eq.s32.totalorder %s138, 0
      %s141 = sadd.s32 %s140, 1
      %s142 = scalar_select %p139, %s140, %s141
      %p145 = pneg %p139
      %p146 = scmp.eq.s32.totalorder %s20, 1
      %p147 = por %p145, %p146
      %p148 = scmp.ne.s32.totalorder %s140, %s143
      %p149 = scmp.eq.s32.totalorder %s20, 0
      %p150 = por %p148, %p149
      %p151 = scmp.ne.s32.totalorder %s140, %s143
      %p152 = scmp.eq.s32.totalorder %s25, 1
      %p153 = por %p151, %p152
      %p154 = scmp.ne.s32.totalorder %s143, %s144
      %p155 = scmp.eq.s32.totalorder %s25, 0
      %p156 = por %p154, %p155
      %p157 = scmp.ne.s32.totalorder %s143, %s144
      %p158 = scmp.eq.s32.totalorder %s26, 1
      %p159 = por %p157, %p158
      %p161 = scmp.ne.s32.totalorder %s144, %s160
      %p162 = scmp.eq.s32.totalorder %s26, 0
      %p163 = por %p161, %p162
      %p164 = scmp.le.s32.totalorder 1, %s20
      %p165 = scmp.lt.s32.totalorder %s20, 3
      %p166 = pnand %p164, %p165
      %p167 = pneg %p166
      // Predicated region
      $region9: #{tpu_custom_call.1} parent=5 // pred_check
        _
      $region10: #{tpu_custom_call.1} parent=5 // pred_check_branch
        %169 = sbr.rel (%p166) target = $region12
      $region11: #{tpu_custom_call.1} parent=5 // pred_region
        %s170 = ssub.s32 %s20, 1
        // Predicated region
        $region13: #{tpu_custom_call.1} parent=11 // pred_check
          %p171 = pneg %p67
        $region14: #{tpu_custom_call.1} parent=11 // pred_check_branch
          %173 = sbr.rel (%p171) target = $region16
        $region15: #{tpu_custom_call.1} parent=11 // pred_region
          %s175 = ssub.s32 16, 16
          %176 = vsyncadd [#allocation6], %s175
          %s178 = sshll.u32 %s1, 4
          %s179 = int_to_ptr.vmem [resolvable:$true] %s178
          %181 = dma.vmem_to_smem %s179, 16, [#allocation7], [#allocation6]
        $region16: #{tpu_custom_call.1} parent=11 // pred_fallthru
          _
        // Predicated region
        $region17: #{tpu_custom_call.1} parent=11 // pred_check
          %p182 = pneg %p88
        $region18: #{tpu_custom_call.1} parent=11 // pred_check_branch
          %184 = sbr.rel (%p182) target = $region20
        $region19: #{tpu_custom_call.1} parent=11 // pred_region
          %s186 = ssub.s32 16, 16
          %187 = vsyncadd [#allocation9], %s186
          %s189 = sshll.u32 %s2, 4
          %s190 = int_to_ptr.vmem [resolvable:$true] %s189
          %192 = dma.vmem_to_smem %s190, 16, [#allocation8], [#allocation9]
        $region20: #{tpu_custom_call.1} parent=11 // pred_fallthru
          _
        // Predicated region
        $region21: #{tpu_custom_call.1} parent=11 // pred_check
          %p193 = pneg %p109
        $region22: #{tpu_custom_call.1} parent=11 // pred_check_branch
          %195 = sbr.rel (%p193) target = $region24
        $region23: #{tpu_custom_call.1} parent=11 // pred_region
          %s197 = ssub.s32 16, 16
          %198 = vsyncadd [#allocation9], %s197
          %s200 = sshll.u32 %s3, 4
          %s201 = int_to_ptr.vmem [resolvable:$true] %s200
          %203 = dma.vmem_to_smem %s201, 16, [#allocation10], [#allocation9]
        $region24: #{tpu_custom_call.1} parent=11 // pred_fallthru
          _
        // Predicated region
        $region25: #{tpu_custom_call.1} parent=11 // pred_check
          %p204 = pneg %p130
        $region26: #{tpu_custom_call.1} parent=11 // pred_check_branch
          %206 = sbr.rel (%p204) target = $region28
        $region27: #{tpu_custom_call.1} parent=11 // pred_region
          _
        $region28: #{tpu_custom_call.1} parent=11 // pred_fallthru
          _
      $region12: #{tpu_custom_call.1} parent=5 // pred_fallthru
        _
      %p207 = scmp.lt.s32.totalorder %s20, 2
      // Predicated region
      $region29: #{tpu_custom_call.1} parent=5 // pred_check
        %p208 = pneg %p207
      $region30: #{tpu_custom_call.1} parent=5 // pred_check_branch
        %210 = sbr.rel (%p208) target = $region32
      $region31: #{tpu_custom_call.1} parent=5 // pred_region
        // Predicated region
        $region33: #{tpu_custom_call.1} parent=31 // pred_check
          %p211 = pneg %p40
        $region34: #{tpu_custom_call.1} parent=31 // pred_check_branch
          %213 = sbr.rel (%p211) target = $region36
        $region35: #{tpu_custom_call.1} parent=31 // pred_region
          #allocation13 [shape = 'u32[6]{0}', space=smem, size = 0x18, scoped, tag = 'DMA stride descriptor']
          %s214 = sand.u32 %s30, 1
          %s215 = scalar_lea.sflag [#allocation4], %s214
          %s216 = sand.u32 %s30, 1
          %s217 = smul.addr %s216, 128
          %s218 = scalar_lea.vmem [#allocation3], %s217
          %s219 = smul.u32 2, %s20
          %s221 = ssub.s32 2048, 2048
          %222 = vsyncadd %s215, %s221
          %s223 = smul.addr %s219, 2
          %s224 = smul.addr %s223, 128
          %s225 = scalar_lea.hbm %s0, %s224
          %s227 = sshll.u32 1, 14
          %s228 = sxor.u32 4294967295, %s227
          %s230 = sld [smem:[#allocation0]]
          %s231 = sadd.s32 2, %s230
          %s233 = sshll.u32 7, 26
          %s234 = sxor.u32 4294967295, %s233
          %s235 = sand.u32 0, %s234
          %s236 = sshll.u32 %s231, 26
          %s237 = sor.u32 %s235, %s236
          %s238 = sshll.u32 %s218, 4
          %s239 = int_to_ptr.vmem [resolvable:$true] %s238
          %245 = sst [smem:[#allocation13]] 1024
          %s246 = scalar_lea.smem [#allocation13], 1
          %247 = sst [smem:[%s246]] 512
          %s248 = scalar_lea.smem [#allocation13], 2
          %249 = sst [smem:[%s248]] 2
          %s250 = scalar_lea.smem [#allocation13], 3
          %251 = sst [smem:[%s250]] 256
          %s252 = scalar_lea.smem [#allocation13], 4
          %253 = sst [smem:[%s252]] 256
          %s254 = scalar_lea.smem [#allocation13], 5
          %255 = sst [smem:[%s254]] 16
          %257 = dma.general %s225, 2048, %s239, %s215, 131072, [#allocation13], %s237, 0
        $region36: #{tpu_custom_call.1} parent=31 // pred_fallthru
          _
      $region32: #{tpu_custom_call.1} parent=5 // pred_fallthru
        _
      %p258 = scmp.le.s32.totalorder 1, %s20
      %p259 = scmp.lt.s32.totalorder %s20, 3
      %p260 = pnand %p258, %p259
      %p261 = pneg %p260
      // Predicated region
      $region37: #{tpu_custom_call.1} parent=5 // pred_check
        _
      $region38: #{tpu_custom_call.1} parent=5 // pred_check_branch
        %263 = sbr.rel (%p260) target = $region40
      $region39: #{tpu_custom_call.1} parent=5 // pred_region
        %s264 = ssub.s32 %s20, 1
        %s265 = sand.u32 %s33, 1
        %s266 = scalar_lea.sflag [#allocation4], %s265
        %s267 = sand.u32 %s33, 1
        %s268 = smul.addr %s267, 128
        %s269 = scalar_lea.vmem [#allocation3], %s268
        // Predicated region
        $region41: #{tpu_custom_call.1} parent=39 // pred_check
          %p270 = pneg %p46
        $region42: #{tpu_custom_call.1} parent=39 // pred_check_branch
          %272 = sbr.rel (%p270) target = $region44
        $region43: #{tpu_custom_call.1} parent=39 // pred_region
          %273 = dma.done %s266, 2048
        $region44: #{tpu_custom_call.1} parent=39 // pred_fallthru
          _
        // Predicated region
        $region45: #{tpu_custom_call.1} parent=39 // pred_check
          %p274 = pneg %p67
        $region46: #{tpu_custom_call.1} parent=39 // pred_check_branch
          %276 = sbr.rel (%p274) target = $region48
        $region47: #{tpu_custom_call.1} parent=39 // pred_region
          %277 = dma.done [#allocation6], 16
        $region48: #{tpu_custom_call.1} parent=39 // pred_fallthru
          _
        // Predicated region
        $region49: #{tpu_custom_call.1} parent=39 // pred_check
          %p278 = pneg %p88
        $region50: #{tpu_custom_call.1} parent=39 // pred_check_branch
          %280 = sbr.rel (%p278) target = $region52
        $region51: #{tpu_custom_call.1} parent=39 // pred_region
          %281 = dma.done [#allocation9], 16
        $region52: #{tpu_custom_call.1} parent=39 // pred_fallthru
          _
        // Predicated region
        $region53: #{tpu_custom_call.1} parent=39 // pred_check
          %p282 = pneg %p109
        $region54: #{tpu_custom_call.1} parent=39 // pred_check_branch
          %284 = sbr.rel (%p282) target = $region56
        $region55: #{tpu_custom_call.1} parent=39 // pred_region
          %285 = dma.done [#allocation9], 16
        $region56: #{tpu_custom_call.1} parent=39 // pred_fallthru
          _
        %286 = sfence
        %s287 = sand.u32 %s33, 1
        %s288 = scalar_lea.sflag [#allocation4], %s287
        %s289 = sand.u32 %s33, 1
        %s290 = smul.addr %s289, 128
        %s291 = scalar_lea.vmem [#allocation3], %s290
        %p292 = pneg %p46
        %p293 = pneg %p43
        %p294 = pneg %p67
        %p295 = pneg %p64
        %p296 = pneg %p88
        %p297 = pneg %p85
        %p298 = pneg %p109
        %p299 = pneg %p106
        %p300 = pneg %p130
        %p301 = pneg %p127
        %p302 = pneg %p156
        %p303 = pneg %p153
        %s304 = sand.u32 %s143, 1
        %s305 = scalar_lea.sflag [#allocation5], %s304
        %s306 = sand.u32 %s143, 1
        %s307 = smul.addr %s306, 32
        %s308 = scalar_lea.vmem [#allocation11], %s307
        %s309 = smul.u32 2, %s25
        %s310 = smul.u32 2, %s25
        loop: start=0, step=1, limit=2
        $region57: #{tpu_custom_call.1} parent=39 // loop_pre_header
          _
        $region58: #{tpu_custom_call.1} parent=39 // loop_header
          %s312 = sphi 0, %s316
          %p313 = scmp.ge.s32.totalorder %s312, 2
        $region59: #{tpu_custom_call.1} parent=39 // loop_header_branch
          %315 = sbr.rel (%p313) target = $region63
        $region60: #{tpu_custom_call.1} parent=39 // loop_body
          %s317 = smul.u32 %s312, 8
          %s318 = sshra.s32 %s317, 3
          %s319 = sand.u32 %s317, 7
          %s320 = smul.u32 %s318, 2
          %s321 = smul.addr %s320, 8
          %s322 = scalar_lea.vmem %s269, %s321 [#allocation3]
          %v323 = vld [vmem:[%s322] sm:$0xff]
          %v324 = vld [vmem:[%s322 + $0x8] sm:$0xff]
          %s325 = sadd.s32 %s320, 4
          %s326 = smul.addr %s325, 8
          %s327 = scalar_lea.vmem %s269, %s326 [#allocation3]
          %v328 = vld [vmem:[%s327] sm:$0xff]
          %v329 = vld [vmem:[%s327 + $0x8] sm:$0xff]
          %s330 = sadd.s32 %s320, 8
          %s331 = smul.addr %s330, 8
          %s332 = scalar_lea.vmem %s269, %s331 [#allocation3]
          %v333 = vld [vmem:[%s332] sm:$0xff]
          %v334 = vld [vmem:[%s332 + $0x8] sm:$0xff]
          %s335 = sadd.s32 %s320, 12
          %s336 = smul.addr %s335, 8
          %s337 = scalar_lea.vmem %s269, %s336 [#allocation3]
          %v338 = vld [vmem:[%s337] sm:$0xff]
          %v339 = vld [vmem:[%s337 + $0x8] sm:$0xff]
          %s340 = sld [smem:[#allocation7]]
          %v341 = vstv %s340
          %v342 = vmul.f32 %v341, %v323
          %v343 = vmul.f32 %v341, %v324
          %s344 = sld [smem:[#allocation7 + $0x1]]
          %v345 = vstv %s344
          %v346 = vmul.f32 %v345, %v328
          %v347 = vmul.f32 %v345, %v329
          %v348 = vadd.f32 %v342, %v346
          %v349 = vadd.f32 %v343, %v347
          %s350 = sld [smem:[#allocation7 + $0x2]]
          %v351 = vstv %s350
          %v352 = vmul.f32 %v351, %v333
          %v353 = vmul.f32 %v351, %v334
          %v354 = vadd.f32 %v348, %v352
          %v355 = vadd.f32 %v349, %v353
          %s356 = sld [smem:[#allocation7 + $0x3]]
          %v357 = vstv %s356
          %v358 = vmul.f32 %v357, %v338
          %v359 = vmul.f32 %v357, %v339
          %v360 = vadd.f32 %v354, %v358
          %v361 = vadd.f32 %v355, %v359
          %s362 = sld [smem:[#allocation7 + $0x4]]
          %v363 = vstv %s362
          %v364 = vmul.f32 %v363, %v323
          %v365 = vmul.f32 %v363, %v324
          %s366 = sld [smem:[#allocation7 + $0x5]]
          %v367 = vstv %s366
          %v368 = vmul.f32 %v367, %v328
          %v369 = vmul.f32 %v367, %v329
          %v370 = vadd.f32 %v364, %v368
          %v371 = vadd.f32 %v365, %v369
          %s372 = sld [smem:[#allocation7 + $0x6]]
          %v373 = vstv %s372
          %v374 = vmul.f32 %v373, %v333
          %v375 = vmul.f32 %v373, %v334
          %v376 = vadd.f32 %v370, %v374
          %v377 = vadd.f32 %v371, %v375
          %s378 = sld [smem:[#allocation7 + $0x7]]
          %v379 = vstv %s378
          %v380 = vmul.f32 %v379, %v338
          %v381 = vmul.f32 %v379, %v339
          %v382 = vadd.f32 %v376, %v380
          %v383 = vadd.f32 %v377, %v381
          %s384 = sld [smem:[#allocation7 + $0x8]]
          %v385 = vstv %s384
          %v386 = vmul.f32 %v385, %v323
          %v387 = vmul.f32 %v385, %v324
          %s388 = sld [smem:[#allocation7 + $0x9]]
          %v389 = vstv %s388
          %v390 = vmul.f32 %v389, %v328
          %v391 = vmul.f32 %v389, %v329
          %v392 = vadd.f32 %v386, %v390
          %v393 = vadd.f32 %v387, %v391
          %s394 = sld [smem:[#allocation7 + $0xa]]
          %v395 = vstv %s394
          %v396 = vmul.f32 %v395, %v333
          %v397 = vmul.f32 %v395, %v334
          %v398 = vadd.f32 %v392, %v396
          %v399 = vadd.f32 %v393, %v397
          %s400 = sld [smem:[#allocation7 + $0xb]]
          %v401 = vstv %s400
          %v402 = vmul.f32 %v401, %v338
          %v403 = vmul.f32 %v401, %v339
          %v404 = vadd.f32 %v398, %v402
          %v405 = vadd.f32 %v399, %v403
          %s406 = sld [smem:[#allocation7 + $0xc]]
          %v407 = vstv %s406
          %v408 = vmul.f32 %v407, %v323
          %v409 = vmul.f32 %v407, %v324
          %s410 = sld [smem:[#allocation7 + $0xd]]
          %v411 = vstv %s410
          %v412 = vmul.f32 %v411, %v328
          %v413 = vmul.f32 %v411, %v329
          %v414 = vadd.f32 %v408, %v412
          %v415 = vadd.f32 %v409, %v413
          %s416 = sld [smem:[#allocation7 + $0xe]]
          %v417 = vstv %s416
          %v418 = vmul.f32 %v417, %v333
          %v419 = vmul.f32 %v417, %v334
          %v420 = vadd.f32 %v414, %v418
          %v421 = vadd.f32 %v415, %v419
          %s422 = sld [smem:[#allocation7 + $0xf]]
          %v423 = vstv %s422
          %v424 = vmul.f32 %v423, %v338
          %v425 = vmul.f32 %v423, %v339
          %v426 = vadd.f32 %v420, %v424
          %v427 = vadd.f32 %v421, %v425
          %v428 = vmin.f32 %v382, 4.0
          %v429 = vmin.f32 %v383, 4.0
          %v430 = vmul.f32 %v428, 1.442695
          %v431 = vpow.pop %v430
          %v432 = vmul.f32 %v429, 1.442695
          %v433 = vpow.pop %v432
          %v434 = vand.u32 2147483647, %v404
          %vm435 = vcmp.le.f32.partialorder %v434, 0.7853982
          %vm436 = vcmp.lt.s32.totalorder %v404, 0
          %v437 = vand.u32 %v404, 2139095040
          %v438 = vshrl.u32 %v437, 23
          %v439 = vsub.s32 %v438, 127
          %v440 = vand.u32 2147483647, %v404
          %v441 = vand.u32 %v440, 8388607
          %v442 = vor.u32 %v441, 8388608
          %v443 = vsub.s32 0, %v442
          %v444 = vadd.s32 %v439, 1
          %vm445 = vcmp.gt.s32.totalorder %v444, 0
          %v446 = vsel %vm445, %v444, 0
          %v447 = vshrl.u32 %v446, 5
          %v448 = vand.u32 %v446, 31
          %v449 = vsub.s32 32, %v448
          %v450 = vshrl.u32 683565275, %v449
          %v451 = vshll.u32 683565275, %v448
          %v452 = vshrl.u32 2475754826, %v449
          %v453 = vor.u32 %v451, %v452
          %v454 = vshll.u32 2475754826, %v448
          %v455 = vshrl.u32 2131351028, %v449
          %v456 = vor.u32 %v454, %v455
          %v457 = vshll.u32 2131351028, %v448
          %v458 = vshrl.u32 2102212464, %v449
          %v459 = vor.u32 %v457, %v458
          %v460 = vshll.u32 2102212464, %v448
          %v461 = vshrl.u32 920167782, %v449
          %v462 = vor.u32 %v460, %v461
          %v463 = vshll.u32 920167782, %v448
          %v464 = vshrl.u32 1326507024, %v449
          %v465 = vor.u32 %v463, %v464
          %vm466 = vcmp.lt.s32.totalorder %v447, 1
          %vm467 = vcmp.lt.s32.totalorder %v447, 2
          %vm468 = vcmp.lt.s32.totalorder %v447, 3
          %vm469 = vcmp.lt.s32.totalorder %v447, 4
          %v470 = vsel %vm466, %v450, %v453
          %v471 = vsel %vm469, %v459, 2102212464
          %v472 = vsel %vm468, %v456, %v471
          %v473 = vsel %vm467, %v470, %v472
          %v474 = vsel %vm466, %v453, %v456
          %v475 = vsel %vm469, %v462, 920167782
          %v476 = vsel %vm468, %v459, %v475
          %v477 = vsel %vm467, %v474, %v476
          %v478 = vsel %vm466, %v456, %v459
          %v479 = vsel %vm469, %v465, 1326507024
          %v480 = vsel %vm468, %v462, %v479
          %v481 = vsel %vm467, %v478, %v480
          %v482 = vshll.u32 %v442, 8
          %v483 = vmul.u32.u64.compose %v482, %v481
          %v484 = vextract.low.u32 %v483
          %v485 = vextract.high.u32 %v483
          %v486 = vmul.u32.u64.compose %v482, %v477
          %v487 = vextract.low.u32 %v486
          %v488 = vextract.high.u32 %v486
          %v489 = vmul.u32 %v482, %v473
          %v490 = vadd.s32 %v485, %v487
          %vm491 = vc.u32 %v485, %v487
          %v492 = vadd.s32 %v488, 1
          %v493 = vsel %vm491, %v492, %v488
          %v494 = vadd.s32 %v489, %v493
          %v495 = vadd.s32 %v494, 536870912
          %v496 = vshrl.u32 %v495, 30
          %v497 = vshll.u32 %v496, 30
          %v498 = vsub.s32 %v494, %v497
          %vm499 = vcmp.lt.s32.totalorder %v498, 0
          %v500 = vsub.s32 0, %v498
          %v501 = vsel %vm499, %v500, %v498
          %v502 = vclz %v501
          %v503 = vsub.s32 %v502, 2
          %vm504 = vcmp.gt.s32.totalorder 0, %v503
          %v505 = vsel %vm504, 0, %v503
          %v506 = vsub.s32 32, %v505
          %v507 = vshll.u32 %v498, %v505
          %v508 = vshrl.u32 %v490, %v506
          %v509 = vor.u32 %v507, %v508
          %v510 = vsub.s32 4294967266, %v505
          %v511 = vadd.s32 %v510, 127
          %v512 = vshll.u32 %v511, 23
          %v513 = vor.u32 4788187, %v512
          %v514 = vand.u32 2147483647, %v513
          %v516 = vcvt.s32.f32 %v509
          %v517 = vmul.f32 %v516, %v514
          %v518 = vxor.u32 %v517, 2147483648
          %v519 = vsel %vm436, %v518, %v517
          %v520 = vsub.s32 4, %v496
          %v521 = vsel %vm436, %v520, %v496
          %v522 = vsel %vm435, %v404, %v519
          %v523 = vsel %vm435, 0, %v521
          %v524 = vcosq.f32.pop %v522
          %v525 = vsinq.f32.pop %v522
          %vm526 = vweird.f32 %v404
          %v527 = vadd.s32 %v523, 3
          %v528 = vand.u32 %v527, 3
          %vm529 = vcmp.lt.s32.totalorder %v528, 2
          %vm530 = vcmp.eq.s32.totalorder %v528, 0
          %v531 = vxor.u32 %v525, 2147483648
          %v532 = vsel %vm530, %v524, %v531
          %vm533 = vcmp.eq.s32.totalorder %v528, 2
          %v534 = vxor.u32 %v524, 2147483648
          %v535 = vsel %vm533, %v534, %v525
          %v536 = vsel %vm529, %v532, %v535
          %v537 = vsel %vm526, nan, %v536
          %v538 = vand.u32 2147483647, %v405
          %vm539 = vcmp.le.f32.partialorder %v538, 0.7853982
          %vm540 = vcmp.lt.s32.totalorder %v405, 0
          %v541 = vand.u32 %v405, 2139095040
          %v542 = vshrl.u32 %v541, 23
          %v543 = vsub.s32 %v542, 127
          %v544 = vand.u32 2147483647, %v405
          %v545 = vand.u32 %v544, 8388607
          %v546 = vor.u32 %v545, 8388608
          %v547 = vsub.s32 0, %v546
          %v548 = vadd.s32 %v543, 1
          %vm549 = vcmp.gt.s32.totalorder %v548, 0
          %v550 = vsel %vm549, %v548, 0
          %v551 = vshrl.u32 %v550, 5
          %v552 = vand.u32 %v550, 31
          %v553 = vsub.s32 32, %v552
          %v554 = vshrl.u32 683565275, %v553
          %v555 = vshll.u32 683565275, %v552
          %v556 = vshrl.u32 2475754826, %v553
          %v557 = vor.u32 %v555, %v556
          %v558 = vshll.u32 2475754826, %v552
          %v559 = vshrl.u32 2131351028, %v553
          %v560 = vor.u32 %v558, %v559
          %v561 = vshll.u32 2131351028, %v552
          %v562 = vshrl.u32 2102212464, %v553
          %v563 = vor.u32 %v561, %v562
          %v564 = vshll.u32 2102212464, %v552
          %v565 = vshrl.u32 920167782, %v553
          %v566 = vor.u32 %v564, %v565
          %v567 = vshll.u32 920167782, %v552
          %v568 = vshrl.u32 1326507024, %v553
          %v569 = vor.u32 %v567, %v568
          %vm570 = vcmp.lt.s32.totalorder %v551, 1
          %vm571 = vcmp.lt.s32.totalorder %v551, 2
          %vm572 = vcmp.lt.s32.totalorder %v551, 3
          %vm573 = vcmp.lt.s32.totalorder %v551, 4
          %v574 = vsel %vm570, %v554, %v557
          %v575 = vsel %vm573, %v563, 2102212464
          %v576 = vsel %vm572, %v560, %v575
          %v577 = vsel %vm571, %v574, %v576
          %v578 = vsel %vm570, %v557, %v560
          %v579 = vsel %vm573, %v566, 920167782
          %v580 = vsel %vm572, %v563, %v579
          %v581 = vsel %vm571, %v578, %v580
          %v582 = vsel %vm570, %v560, %v563
          %v583 = vsel %vm573, %v569, 1326507024
          %v584 = vsel %vm572, %v566, %v583
          %v585 = vsel %vm571, %v582, %v584
          %v586 = vshll.u32 %v546, 8
          %v587 = vmul.u32.u64.compose %v586, %v585
          %v588 = vextract.low.u32 %v587
          %v589 = vextract.high.u32 %v587
          %v590 = vmul.u32.u64.compose %v586, %v581
          %v591 = vextract.low.u32 %v590
          %v592 = vextract.high.u32 %v590
          %v593 = vmul.u32 %v586, %v577
          %v594 = vadd.s32 %v589, %v591
          %vm595 = vc.u32 %v589, %v591
          %v596 = vadd.s32 %v592, 1
          %v597 = vsel %vm595, %v596, %v592
          %v598 = vadd.s32 %v593, %v597
          %v599 = vadd.s32 %v598, 536870912
          %v600 = vshrl.u32 %v599, 30
          %v601 = vshll.u32 %v600, 30
          %v602 = vsub.s32 %v598, %v601
          %vm603 = vcmp.lt.s32.totalorder %v602, 0
          %v604 = vsub.s32 0, %v602
          %v605 = vsel %vm603, %v604, %v602
          %v606 = vclz %v605
          %v607 = vsub.s32 %v606, 2
          %vm608 = vcmp.gt.s32.totalorder 0, %v607
          %v609 = vsel %vm608, 0, %v607
          %v610 = vsub.s32 32, %v609
          %v611 = vshll.u32 %v602, %v609
          %v612 = vshrl.u32 %v594, %v610
          %v613 = vor.u32 %v611, %v612
          %v614 = vsub.s32 4294967266, %v609
          %v615 = vadd.s32 %v614, 127
          %v616 = vshll.u32 %v615, 23
          %v617 = vor.u32 4788187, %v616
          %v618 = vand.u32 2147483647, %v617
          %v620 = vcvt.s32.f32 %v613
          %v621 = vmul.f32 %v620, %v618
          %v622 = vxor.u32 %v621, 2147483648
          %v623 = vsel %vm540, %v622, %v621
          %v624 = vsub.s32 4, %v600
          %v625 = vsel %vm540, %v624, %v600
          %v626 = vsel %vm539, %v405, %v623
          %v627 = vsel %vm539, 0, %v625
          %v628 = vcosq.f32.pop %v626
          %v629 = vsinq.f32.pop %v626
          %vm630 = vweird.f32 %v405
          %v631 = vadd.s32 %v627, 3
          %v632 = vand.u32 %v631, 3
          %vm633 = vcmp.lt.s32.totalorder %v632, 2
          %vm634 = vcmp.eq.s32.totalorder %v632, 0
          %v635 = vxor.u32 %v629, 2147483648
          %v636 = vsel %vm634, %v628, %v635
          %vm637 = vcmp.eq.s32.totalorder %v632, 2
          %v638 = vxor.u32 %v628, 2147483648
          %v639 = vsel %vm637, %v638, %v629
          %v640 = vsel %vm633, %v636, %v639
          %v641 = vsel %vm630, nan, %v640
          %v642 = vmax.f32 %v426, 0.005
          %v643 = vmax.f32 %v427, 0.005
          %v644 = vlog2.pop %v642
          %v645 = vmul.f32 %v644, 0.6931472
          %v646 = vlog2.pop %v643
          %v647 = vmul.f32 %v646, 0.6931472
          %s648 = sld [smem:[#allocation8]]
          %v649 = vstv %s648
          %v650 = vmul.f32 %v649, %v323
          %v651 = vmul.f32 %v649, %v324
          %s652 = sld [smem:[#allocation8 + $0x1]]
          %v653 = vstv %s652
          %v654 = vmul.f32 %v653, %v328
          %v655 = vmul.f32 %v653, %v329
          %v656 = vadd.f32 %v650, %v654
          %v657 = vadd.f32 %v651, %v655
          %s658 = sld [smem:[#allocation8 + $0x2]]
          %v659 = vstv %s658
          %v660 = vmul.f32 %v659, %v333
          %v661 = vmul.f32 %v659, %v334
          %v662 = vadd.f32 %v656, %v660
          %v663 = vadd.f32 %v657, %v661
          %s664 = sld [smem:[#allocation8 + $0x3]]
          %v665 = vstv %s664
          %v666 = vmul.f32 %v665, %v338
          %v667 = vmul.f32 %v665, %v339
          %v668 = vadd.f32 %v662, %v666
          %v669 = vadd.f32 %v663, %v667
          %s670 = sld [smem:[#allocation8 + $0x4]]
          %v671 = vstv %s670
          %v672 = vmul.f32 %v671, %v323
          %v673 = vmul.f32 %v671, %v324
          %s674 = sld [smem:[#allocation8 + $0x5]]
          %v675 = vstv %s674
          %v676 = vmul.f32 %v675, %v328
          %v677 = vmul.f32 %v675, %v329
          %v678 = vadd.f32 %v672, %v676
          %v679 = vadd.f32 %v673, %v677
          %s680 = sld [smem:[#allocation8 + $0x6]]
          %v681 = vstv %s680
          %v682 = vmul.f32 %v681, %v333
          %v683 = vmul.f32 %v681, %v334
          %v684 = vadd.f32 %v678, %v682
          %v685 = vadd.f32 %v679, %v683
          %s686 = sld [smem:[#allocation8 + $0x7]]
          %v687 = vstv %s686
          %v688 = vmul.f32 %v687, %v338
          %v689 = vmul.f32 %v687, %v339
          %v690 = vadd.f32 %v684, %v688
          %v691 = vadd.f32 %v685, %v689
          %s692 = sld [smem:[#allocation8 + $0x8]]
          %v693 = vstv %s692
          %v694 = vmul.f32 %v693, %v323
          %v695 = vmul.f32 %v693, %v324
          %s696 = sld [smem:[#allocation8 + $0x9]]
          %v697 = vstv %s696
          %v698 = vmul.f32 %v697, %v328
          %v699 = vmul.f32 %v697, %v329
          %v700 = vadd.f32 %v694, %v698
          %v701 = vadd.f32 %v695, %v699
          %s702 = sld [smem:[#allocation8 + $0xa]]
          %v703 = vstv %s702
          %v704 = vmul.f32 %v703, %v333
          %v705 = vmul.f32 %v703, %v334
          %v706 = vadd.f32 %v700, %v704
          %v707 = vadd.f32 %v701, %v705
          %s708 = sld [smem:[#allocation8 + $0xb]]
          %v709 = vstv %s708
          %v710 = vmul.f32 %v709, %v338
          %v711 = vmul.f32 %v709, %v339
          %v712 = vadd.f32 %v706, %v710
          %v713 = vadd.f32 %v707, %v711
          %s714 = sld [smem:[#allocation8 + $0xc]]
          %v715 = vstv %s714
          %v716 = vmul.f32 %v715, %v323
          %v717 = vmul.f32 %v715, %v324
          %s718 = sld [smem:[#allocation8 + $0xd]]
          %v719 = vstv %s718
          %v720 = vmul.f32 %v719, %v328
          %v721 = vmul.f32 %v719, %v329
          %v722 = vadd.f32 %v716, %v720
          %v723 = vadd.f32 %v717, %v721
          %s724 = sld [smem:[#allocation8 + $0xe]]
          %v725 = vstv %s724
          %v726 = vmul.f32 %v725, %v333
          %v727 = vmul.f32 %v725, %v334
          %v728 = vadd.f32 %v722, %v726
          %v729 = vadd.f32 %v723, %v727
          %s730 = sld [smem:[#allocation8 + $0xf]]
          %v731 = vstv %s730
          %v732 = vmul.f32 %v731, %v338
          %v733 = vmul.f32 %v731, %v339
          %v734 = vadd.f32 %v728, %v732
          %v735 = vadd.f32 %v729, %v733
          %v736 = vadd.f32 %v360, %v668
          %v737 = vadd.f32 %v361, %v669
          %v738 = vadd.f32 %v431, %v690
          %v739 = vadd.f32 %v433, %v691
          %v740 = vadd.f32 %v537, %v712
          %v741 = vadd.f32 %v641, %v713
          %v742 = vadd.f32 %v645, %v734
          %v743 = vadd.f32 %v647, %v735
          %s744 = sld [smem:[#allocation7 + $0x10]]
          %v745 = vstv %s744
          %v746 = vmul.f32 %v745, %v736
          %v747 = vmul.f32 %v745, %v737
          %s748 = sld [smem:[#allocation7 + $0x11]]
          %v749 = vstv %s748
          %v750 = vmul.f32 %v749, %v738
          %v751 = vmul.f32 %v749, %v739
          %v752 = vadd.f32 %v746, %v750
          %v753 = vadd.f32 %v747, %v751
          %s754 = sld [smem:[#allocation7 + $0x12]]
          %v755 = vstv %s754
          %v756 = vmul.f32 %v755, %v740
          %v757 = vmul.f32 %v755, %v741
          %v758 = vadd.f32 %v752, %v756
          %v759 = vadd.f32 %v753, %v757
          %s760 = sld [smem:[#allocation7 + $0x13]]
          %v761 = vstv %s760
          %v762 = vmul.f32 %v761, %v742
          %v763 = vmul.f32 %v761, %v743
          %v764 = vadd.f32 %v758, %v762
          %v765 = vadd.f32 %v759, %v763
          %s766 = sld [smem:[#allocation7 + $0x14]]
          %v767 = vstv %s766
          %v768 = vmul.f32 %v767, %v736
          %v769 = vmul.f32 %v767, %v737
          %s770 = sld [smem:[#allocation7 + $0x15]]
          %v771 = vstv %s770
          %v772 = vmul.f32 %v771, %v738
          %v773 = vmul.f32 %v771, %v739
          %v774 = vadd.f32 %v768, %v772
          %v775 = vadd.f32 %v769, %v773
          %s776 = sld [smem:[#allocation7 + $0x16]]
          %v777 = vstv %s776
          %v778 = vmul.f32 %v777, %v740
          %v779 = vmul.f32 %v777, %v741
          %v780 = vadd.f32 %v774, %v778
          %v781 = vadd.f32 %v775, %v779
          %s782 = sld [smem:[#allocation7 + $0x17]]
          %v783 = vstv %s782
          %v784 = vmul.f32 %v783, %v742
          %v785 = vmul.f32 %v783, %v743
          %v786 = vadd.f32 %v780, %v784
          %v787 = vadd.f32 %v781, %v785
          %s788 = sld [smem:[#allocation7 + $0x18]]
          %v789 = vstv %s788
          %v790 = vmul.f32 %v789, %v736
          %v791 = vmul.f32 %v789, %v737
          %s792 = sld [smem:[#allocation7 + $0x19]]
          %v793 = vstv %s792
          %v794 = vmul.f32 %v793, %v738
          %v795 = vmul.f32 %v793, %v739
          %v796 = vadd.f32 %v790, %v794
          %v797 = vadd.f32 %v791, %v795
          %s798 = sld [smem:[#allocation7 + $0x1a]]
          %v799 = vstv %s798
          %v800 = vmul.f32 %v799, %v740
          %v801 = vmul.f32 %v799, %v741
          %v802 = vadd.f32 %v796, %v800
          %v803 = vadd.f32 %v797, %v801
          %s804 = sld [smem:[#allocation7 + $0x1b]]
          %v805 = vstv %s804
          %v806 = vmul.f32 %v805, %v742
          %v807 = vmul.f32 %v805, %v743
          %v808 = vadd.f32 %v802, %v806
          %v809 = vadd.f32 %v803, %v807
          %s810 = sld [smem:[#allocation7 + $0x1c]]
          %v811 = vstv %s810
          %v812 = vmul.f32 %v811, %v736
          %v813 = vmul.f32 %v811, %v737
          %s814 = sld [smem:[#allocation7 + $0x1d]]
          %v815 = vstv %s814
          %v816 = vmul.f32 %v815, %v738
          %v817 = vmul.f32 %v815, %v739
          %v818 = vadd.f32 %v812, %v816
          %v819 = vadd.f32 %v813, %v817
          %s820 = sld [smem:[#allocation7 + $0x1e]]
          %v821 = vstv %s820
          %v822 = vmul.f32 %v821, %v740
          %v823 = vmul.f32 %v821, %v741
          %v824 = vadd.f32 %v818, %v822
          %v825 = vadd.f32 %v819, %v823
          %s826 = sld [smem:[#allocation7 + $0x1f]]
          %v827 = vstv %s826
          %v828 = vmul.f32 %v827, %v742
          %v829 = vmul.f32 %v827, %v743
          %v830 = vadd.f32 %v824, %v828
          %v831 = vadd.f32 %v825, %v829
          %v832 = vmin.f32 %v786, 4.0
          %v833 = vmin.f32 %v787, 4.0
          %v834 = vmul.f32 %v832, 1.442695
          %v835 = vpow.pop %v834
          %v836 = vmul.f32 %v833, 1.442695
          %v837 = vpow.pop %v836
          %v838 = vand.u32 2147483647, %v808
          %vm839 = vcmp.le.f32.partialorder %v838, 0.7853982
          %vm840 = vcmp.lt.s32.totalorder %v808, 0
          %v841 = vand.u32 %v808, 2139095040
          %v842 = vshrl.u32 %v841, 23
          %v843 = vsub.s32 %v842, 127
          %v844 = vand.u32 2147483647, %v808
          %v845 = vand.u32 %v844, 8388607
          %v846 = vor.u32 %v845, 8388608
          %v847 = vsub.s32 0, %v846
          %v848 = vadd.s32 %v843, 1
          %vm849 = vcmp.gt.s32.totalorder %v848, 0
          %v850 = vsel %vm849, %v848, 0
          %v851 = vshrl.u32 %v850, 5
          %v852 = vand.u32 %v850, 31
          %v853 = vsub.s32 32, %v852
          %v854 = vshrl.u32 683565275, %v853
          %v855 = vshll.u32 683565275, %v852
          %v856 = vshrl.u32 2475754826, %v853
          %v857 = vor.u32 %v855, %v856
          %v858 = vshll.u32 2475754826, %v852
          %v859 = vshrl.u32 2131351028, %v853
          %v860 = vor.u32 %v858, %v859
          %v861 = vshll.u32 2131351028, %v852
          %v862 = vshrl.u32 2102212464, %v853
          %v863 = vor.u32 %v861, %v862
          %v864 = vshll.u32 2102212464, %v852
          %v865 = vshrl.u32 920167782, %v853
          %v866 = vor.u32 %v864, %v865
          %v867 = vshll.u32 920167782, %v852
          %v868 = vshrl.u32 1326507024, %v853
          %v869 = vor.u32 %v867, %v868
          %vm870 = vcmp.lt.s32.totalorder %v851, 1
          %vm871 = vcmp.lt.s32.totalorder %v851, 2
          %vm872 = vcmp.lt.s32.totalorder %v851, 3
          %vm873 = vcmp.lt.s32.totalorder %v851, 4
          %v874 = vsel %vm870, %v854, %v857
          %v875 = vsel %vm873, %v863, 2102212464
          %v876 = vsel %vm872, %v860, %v875
          %v877 = vsel %vm871, %v874, %v876
          %v878 = vsel %vm870, %v857, %v860
          %v879 = vsel %vm873, %v866, 920167782
          %v880 = vsel %vm872, %v863, %v879
          %v881 = vsel %vm871, %v878, %v880
          %v882 = vsel %vm870, %v860, %v863
          %v883 = vsel %vm873, %v869, 1326507024
          %v884 = vsel %vm872, %v866, %v883
          %v885 = vsel %vm871, %v882, %v884
          %v886 = vshll.u32 %v846, 8
          %v887 = vmul.u32.u64.compose %v886, %v885
          %v888 = vextract.low.u32 %v887
          %v889 = vextract.high.u32 %v887
          %v890 = vmul.u32.u64.compose %v886, %v881
          %v891 = vextract.low.u32 %v890
          %v892 = vextract.high.u32 %v890
          %v893 = vmul.u32 %v886, %v877
          %v894 = vadd.s32 %v889, %v891
          %vm895 = vc.u32 %v889, %v891
          %v896 = vadd.s32 %v892, 1
          %v897 = vsel %vm895, %v896, %v892
          %v898 = vadd.s32 %v893, %v897
          %v899 = vadd.s32 %v898, 536870912
          %v900 = vshrl.u32 %v899, 30
          %v901 = vshll.u32 %v900, 30
          %v902 = vsub.s32 %v898, %v901
          %vm903 = vcmp.lt.s32.totalorder %v902, 0
          %v904 = vsub.s32 0, %v902
          %v905 = vsel %vm903, %v904, %v902
          %v906 = vclz %v905
          %v907 = vsub.s32 %v906, 2
          %vm908 = vcmp.gt.s32.totalorder 0, %v907
          %v909 = vsel %vm908, 0, %v907
          %v910 = vsub.s32 32, %v909
          %v911 = vshll.u32 %v902, %v909
          %v912 = vshrl.u32 %v894, %v910
          %v913 = vor.u32 %v911, %v912
          %v914 = vsub.s32 4294967266, %v909
          %v915 = vadd.s32 %v914, 127
          %v916 = vshll.u32 %v915, 23
          %v917 = vor.u32 4788187, %v916
          %v918 = vand.u32 2147483647, %v917
          %v920 = vcvt.s32.f32 %v913
          %v921 = vmul.f32 %v920, %v918
          %v922 = vxor.u32 %v921, 2147483648
          %v923 = vsel %vm840, %v922, %v921
          %v924 = vsub.s32 4, %v900
          %v925 = vsel %vm840, %v924, %v900
          %v926 = vsel %vm839, %v808, %v923
          %v927 = vsel %vm839, 0, %v925
          %v928 = vcosq.f32.pop %v926
          %v929 = vsinq.f32.pop %v926
          %vm930 = vweird.f32 %v808
          %v931 = vadd.s32 %v927, 3
          %v932 = vand.u32 %v931, 3
          %vm933 = vcmp.lt.s32.totalorder %v932, 2
          %vm934 = vcmp.eq.s32.totalorder %v932, 0
          %v935 = vxor.u32 %v929, 2147483648
          %v936 = vsel %vm934, %v928, %v935
          %vm937 = vcmp.eq.s32.totalorder %v932, 2
          %v938 = vxor.u32 %v928, 2147483648
          %v939 = vsel %vm937, %v938, %v929
          %v940 = vsel %vm933, %v936, %v939
          %v941 = vsel %vm930, nan, %v940
          %v942 = vand.u32 2147483647, %v809
          %vm943 = vcmp.le.f32.partialorder %v942, 0.7853982
          %vm944 = vcmp.lt.s32.totalorder %v809, 0
          %v945 = vand.u32 %v809, 2139095040
          %v946 = vshrl.u32 %v945, 23
          %v947 = vsub.s32 %v946, 127
          %v948 = vand.u32 2147483647, %v809
          %v949 = vand.u32 %v948, 8388607
          %v950 = vor.u32 %v949, 8388608
          %v951 = vsub.s32 0, %v950
          %v952 = vadd.s32 %v947, 1
          %vm953 = vcmp.gt.s32.totalorder %v952, 0
          %v954 = vsel %vm953, %v952, 0
          %v955 = vshrl.u32 %v954, 5
          %v956 = vand.u32 %v954, 31
          %v957 = vsub.s32 32, %v956
          %v958 = vshrl.u32 683565275, %v957
          %v959 = vshll.u32 683565275, %v956
          %v960 = vshrl.u32 2475754826, %v957
          %v961 = vor.u32 %v959, %v960
          %v962 = vshll.u32 2475754826, %v956
          %v963 = vshrl.u32 2131351028, %v957
          %v964 = vor.u32 %v962, %v963
          %v965 = vshll.u32 2131351028, %v956
          %v966 = vshrl.u32 2102212464, %v957
          %v967 = vor.u32 %v965, %v966
          %v968 = vshll.u32 2102212464, %v956
          %v969 = vshrl.u32 920167782, %v957
          %v970 = vor.u32 %v968, %v969
          %v971 = vshll.u32 920167782, %v956
          %v972 = vshrl.u32 1326507024, %v957
          %v973 = vor.u32 %v971, %v972
          %vm974 = vcmp.lt.s32.totalorder %v955, 1
          %vm975 = vcmp.lt.s32.totalorder %v955, 2
          %vm976 = vcmp.lt.s32.totalorder %v955, 3
          %vm977 = vcmp.lt.s32.totalorder %v955, 4
          %v978 = vsel %vm974, %v958, %v961
          %v979 = vsel %vm977, %v967, 2102212464
          %v980 = vsel %vm976, %v964, %v979
          %v981 = vsel %vm975, %v978, %v980
          %v982 = vsel %vm974, %v961, %v964
          %v983 = vsel %vm977, %v970, 920167782
          %v984 = vsel %vm976, %v967, %v983
          %v985 = vsel %vm975, %v982, %v984
          %v986 = vsel %vm974, %v964, %v967
          %v987 = vsel %vm977, %v973, 1326507024
          %v988 = vsel %vm976, %v970, %v987
          %v989 = vsel %vm975, %v986, %v988
          %v990 = vshll.u32 %v950, 8
          %v991 = vmul.u32.u64.compose %v990, %v989
          %v992 = vextract.low.u32 %v991
          %v993 = vextract.high.u32 %v991
          %v994 = vmul.u32.u64.compose %v990, %v985
          %v995 = vextract.low.u32 %v994
          %v996 = vextract.high.u32 %v994
          %v997 = vmul.u32 %v990, %v981
          %v998 = vadd.s32 %v993, %v995
          %vm999 = vc.u32 %v993, %v995
          %v1000 = vadd.s32 %v996, 1
          %v1001 = vsel %vm999, %v1000, %v996
          %v1002 = vadd.s32 %v997, %v1001
          %v1003 = vadd.s32 %v1002, 536870912
          %v1004 = vshrl.u32 %v1003, 30
          %v1005 = vshll.u32 %v1004, 30
          %v1006 = vsub.s32 %v1002, %v1005
          %vm1007 = vcmp.lt.s32.totalorder %v1006, 0
          %v1008 = vsub.s32 0, %v1006
          %v1009 = vsel %vm1007, %v1008, %v1006
          %v1010 = vclz %v1009
          %v1011 = vsub.s32 %v1010, 2
          %vm1012 = vcmp.gt.s32.totalorder 0, %v1011
          %v1013 = vsel %vm1012, 0, %v1011
          %v1014 = vsub.s32 32, %v1013
          %v1015 = vshll.u32 %v1006, %v1013
          %v1016 = vshrl.u32 %v998, %v1014
          %v1017 = vor.u32 %v1015, %v1016
          %v1018 = vsub.s32 4294967266, %v1013
          %v1019 = vadd.s32 %v1018, 127
          %v1020 = vshll.u32 %v1019, 23
          %v1021 = vor.u32 4788187, %v1020
          %v1022 = vand.u32 2147483647, %v1021
          %v1024 = vcvt.s32.f32 %v1017
          %v1025 = vmul.f32 %v1024, %v1022
          %v1026 = vxor.u32 %v1025, 2147483648
          %v1027 = vsel %vm944, %v1026, %v1025
          %v1028 = vsub.s32 4, %v1004
          %v1029 = vsel %vm944, %v1028, %v1004
          %v1030 = vsel %vm943, %v809, %v1027
          %v1031 = vsel %vm943, 0, %v1029
          %v1032 = vcosq.f32.pop %v1030
          %v1033 = vsinq.f32.pop %v1030
          %vm1034 = vweird.f32 %v809
          %v1035 = vadd.s32 %v1031, 3
          %v1036 = vand.u32 %v1035, 3
          %vm1037 = vcmp.lt.s32.totalorder %v1036, 2
          %vm1038 = vcmp.eq.s32.totalorder %v1036, 0
          %v1039 = vxor.u32 %v1033, 2147483648
          %v1040 = vsel %vm1038, %v1032, %v1039
          %vm1041 = vcmp.eq.s32.totalorder %v1036, 2
          %v1042 = vxor.u32 %v1032, 2147483648
          %v1043 = vsel %vm1041, %v1042, %v1033
          %v1044 = vsel %vm1037, %v1040, %v1043
          %v1045 = vsel %vm1034, nan, %v1044
          %v1046 = vmax.f32 %v830, 0.005
          %v1047 = vmax.f32 %v831, 0.005
          %v1048 = vlog2.pop %v1046
          %v1049 = vmul.f32 %v1048, 0.6931472
          %v1050 = vlog2.pop %v1047
          %v1051 = vmul.f32 %v1050, 0.6931472
          %s1052 = sld [smem:[#allocation8 + $0x10]]
          %v1053 = vstv %s1052
          %v1054 = vmul.f32 %v1053, %v323
          %v1055 = vmul.f32 %v1053, %v324
          %s1056 = sld [smem:[#allocation8 + $0x11]]
          %v1057 = vstv %s1056
          %v1058 = vmul.f32 %v1057, %v328
          %v1059 = vmul.f32 %v1057, %v329
          %v1060 = vadd.f32 %v1054, %v1058
          %v1061 = vadd.f32 %v1055, %v1059
          %s1062 = sld [smem:[#allocation8 + $0x12]]
          %v1063 = vstv %s1062
          %v1064 = vmul.f32 %v1063, %v333
          %v1065 = vmul.f32 %v1063, %v334
          %v1066 = vadd.f32 %v1060, %v1064
          %v1067 = vadd.f32 %v1061, %v1065
          %s1068 = sld [smem:[#allocation8 + $0x13]]
          %v1069 = vstv %s1068
          %v1070 = vmul.f32 %v1069, %v338
          %v1071 = vmul.f32 %v1069, %v339
          %v1072 = vadd.f32 %v1066, %v1070
          %v1073 = vadd.f32 %v1067, %v1071
          %s1074 = sld [smem:[#allocation8 + $0x14]]
          %v1075 = vstv %s1074
          %v1076 = vmul.f32 %v1075, %v323
          %v1077 = vmul.f32 %v1075, %v324
          %s1078 = sld [smem:[#allocation8 + $0x15]]
          %v1079 = vstv %s1078
          %v1080 = vmul.f32 %v1079, %v328
          %v1081 = vmul.f32 %v1079, %v329
          %v1082 = vadd.f32 %v1076, %v1080
          %v1083 = vadd.f32 %v1077, %v1081
          %s1084 = sld [smem:[#allocation8 + $0x16]]
          %v1085 = vstv %s1084
          %v1086 = vmul.f32 %v1085, %v333
          %v1087 = vmul.f32 %v1085, %v334
          %v1088 = vadd.f32 %v1082, %v1086
          %v1089 = vadd.f32 %v1083, %v1087
          %s1090 = sld [smem:[#allocation8 + $0x17]]
          %v1091 = vstv %s1090
          %v1092 = vmul.f32 %v1091, %v338
          %v1093 = vmul.f32 %v1091, %v339
          %v1094 = vadd.f32 %v1088, %v1092
          %v1095 = vadd.f32 %v1089, %v1093
          %s1096 = sld [smem:[#allocation8 + $0x18]]
          %v1097 = vstv %s1096
          %v1098 = vmul.f32 %v1097, %v323
          %v1099 = vmul.f32 %v1097, %v324
          %s1100 = sld [smem:[#allocation8 + $0x19]]
          %v1101 = vstv %s1100
          %v1102 = vmul.f32 %v1101, %v328
          %v1103 = vmul.f32 %v1101, %v329
          %v1104 = vadd.f32 %v1098, %v1102
          %v1105 = vadd.f32 %v1099, %v1103
          %s1106 = sld [smem:[#allocation8 + $0x1a]]
          %v1107 = vstv %s1106
          %v1108 = vmul.f32 %v1107, %v333
          %v1109 = vmul.f32 %v1107, %v334
          %v1110 = vadd.f32 %v1104, %v1108
          %v1111 = vadd.f32 %v1105, %v1109
          %s1112 = sld [smem:[#allocation8 + $0x1b]]
          %v1113 = vstv %s1112
          %v1114 = vmul.f32 %v1113, %v338
          %v1115 = vmul.f32 %v1113, %v339
          %v1116 = vadd.f32 %v1110, %v1114
          %v1117 = vadd.f32 %v1111, %v1115
          %s1118 = sld [smem:[#allocation8 + $0x1c]]
          %v1119 = vstv %s1118
          %v1120 = vmul.f32 %v1119, %v323
          %v1121 = vmul.f32 %v1119, %v324
          %s1122 = sld [smem:[#allocation8 + $0x1d]]
          %v1123 = vstv %s1122
          %v1124 = vmul.f32 %v1123, %v328
          %v1125 = vmul.f32 %v1123, %v329
          %v1126 = vadd.f32 %v1120, %v1124
          %v1127 = vadd.f32 %v1121, %v1125
          %s1128 = sld [smem:[#allocation8 + $0x1e]]
          %v1129 = vstv %s1128
          %v1130 = vmul.f32 %v1129, %v333
          %v1131 = vmul.f32 %v1129, %v334
          %v1132 = vadd.f32 %v1126, %v1130
          %v1133 = vadd.f32 %v1127, %v1131
          %s1134 = sld [smem:[#allocation8 + $0x1f]]
          %v1135 = vstv %s1134
          %v1136 = vmul.f32 %v1135, %v338
          %v1137 = vmul.f32 %v1135, %v339
          %v1138 = vadd.f32 %v1132, %v1136
          %v1139 = vadd.f32 %v1133, %v1137
          %v1140 = vadd.f32 %v764, %v1072
          %v1141 = vadd.f32 %v765, %v1073
          %v1142 = vadd.f32 %v835, %v1094
          %v1143 = vadd.f32 %v837, %v1095
          %v1144 = vadd.f32 %v941, %v1116
          %v1145 = vadd.f32 %v1045, %v1117
          %v1146 = vadd.f32 %v1049, %v1138
          %v1147 = vadd.f32 %v1051, %v1139
          %s1148 = sld [smem:[#allocation8 + $0x20]]
          %v1149 = vstv %s1148
          %v1150 = vmul.f32 %v1149, %v736
          %v1151 = vmul.f32 %v1149, %v737
          %s1152 = sld [smem:[#allocation8 + $0x21]]
          %v1153 = vstv %s1152
          %v1154 = vmul.f32 %v1153, %v738
          %v1155 = vmul.f32 %v1153, %v739
          %v1156 = vadd.f32 %v1150, %v1154
          %v1157 = vadd.f32 %v1151, %v1155
          %s1158 = sld [smem:[#allocation8 + $0x22]]
          %v1159 = vstv %s1158
          %v1160 = vmul.f32 %v1159, %v740
          %v1161 = vmul.f32 %v1159, %v741
          %v1162 = vadd.f32 %v1156, %v1160
          %v1163 = vadd.f32 %v1157, %v1161
          %s1164 = sld [smem:[#allocation8 + $0x23]]
          %v1165 = vstv %s1164
          %v1166 = vmul.f32 %v1165, %v742
          %v1167 = vmul.f32 %v1165, %v743
          %v1168 = vadd.f32 %v1162, %v1166
          %v1169 = vadd.f32 %v1163, %v1167
          %s1170 = sld [smem:[#allocation8 + $0x24]]
          %v1171 = vstv %s1170
          %v1172 = vmul.f32 %v1171, %v736
          %v1173 = vmul.f32 %v1171, %v737
          %s1174 = sld [smem:[#allocation8 + $0x25]]
          %v1175 = vstv %s1174
          %v1176 = vmul.f32 %v1175, %v738
          %v1177 = vmul.f32 %v1175, %v739
          %v1178 = vadd.f32 %v1172, %v1176
          %v1179 = vadd.f32 %v1173, %v1177
          %s1180 = sld [smem:[#allocation8 + $0x26]]
          %v1181 = vstv %s1180
          %v1182 = vmul.f32 %v1181, %v740
          %v1183 = vmul.f32 %v1181, %v741
          %v1184 = vadd.f32 %v1178, %v1182
          %v1185 = vadd.f32 %v1179, %v1183
          %s1186 = sld [smem:[#allocation8 + $0x27]]
          %v1187 = vstv %s1186
          %v1188 = vmul.f32 %v1187, %v742
          %v1189 = vmul.f32 %v1187, %v743
          %v1190 = vadd.f32 %v1184, %v1188
          %v1191 = vadd.f32 %v1185, %v1189
          %s1192 = sld [smem:[#allocation8 + $0x28]]
          %v1193 = vstv %s1192
          %v1194 = vmul.f32 %v1193, %v736
          %v1195 = vmul.f32 %v1193, %v737
          %s1196 = sld [smem:[#allocation8 + $0x29]]
          %v1197 = vstv %s1196
          %v1198 = vmul.f32 %v1197, %v738
          %v1199 = vmul.f32 %v1197, %v739
          %v1200 = vadd.f32 %v1194, %v1198
          %v1201 = vadd.f32 %v1195, %v1199
          %s1202 = sld [smem:[#allocation8 + $0x2a]]
          %v1203 = vstv %s1202
          %v1204 = vmul.f32 %v1203, %v740
          %v1205 = vmul.f32 %v1203, %v741
          %v1206 = vadd.f32 %v1200, %v1204
          %v1207 = vadd.f32 %v1201, %v1205
          %s1208 = sld [smem:[#allocation8 + $0x2b]]
          %v1209 = vstv %s1208
          %v1210 = vmul.f32 %v1209, %v742
          %v1211 = vmul.f32 %v1209, %v743
          %v1212 = vadd.f32 %v1206, %v1210
          %v1213 = vadd.f32 %v1207, %v1211
          %s1214 = sld [smem:[#allocation8 + $0x2c]]
          %v1215 = vstv %s1214
          %v1216 = vmul.f32 %v1215, %v736
          %v1217 = vmul.f32 %v1215, %v737
          %s1218 = sld [smem:[#allocation8 + $0x2d]]
          %v1219 = vstv %s1218
          %v1220 = vmul.f32 %v1219, %v738
          %v1221 = vmul.f32 %v1219, %v739
          %v1222 = vadd.f32 %v1216, %v1220
          %v1223 = vadd.f32 %v1217, %v1221
          %s1224 = sld [smem:[#allocation8 + $0x2e]]
          %v1225 = vstv %s1224
          %v1226 = vmul.f32 %v1225, %v740
          %v1227 = vmul.f32 %v1225, %v741
          %v1228 = vadd.f32 %v1222, %v1226
          %v1229 = vadd.f32 %v1223, %v1227
          %s1230 = sld [smem:[#allocation8 + $0x2f]]
          %v1231 = vstv %s1230
          %v1232 = vmul.f32 %v1231, %v742
          %v1233 = vmul.f32 %v1231, %v743
          %v1234 = vadd.f32 %v1228, %v1232
          %v1235 = vadd.f32 %v1229, %v1233
          %v1236 = vadd.f32 %v1140, %v1168
          %v1237 = vadd.f32 %v1141, %v1169
          %v1238 = vadd.f32 %v1142, %v1190
          %v1239 = vadd.f32 %v1143, %v1191
          %v1240 = vadd.f32 %v1144, %v1212
          %v1241 = vadd.f32 %v1145, %v1213
          %v1242 = vadd.f32 %v1146, %v1234
          %v1243 = vadd.f32 %v1147, %v1235
          %s1244 = sld [smem:[#allocation7 + $0x20]]
          %v1245 = vstv %s1244
          %v1246 = vmul.f32 %v1245, %v1236
          %v1247 = vmul.f32 %v1245, %v1237
          %s1248 = sld [smem:[#allocation7 + $0x21]]
          %v1249 = vstv %s1248
          %v1250 = vmul.f32 %v1249, %v1238
          %v1251 = vmul.f32 %v1249, %v1239
          %v1252 = vadd.f32 %v1246, %v1250
          %v1253 = vadd.f32 %v1247, %v1251
          %s1254 = sld [smem:[#allocation7 + $0x22]]
          %v1255 = vstv %s1254
          %v1256 = vmul.f32 %v1255, %v1240
          %v1257 = vmul.f32 %v1255, %v1241
          %v1258 = vadd.f32 %v1252, %v1256
          %v1259 = vadd.f32 %v1253, %v1257
          %s1260 = sld [smem:[#allocation7 + $0x23]]
          %v1261 = vstv %s1260
          %v1262 = vmul.f32 %v1261, %v1242
          %v1263 = vmul.f32 %v1261, %v1243
          %v1264 = vadd.f32 %v1258, %v1262
          %v1265 = vadd.f32 %v1259, %v1263
          %s1266 = sld [smem:[#allocation7 + $0x24]]
          %v1267 = vstv %s1266
          %v1268 = vmul.f32 %v1267, %v1236
          %v1269 = vmul.f32 %v1267, %v1237
          %s1270 = sld [smem:[#allocation7 + $0x25]]
          %v1271 = vstv %s1270
          %v1272 = vmul.f32 %v1271, %v1238
          %v1273 = vmul.f32 %v1271, %v1239
          %v1274 = vadd.f32 %v1268, %v1272
          %v1275 = vadd.f32 %v1269, %v1273
          %s1276 = sld [smem:[#allocation7 + $0x26]]
          %v1277 = vstv %s1276
          %v1278 = vmul.f32 %v1277, %v1240
          %v1279 = vmul.f32 %v1277, %v1241
          %v1280 = vadd.f32 %v1274, %v1278
          %v1281 = vadd.f32 %v1275, %v1279
          %s1282 = sld [smem:[#allocation7 + $0x27]]
          %v1283 = vstv %s1282
          %v1284 = vmul.f32 %v1283, %v1242
          %v1285 = vmul.f32 %v1283, %v1243
          %v1286 = vadd.f32 %v1280, %v1284
          %v1287 = vadd.f32 %v1281, %v1285
          %s1288 = sld [smem:[#allocation7 + $0x28]]
          %v1289 = vstv %s1288
          %v1290 = vmul.f32 %v1289, %v1236
          %v1291 = vmul.f32 %v1289, %v1237
          %s1292 = sld [smem:[#allocation7 + $0x29]]
          %v1293 = vstv %s1292
          %v1294 = vmul.f32 %v1293, %v1238
          %v1295 = vmul.f32 %v1293, %v1239
          %v1296 = vadd.f32 %v1290, %v1294
          %v1297 = vadd.f32 %v1291, %v1295
          %s1298 = sld [smem:[#allocation7 + $0x2a]]
          %v1299 = vstv %s1298
          %v1300 = vmul.f32 %v1299, %v1240
          %v1301 = vmul.f32 %v1299, %v1241
          %v1302 = vadd.f32 %v1296, %v1300
          %v1303 = vadd.f32 %v1297, %v1301
          %s1304 = sld [smem:[#allocation7 + $0x2b]]
          %v1305 = vstv %s1304
          %v1306 = vmul.f32 %v1305, %v1242
          %v1307 = vmul.f32 %v1305, %v1243
          %v1308 = vadd.f32 %v1302, %v1306
          %v1309 = vadd.f32 %v1303, %v1307
          %s1310 = sld [smem:[#allocation7 + $0x2c]]
          %v1311 = vstv %s1310
          %v1312 = vmul.f32 %v1311, %v1236
          %v1313 = vmul.f32 %v1311, %v1237
          %s1314 = sld [smem:[#allocation7 + $0x2d]]
          %v1315 = vstv %s1314
          %v1316 = vmul.f32 %v1315, %v1238
          %v1317 = vmul.f32 %v1315, %v1239
          %v1318 = vadd.f32 %v1312, %v1316
          %v1319 = vadd.f32 %v1313, %v1317
          %s1320 = sld [smem:[#allocation7 + $0x2e]]
          %v1321 = vstv %s1320
          %v1322 = vmul.f32 %v1321, %v1240
          %v1323 = vmul.f32 %v1321, %v1241
          %v1324 = vadd.f32 %v1318, %v1322
          %v1325 = vadd.f32 %v1319, %v1323
          %s1326 = sld [smem:[#allocation7 + $0x2f]]
          %v1327 = vstv %s1326
          %v1328 = vmul.f32 %v1327, %v1242
          %v1329 = vmul.f32 %v1327, %v1243
          %v1330 = vadd.f32 %v1324, %v1328
          %v1331 = vadd.f32 %v1325, %v1329
          %v1332 = vmin.f32 %v1286, 4.0
          %v1333 = vmin.f32 %v1287, 4.0
          %v1334 = vmul.f32 %v1332, 1.442695
          %v1335 = vpow.pop %v1334
          %v1336 = vmul.f32 %v1333, 1.442695
          %v1337 = vpow.pop %v1336
          %v1338 = vand.u32 2147483647, %v1308
          %vm1339 = vcmp.le.f32.partialorder %v1338, 0.7853982
          %vm1340 = vcmp.lt.s32.totalorder %v1308, 0
          %v1341 = vand.u32 %v1308, 2139095040
          %v1342 = vshrl.u32 %v1341, 23
          %v1343 = vsub.s32 %v1342, 127
          %v1344 = vand.u32 2147483647, %v1308
          %v1345 = vand.u32 %v1344, 8388607
          %v1346 = vor.u32 %v1345, 8388608
          %v1347 = vsub.s32 0, %v1346
          %v1348 = vadd.s32 %v1343, 1
          %vm1349 = vcmp.gt.s32.totalorder %v1348, 0
          %v1350 = vsel %vm1349, %v1348, 0
          %v1351 = vshrl.u32 %v1350, 5
          %v1352 = vand.u32 %v1350, 31
          %v1353 = vsub.s32 32, %v1352
          %v1354 = vshrl.u32 683565275, %v1353
          %v1355 = vshll.u32 683565275, %v1352
          %v1356 = vshrl.u32 2475754826, %v1353
          %v1357 = vor.u32 %v1355, %v1356
          %v1358 = vshll.u32 2475754826, %v1352
          %v1359 = vshrl.u32 2131351028, %v1353
          %v1360 = vor.u32 %v1358, %v1359
          %v1361 = vshll.u32 2131351028, %v1352
          %v1362 = vshrl.u32 2102212464, %v1353
          %v1363 = vor.u32 %v1361, %v1362
          %v1364 = vshll.u32 2102212464, %v1352
          %v1365 = vshrl.u32 920167782, %v1353
          %v1366 = vor.u32 %v1364, %v1365
          %v1367 = vshll.u32 920167782, %v1352
          %v1368 = vshrl.u32 1326507024, %v1353
          %v1369 = vor.u32 %v1367, %v1368
          %vm1370 = vcmp.lt.s32.totalorder %v1351, 1
          %vm1371 = vcmp.lt.s32.totalorder %v1351, 2
          %vm1372 = vcmp.lt.s32.totalorder %v1351, 3
          %vm1373 = vcmp.lt.s32.totalorder %v1351, 4
          %v1374 = vsel %vm1370, %v1354, %v1357
          %v1375 = vsel %vm1373, %v1363, 2102212464
          %v1376 = vsel %vm1372, %v1360, %v1375
          %v1377 = vsel %vm1371, %v1374, %v1376
          %v1378 = vsel %vm1370, %v1357, %v1360
          %v1379 = vsel %vm1373, %v1366, 920167782
          %v1380 = vsel %vm1372, %v1363, %v1379
          %v1381 = vsel %vm1371, %v1378, %v1380
          %v1382 = vsel %vm1370, %v1360, %v1363
          %v1383 = vsel %vm1373, %v1369, 1326507024
          %v1384 = vsel %vm1372, %v1366, %v1383
          %v1385 = vsel %vm1371, %v1382, %v1384
          %v1386 = vshll.u32 %v1346, 8
          %v1387 = vmul.u32.u64.compose %v1386, %v1385
          %v1388 = vextract.low.u32 %v1387
          %v1389 = vextract.high.u32 %v1387
          %v1390 = vmul.u32.u64.compose %v1386, %v1381
          %v1391 = vextract.low.u32 %v1390
          %v1392 = vextract.high.u32 %v1390
          %v1393 = vmul.u32 %v1386, %v1377
          %v1394 = vadd.s32 %v1389, %v1391
          %vm1395 = vc.u32 %v1389, %v1391
          %v1396 = vadd.s32 %v1392, 1
          %v1397 = vsel %vm1395, %v1396, %v1392
          %v1398 = vadd.s32 %v1393, %v1397
          %v1399 = vadd.s32 %v1398, 536870912
          %v1400 = vshrl.u32 %v1399, 30
          %v1401 = vshll.u32 %v1400, 30
          %v1402 = vsub.s32 %v1398, %v1401
          %vm1403 = vcmp.lt.s32.totalorder %v1402, 0
          %v1404 = vsub.s32 0, %v1402
          %v1405 = vsel %vm1403, %v1404, %v1402
          %v1406 = vclz %v1405
          %v1407 = vsub.s32 %v1406, 2
          %vm1408 = vcmp.gt.s32.totalorder 0, %v1407
          %v1409 = vsel %vm1408, 0, %v1407
          %v1410 = vsub.s32 32, %v1409
          %v1411 = vshll.u32 %v1402, %v1409
          %v1412 = vshrl.u32 %v1394, %v1410
          %v1413 = vor.u32 %v1411, %v1412
          %v1414 = vsub.s32 4294967266, %v1409
          %v1415 = vadd.s32 %v1414, 127
          %v1416 = vshll.u32 %v1415, 23
          %v1417 = vor.u32 4788187, %v1416
          %v1418 = vand.u32 2147483647, %v1417
          %v1420 = vcvt.s32.f32 %v1413
          %v1421 = vmul.f32 %v1420, %v1418
          %v1422 = vxor.u32 %v1421, 2147483648
          %v1423 = vsel %vm1340, %v1422, %v1421
          %v1424 = vsub.s32 4, %v1400
          %v1425 = vsel %vm1340, %v1424, %v1400
          %v1426 = vsel %vm1339, %v1308, %v1423
          %v1427 = vsel %vm1339, 0, %v1425
          %v1428 = vcosq.f32.pop %v1426
          %v1429 = vsinq.f32.pop %v1426
          %vm1430 = vweird.f32 %v1308
          %v1431 = vadd.s32 %v1427, 3
          %v1432 = vand.u32 %v1431, 3
          %vm1433 = vcmp.lt.s32.totalorder %v1432, 2
          %vm1434 = vcmp.eq.s32.totalorder %v1432, 0
          %v1435 = vxor.u32 %v1429, 2147483648
          %v1436 = vsel %vm1434, %v1428, %v1435
          %vm1437 = vcmp.eq.s32.totalorder %v1432, 2
          %v1438 = vxor.u32 %v1428, 2147483648
          %v1439 = vsel %vm1437, %v1438, %v1429
          %v1440 = vsel %vm1433, %v1436, %v1439
          %v1441 = vsel %vm1430, nan, %v1440
          %v1442 = vand.u32 2147483647, %v1309
          %vm1443 = vcmp.le.f32.partialorder %v1442, 0.7853982
          %vm1444 = vcmp.lt.s32.totalorder %v1309, 0
          %v1445 = vand.u32 %v1309, 2139095040
          %v1446 = vshrl.u32 %v1445, 23
          %v1447 = vsub.s32 %v1446, 127
          %v1448 = vand.u32 2147483647, %v1309
          %v1449 = vand.u32 %v1448, 8388607
          %v1450 = vor.u32 %v1449, 8388608
          %v1451 = vsub.s32 0, %v1450
          %v1452 = vadd.s32 %v1447, 1
          %vm1453 = vcmp.gt.s32.totalorder %v1452, 0
          %v1454 = vsel %vm1453, %v1452, 0
          %v1455 = vshrl.u32 %v1454, 5
          %v1456 = vand.u32 %v1454, 31
          %v1457 = vsub.s32 32, %v1456
          %v1458 = vshrl.u32 683565275, %v1457
          %v1459 = vshll.u32 683565275, %v1456
          %v1460 = vshrl.u32 2475754826, %v1457
          %v1461 = vor.u32 %v1459, %v1460
          %v1462 = vshll.u32 2475754826, %v1456
          %v1463 = vshrl.u32 2131351028, %v1457
          %v1464 = vor.u32 %v1462, %v1463
          %v1465 = vshll.u32 2131351028, %v1456
          %v1466 = vshrl.u32 2102212464, %v1457
          %v1467 = vor.u32 %v1465, %v1466
          %v1468 = vshll.u32 2102212464, %v1456
          %v1469 = vshrl.u32 920167782, %v1457
          %v1470 = vor.u32 %v1468, %v1469
          %v1471 = vshll.u32 920167782, %v1456
          %v1472 = vshrl.u32 1326507024, %v1457
          %v1473 = vor.u32 %v1471, %v1472
          %vm1474 = vcmp.lt.s32.totalorder %v1455, 1
          %vm1475 = vcmp.lt.s32.totalorder %v1455, 2
          %vm1476 = vcmp.lt.s32.totalorder %v1455, 3
          %vm1477 = vcmp.lt.s32.totalorder %v1455, 4
          %v1478 = vsel %vm1474, %v1458, %v1461
          %v1479 = vsel %vm1477, %v1467, 2102212464
          %v1480 = vsel %vm1476, %v1464, %v1479
          %v1481 = vsel %vm1475, %v1478, %v1480
          %v1482 = vsel %vm1474, %v1461, %v1464
          %v1483 = vsel %vm1477, %v1470, 920167782
          %v1484 = vsel %vm1476, %v1467, %v1483
          %v1485 = vsel %vm1475, %v1482, %v1484
          %v1486 = vsel %vm1474, %v1464, %v1467
          %v1487 = vsel %vm1477, %v1473, 1326507024
          %v1488 = vsel %vm1476, %v1470, %v1487
          %v1489 = vsel %vm1475, %v1486, %v1488
          %v1490 = vshll.u32 %v1450, 8
          %v1491 = vmul.u32.u64.compose %v1490, %v1489
          %v1492 = vextract.low.u32 %v1491
          %v1493 = vextract.high.u32 %v1491
          %v1494 = vmul.u32.u64.compose %v1490, %v1485
          %v1495 = vextract.low.u32 %v1494
          %v1496 = vextract.high.u32 %v1494
          %v1497 = vmul.u32 %v1490, %v1481
          %v1498 = vadd.s32 %v1493, %v1495
          %vm1499 = vc.u32 %v1493, %v1495
          %v1500 = vadd.s32 %v1496, 1
          %v1501 = vsel %vm1499, %v1500, %v1496
          %v1502 = vadd.s32 %v1497, %v1501
          %v1503 = vadd.s32 %v1502, 536870912
          %v1504 = vshrl.u32 %v1503, 30
          %v1505 = vshll.u32 %v1504, 30
          %v1506 = vsub.s32 %v1502, %v1505
          %vm1507 = vcmp.lt.s32.totalorder %v1506, 0
          %v1508 = vsub.s32 0, %v1506
          %v1509 = vsel %vm1507, %v1508, %v1506
          %v1510 = vclz %v1509
          %v1511 = vsub.s32 %v1510, 2
          %vm1512 = vcmp.gt.s32.totalorder 0, %v1511
          %v1513 = vsel %vm1512, 0, %v1511
          %v1514 = vsub.s32 32, %v1513
          %v1515 = vshll.u32 %v1506, %v1513
          %v1516 = vshrl.u32 %v1498, %v1514
          %v1517 = vor.u32 %v1515, %v1516
          %v1518 = vsub.s32 4294967266, %v1513
          %v1519 = vadd.s32 %v1518, 127
          %v1520 = vshll.u32 %v1519, 23
          %v1521 = vor.u32 4788187, %v1520
          %v1522 = vand.u32 2147483647, %v1521
          %v1524 = vcvt.s32.f32 %v1517
          %v1525 = vmul.f32 %v1524, %v1522
          %v1526 = vxor.u32 %v1525, 2147483648
          %v1527 = vsel %vm1444, %v1526, %v1525
          %v1528 = vsub.s32 4, %v1504
          %v1529 = vsel %vm1444, %v1528, %v1504
          %v1530 = vsel %vm1443, %v1309, %v1527
          %v1531 = vsel %vm1443, 0, %v1529
          %v1532 = vcosq.f32.pop %v1530
          %v1533 = vsinq.f32.pop %v1530
          %vm1534 = vweird.f32 %v1309
          %v1535 = vadd.s32 %v1531, 3
          %v1536 = vand.u32 %v1535, 3
          %vm1537 = vcmp.lt.s32.totalorder %v1536, 2
          %vm1538 = vcmp.eq.s32.totalorder %v1536, 0
          %v1539 = vxor.u32 %v1533, 2147483648
          %v1540 = vsel %vm1538, %v1532, %v1539
          %vm1541 = vcmp.eq.s32.totalorder %v1536, 2
          %v1542 = vxor.u32 %v1532, 2147483648
          %v1543 = vsel %vm1541, %v1542, %v1533
          %v1544 = vsel %vm1537, %v1540, %v1543
          %v1545 = vsel %vm1534, nan, %v1544
          %v1546 = vmax.f32 %v1330, 0.005
          %v1547 = vmax.f32 %v1331, 0.005
          %v1548 = vlog2.pop %v1546
          %v1549 = vmul.f32 %v1548, 0.6931472
          %v1550 = vlog2.pop %v1547
          %v1551 = vmul.f32 %v1550, 0.6931472
          %s1552 = sld [smem:[#allocation8 + $0x30]]
          %v1553 = vstv %s1552
          %v1554 = vmul.f32 %v1553, %v323
          %v1555 = vmul.f32 %v1553, %v324
          %s1556 = sld [smem:[#allocation8 + $0x31]]
          %v1557 = vstv %s1556
          %v1558 = vmul.f32 %v1557, %v328
          %v1559 = vmul.f32 %v1557, %v329
          %v1560 = vadd.f32 %v1554, %v1558
          %v1561 = vadd.f32 %v1555, %v1559
          %s1562 = sld [smem:[#allocation8 + $0x32]]
          %v1563 = vstv %s1562
          %v1564 = vmul.f32 %v1563, %v333
          %v1565 = vmul.f32 %v1563, %v334
          %v1566 = vadd.f32 %v1560, %v1564
          %v1567 = vadd.f32 %v1561, %v1565
          %s1568 = sld [smem:[#allocation8 + $0x33]]
          %v1569 = vstv %s1568
          %v1570 = vmul.f32 %v1569, %v338
          %v1571 = vmul.f32 %v1569, %v339
          %v1572 = vadd.f32 %v1566, %v1570
          %v1573 = vadd.f32 %v1567, %v1571
          %s1574 = sld [smem:[#allocation8 + $0x34]]
          %v1575 = vstv %s1574
          %v1576 = vmul.f32 %v1575, %v323
          %v1577 = vmul.f32 %v1575, %v324
          %s1578 = sld [smem:[#allocation8 + $0x35]]
          %v1579 = vstv %s1578
          %v1580 = vmul.f32 %v1579, %v328
          %v1581 = vmul.f32 %v1579, %v329
          %v1582 = vadd.f32 %v1576, %v1580
          %v1583 = vadd.f32 %v1577, %v1581
          %s1584 = sld [smem:[#allocation8 + $0x36]]
          %v1585 = vstv %s1584
          %v1586 = vmul.f32 %v1585, %v333
          %v1587 = vmul.f32 %v1585, %v334
          %v1588 = vadd.f32 %v1582, %v1586
          %v1589 = vadd.f32 %v1583, %v1587
          %s1590 = sld [smem:[#allocation8 + $0x37]]
          %v1591 = vstv %s1590
          %v1592 = vmul.f32 %v1591, %v338
          %v1593 = vmul.f32 %v1591, %v339
          %v1594 = vadd.f32 %v1588, %v1592
          %v1595 = vadd.f32 %v1589, %v1593
          %s1596 = sld [smem:[#allocation8 + $0x38]]
          %v1597 = vstv %s1596
          %v1598 = vmul.f32 %v1597, %v323
          %v1599 = vmul.f32 %v1597, %v324
          %s1600 = sld [smem:[#allocation8 + $0x39]]
          %v1601 = vstv %s1600
          %v1602 = vmul.f32 %v1601, %v328
          %v1603 = vmul.f32 %v1601, %v329
          %v1604 = vadd.f32 %v1598, %v1602
          %v1605 = vadd.f32 %v1599, %v1603
          %s1606 = sld [smem:[#allocation8 + $0x3a]]
          %v1607 = vstv %s1606
          %v1608 = vmul.f32 %v1607, %v333
          %v1609 = vmul.f32 %v1607, %v334
          %v1610 = vadd.f32 %v1604, %v1608
          %v1611 = vadd.f32 %v1605, %v1609
          %s1612 = sld [smem:[#allocation8 + $0x3b]]
          %v1613 = vstv %s1612
          %v1614 = vmul.f32 %v1613, %v338
          %v1615 = vmul.f32 %v1613, %v339
          %v1616 = vadd.f32 %v1610, %v1614
          %v1617 = vadd.f32 %v1611, %v1615
          %s1618 = sld [smem:[#allocation8 + $0x3c]]
          %v1619 = vstv %s1618
          %v1620 = vmul.f32 %v1619, %v323
          %v1621 = vmul.f32 %v1619, %v324
          %s1622 = sld [smem:[#allocation8 + $0x3d]]
          %v1623 = vstv %s1622
          %v1624 = vmul.f32 %v1623, %v328
          %v1625 = vmul.f32 %v1623, %v329
          %v1626 = vadd.f32 %v1620, %v1624
          %v1627 = vadd.f32 %v1621, %v1625
          %s1628 = sld [smem:[#allocation8 + $0x3e]]
          %v1629 = vstv %s1628
          %v1630 = vmul.f32 %v1629, %v333
          %v1631 = vmul.f32 %v1629, %v334
          %v1632 = vadd.f32 %v1626, %v1630
          %v1633 = vadd.f32 %v1627, %v1631
          %s1634 = sld [smem:[#allocation8 + $0x3f]]
          %v1635 = vstv %s1634
          %v1636 = vmul.f32 %v1635, %v338
          %v1637 = vmul.f32 %v1635, %v339
          %v1638 = vadd.f32 %v1632, %v1636
          %v1639 = vadd.f32 %v1633, %v1637
          %v1640 = vadd.f32 %v1264, %v1572
          %v1641 = vadd.f32 %v1265, %v1573
          %v1642 = vadd.f32 %v1335, %v1594
          %v1643 = vadd.f32 %v1337, %v1595
          %v1644 = vadd.f32 %v1441, %v1616
          %v1645 = vadd.f32 %v1545, %v1617
          %v1646 = vadd.f32 %v1549, %v1638
          %v1647 = vadd.f32 %v1551, %v1639
          %s1648 = sld [smem:[#allocation8 + $0x40]]
          %v1649 = vstv %s1648
          %v1650 = vmul.f32 %v1649, %v736
          %v1651 = vmul.f32 %v1649, %v737
          %s1652 = sld [smem:[#allocation8 + $0x41]]
          %v1653 = vstv %s1652
          %v1654 = vmul.f32 %v1653, %v738
          %v1655 = vmul.f32 %v1653, %v739
          %v1656 = vadd.f32 %v1650, %v1654
          %v1657 = vadd.f32 %v1651, %v1655
          %s1658 = sld [smem:[#allocation8 + $0x42]]
          %v1659 = vstv %s1658
          %v1660 = vmul.f32 %v1659, %v740
          %v1661 = vmul.f32 %v1659, %v741
          %v1662 = vadd.f32 %v1656, %v1660
          %v1663 = vadd.f32 %v1657, %v1661
          %s1664 = sld [smem:[#allocation8 + $0x43]]
          %v1665 = vstv %s1664
          %v1666 = vmul.f32 %v1665, %v742
          %v1667 = vmul.f32 %v1665, %v743
          %v1668 = vadd.f32 %v1662, %v1666
          %v1669 = vadd.f32 %v1663, %v1667
          %s1670 = sld [smem:[#allocation8 + $0x44]]
          %v1671 = vstv %s1670
          %v1672 = vmul.f32 %v1671, %v736
          %v1673 = vmul.f32 %v1671, %v737
          %s1674 = sld [smem:[#allocation8 + $0x45]]
          %v1675 = vstv %s1674
          %v1676 = vmul.f32 %v1675, %v738
          %v1677 = vmul.f32 %v1675, %v739
          %v1678 = vadd.f32 %v1672, %v1676
          %v1679 = vadd.f32 %v1673, %v1677
          %s1680 = sld [smem:[#allocation8 + $0x46]]
          %v1681 = vstv %s1680
          %v1682 = vmul.f32 %v1681, %v740
          %v1683 = vmul.f32 %v1681, %v741
          %v1684 = vadd.f32 %v1678, %v1682
          %v1685 = vadd.f32 %v1679, %v1683
          %s1686 = sld [smem:[#allocation8 + $0x47]]
          %v1687 = vstv %s1686
          %v1688 = vmul.f32 %v1687, %v742
          %v1689 = vmul.f32 %v1687, %v743
          %v1690 = vadd.f32 %v1684, %v1688
          %v1691 = vadd.f32 %v1685, %v1689
          %s1692 = sld [smem:[#allocation8 + $0x48]]
          %v1693 = vstv %s1692
          %v1694 = vmul.f32 %v1693, %v736
          %v1695 = vmul.f32 %v1693, %v737
          %s1696 = sld [smem:[#allocation8 + $0x49]]
          %v1697 = vstv %s1696
          %v1698 = vmul.f32 %v1697, %v738
          %v1699 = vmul.f32 %v1697, %v739
          %v1700 = vadd.f32 %v1694, %v1698
          %v1701 = vadd.f32 %v1695, %v1699
          %s1702 = sld [smem:[#allocation8 + $0x4a]]
          %v1703 = vstv %s1702
          %v1704 = vmul.f32 %v1703, %v740
          %v1705 = vmul.f32 %v1703, %v741
          %v1706 = vadd.f32 %v1700, %v1704
          %v1707 = vadd.f32 %v1701, %v1705
          %s1708 = sld [smem:[#allocation8 + $0x4b]]
          %v1709 = vstv %s1708
          %v1710 = vmul.f32 %v1709, %v742
          %v1711 = vmul.f32 %v1709, %v743
          %v1712 = vadd.f32 %v1706, %v1710
          %v1713 = vadd.f32 %v1707, %v1711
          %s1714 = sld [smem:[#allocation8 + $0x4c]]
          %v1715 = vstv %s1714
          %v1716 = vmul.f32 %v1715, %v736
          %v1717 = vmul.f32 %v1715, %v737
          %s1718 = sld [smem:[#allocation8 + $0x4d]]
          %v1719 = vstv %s1718
          %v1720 = vmul.f32 %v1719, %v738
          %v1721 = vmul.f32 %v1719, %v739
          %v1722 = vadd.f32 %v1716, %v1720
          %v1723 = vadd.f32 %v1717, %v1721
          %s1724 = sld [smem:[#allocation8 + $0x4e]]
          %v1725 = vstv %s1724
          %v1726 = vmul.f32 %v1725, %v740
          %v1727 = vmul.f32 %v1725, %v741
          %v1728 = vadd.f32 %v1722, %v1726
          %v1729 = vadd.f32 %v1723, %v1727
          %s1730 = sld [smem:[#allocation8 + $0x4f]]
          %v1731 = vstv %s1730
          %v1732 = vmul.f32 %v1731, %v742
          %v1733 = vmul.f32 %v1731, %v743
          %v1734 = vadd.f32 %v1728, %v1732
          %v1735 = vadd.f32 %v1729, %v1733
          %v1736 = vadd.f32 %v1640, %v1668
          %v1737 = vadd.f32 %v1641, %v1669
          %v1738 = vadd.f32 %v1642, %v1690
          %v1739 = vadd.f32 %v1643, %v1691
          %v1740 = vadd.f32 %v1644, %v1712
          %v1741 = vadd.f32 %v1645, %v1713
          %v1742 = vadd.f32 %v1646, %v1734
          %v1743 = vadd.f32 %v1647, %v1735
          %s1744 = sld [smem:[#allocation8 + $0x50]]
          %v1745 = vstv %s1744
          %v1746 = vmul.f32 %v1745, %v1236
          %v1747 = vmul.f32 %v1745, %v1237
          %s1748 = sld [smem:[#allocation8 + $0x51]]
          %v1749 = vstv %s1748
          %v1750 = vmul.f32 %v1749, %v1238
          %v1751 = vmul.f32 %v1749, %v1239
          %v1752 = vadd.f32 %v1746, %v1750
          %v1753 = vadd.f32 %v1747, %v1751
          %s1754 = sld [smem:[#allocation8 + $0x52]]
          %v1755 = vstv %s1754
          %v1756 = vmul.f32 %v1755, %v1240
          %v1757 = vmul.f32 %v1755, %v1241
          %v1758 = vadd.f32 %v1752, %v1756
          %v1759 = vadd.f32 %v1753, %v1757
          %s1760 = sld [smem:[#allocation8 + $0x53]]
          %v1761 = vstv %s1760
          %v1762 = vmul.f32 %v1761, %v1242
          %v1763 = vmul.f32 %v1761, %v1243
          %v1764 = vadd.f32 %v1758, %v1762
          %v1765 = vadd.f32 %v1759, %v1763
          %s1766 = sld [smem:[#allocation8 + $0x54]]
          %v1767 = vstv %s1766
          %v1768 = vmul.f32 %v1767, %v1236
          %v1769 = vmul.f32 %v1767, %v1237
          %s1770 = sld [smem:[#allocation8 + $0x55]]
          %v1771 = vstv %s1770
          %v1772 = vmul.f32 %v1771, %v1238
          %v1773 = vmul.f32 %v1771, %v1239
          %v1774 = vadd.f32 %v1768, %v1772
          %v1775 = vadd.f32 %v1769, %v1773
          %s1776 = sld [smem:[#allocation8 + $0x56]]
          %v1777 = vstv %s1776
          %v1778 = vmul.f32 %v1777, %v1240
          %v1779 = vmul.f32 %v1777, %v1241
          %v1780 = vadd.f32 %v1774, %v1778
          %v1781 = vadd.f32 %v1775, %v1779
          %s1782 = sld [smem:[#allocation8 + $0x57]]
          %v1783 = vstv %s1782
          %v1784 = vmul.f32 %v1783, %v1242
          %v1785 = vmul.f32 %v1783, %v1243
          %v1786 = vadd.f32 %v1780, %v1784
          %v1787 = vadd.f32 %v1781, %v1785
          %s1788 = sld [smem:[#allocation8 + $0x58]]
          %v1789 = vstv %s1788
          %v1790 = vmul.f32 %v1789, %v1236
          %v1791 = vmul.f32 %v1789, %v1237
          %s1792 = sld [smem:[#allocation8 + $0x59]]
          %v1793 = vstv %s1792
          %v1794 = vmul.f32 %v1793, %v1238
          %v1795 = vmul.f32 %v1793, %v1239
          %v1796 = vadd.f32 %v1790, %v1794
          %v1797 = vadd.f32 %v1791, %v1795
          %s1798 = sld [smem:[#allocation8 + $0x5a]]
          %v1799 = vstv %s1798
          %v1800 = vmul.f32 %v1799, %v1240
          %v1801 = vmul.f32 %v1799, %v1241
          %v1802 = vadd.f32 %v1796, %v1800
          %v1803 = vadd.f32 %v1797, %v1801
          %s1804 = sld [smem:[#allocation8 + $0x5b]]
          %v1805 = vstv %s1804
          %v1806 = vmul.f32 %v1805, %v1242
          %v1807 = vmul.f32 %v1805, %v1243
          %v1808 = vadd.f32 %v1802, %v1806
          %v1809 = vadd.f32 %v1803, %v1807
          %s1810 = sld [smem:[#allocation8 + $0x5c]]
          %v1811 = vstv %s1810
          %v1812 = vmul.f32 %v1811, %v1236
          %v1813 = vmul.f32 %v1811, %v1237
          %s1814 = sld [smem:[#allocation8 + $0x5d]]
          %v1815 = vstv %s1814
          %v1816 = vmul.f32 %v1815, %v1238
          %v1817 = vmul.f32 %v1815, %v1239
          %v1818 = vadd.f32 %v1812, %v1816
          %v1819 = vadd.f32 %v1813, %v1817
          %s1820 = sld [smem:[#allocation8 + $0x5e]]
          %v1821 = vstv %s1820
          %v1822 = vmul.f32 %v1821, %v1240
          %v1823 = vmul.f32 %v1821, %v1241
          %v1824 = vadd.f32 %v1818, %v1822
          %v1825 = vadd.f32 %v1819, %v1823
          %s1826 = sld [smem:[#allocation8 + $0x5f]]
          %v1827 = vstv %s1826
          %v1828 = vmul.f32 %v1827, %v1242
          %v1829 = vmul.f32 %v1827, %v1243
          %v1830 = vadd.f32 %v1824, %v1828
          %v1831 = vadd.f32 %v1825, %v1829
          %v1832 = vadd.f32 %v1736, %v1764
          %v1833 = vadd.f32 %v1737, %v1765
          %v1834 = vadd.f32 %v1738, %v1786
          %v1835 = vadd.f32 %v1739, %v1787
          %v1836 = vadd.f32 %v1740, %v1808
          %v1837 = vadd.f32 %v1741, %v1809
          %v1838 = vadd.f32 %v1742, %v1830
          %v1839 = vadd.f32 %v1743, %v1831
          %s1840 = sld [smem:[#allocation7 + $0x30]]
          %v1841 = vstv %s1840
          %v1842 = vmul.f32 %v1841, %v1832
          %v1843 = vmul.f32 %v1841, %v1833
          %s1844 = sld [smem:[#allocation7 + $0x31]]
          %v1845 = vstv %s1844
          %v1846 = vmul.f32 %v1845, %v1834
          %v1847 = vmul.f32 %v1845, %v1835
          %v1848 = vadd.f32 %v1842, %v1846
          %v1849 = vadd.f32 %v1843, %v1847
          %s1850 = sld [smem:[#allocation7 + $0x32]]
          %v1851 = vstv %s1850
          %v1852 = vmul.f32 %v1851, %v1836
          %v1853 = vmul.f32 %v1851, %v1837
          %v1854 = vadd.f32 %v1848, %v1852
          %v1855 = vadd.f32 %v1849, %v1853
          %s1856 = sld [smem:[#allocation7 + $0x33]]
          %v1857 = vstv %s1856
          %v1858 = vmul.f32 %v1857, %v1838
          %v1859 = vmul.f32 %v1857, %v1839
          %v1860 = vadd.f32 %v1854, %v1858
          %v1861 = vadd.f32 %v1855, %v1859
          %s1862 = sld [smem:[#allocation7 + $0x34]]
          %v1863 = vstv %s1862
          %v1864 = vmul.f32 %v1863, %v1832
          %v1865 = vmul.f32 %v1863, %v1833
          %s1866 = sld [smem:[#allocation7 + $0x35]]
          %v1867 = vstv %s1866
          %v1868 = vmul.f32 %v1867, %v1834
          %v1869 = vmul.f32 %v1867, %v1835
          %v1870 = vadd.f32 %v1864, %v1868
          %v1871 = vadd.f32 %v1865, %v1869
          %s1872 = sld [smem:[#allocation7 + $0x36]]
          %v1873 = vstv %s1872
          %v1874 = vmul.f32 %v1873, %v1836
          %v1875 = vmul.f32 %v1873, %v1837
          %v1876 = vadd.f32 %v1870, %v1874
          %v1877 = vadd.f32 %v1871, %v1875
          %s1878 = sld [smem:[#allocation7 + $0x37]]
          %v1879 = vstv %s1878
          %v1880 = vmul.f32 %v1879, %v1838
          %v1881 = vmul.f32 %v1879, %v1839
          %v1882 = vadd.f32 %v1876, %v1880
          %v1883 = vadd.f32 %v1877, %v1881
          %s1884 = sld [smem:[#allocation7 + $0x38]]
          %v1885 = vstv %s1884
          %v1886 = vmul.f32 %v1885, %v1832
          %v1887 = vmul.f32 %v1885, %v1833
          %s1888 = sld [smem:[#allocation7 + $0x39]]
          %v1889 = vstv %s1888
          %v1890 = vmul.f32 %v1889, %v1834
          %v1891 = vmul.f32 %v1889, %v1835
          %v1892 = vadd.f32 %v1886, %v1890
          %v1893 = vadd.f32 %v1887, %v1891
          %s1894 = sld [smem:[#allocation7 + $0x3a]]
          %v1895 = vstv %s1894
          %v1896 = vmul.f32 %v1895, %v1836
          %v1897 = vmul.f32 %v1895, %v1837
          %v1898 = vadd.f32 %v1892, %v1896
          %v1899 = vadd.f32 %v1893, %v1897
          %s1900 = sld [smem:[#allocation7 + $0x3b]]
          %v1901 = vstv %s1900
          %v1902 = vmul.f32 %v1901, %v1838
          %v1903 = vmul.f32 %v1901, %v1839
          %v1904 = vadd.f32 %v1898, %v1902
          %v1905 = vadd.f32 %v1899, %v1903
          %s1906 = sld [smem:[#allocation7 + $0x3c]]
          %v1907 = vstv %s1906
          %v1908 = vmul.f32 %v1907, %v1832
          %v1909 = vmul.f32 %v1907, %v1833
          %s1910 = sld [smem:[#allocation7 + $0x3d]]
          %v1911 = vstv %s1910
          %v1912 = vmul.f32 %v1911, %v1834
          %v1913 = vmul.f32 %v1911, %v1835
          %v1914 = vadd.f32 %v1908, %v1912
          %v1915 = vadd.f32 %v1909, %v1913
          %s1916 = sld [smem:[#allocation7 + $0x3e]]
          %v1917 = vstv %s1916
          %v1918 = vmul.f32 %v1917, %v1836
          %v1919 = vmul.f32 %v1917, %v1837
          %v1920 = vadd.f32 %v1914, %v1918
          %v1921 = vadd.f32 %v1915, %v1919
          %s1922 = sld [smem:[#allocation7 + $0x3f]]
          %v1923 = vstv %s1922
          %v1924 = vmul.f32 %v1923, %v1838
          %v1925 = vmul.f32 %v1923, %v1839
          %v1926 = vadd.f32 %v1920, %v1924
          %v1927 = vadd.f32 %v1921, %v1925
          %v1928 = vmin.f32 %v1882, 4.0
          %v1929 = vmin.f32 %v1883, 4.0
          %v1930 = vmul.f32 %v1928, 1.442695
          %v1931 = vpow.pop %v1930
          %v1932 = vmul.f32 %v1929, 1.442695
          %v1933 = vpow.pop %v1932
          %v1934 = vand.u32 2147483647, %v1904
          %vm1935 = vcmp.le.f32.partialorder %v1934, 0.7853982
          %vm1936 = vcmp.lt.s32.totalorder %v1904, 0
          %v1937 = vand.u32 %v1904, 2139095040
          %v1938 = vshrl.u32 %v1937, 23
          %v1939 = vsub.s32 %v1938, 127
          %v1940 = vand.u32 2147483647, %v1904
          %v1941 = vand.u32 %v1940, 8388607
          %v1942 = vor.u32 %v1941, 8388608
          %v1943 = vsub.s32 0, %v1942
          %v1944 = vadd.s32 %v1939, 1
          %vm1945 = vcmp.gt.s32.totalorder %v1944, 0
          %v1946 = vsel %vm1945, %v1944, 0
          %v1947 = vshrl.u32 %v1946, 5
          %v1948 = vand.u32 %v1946, 31
          %v1949 = vsub.s32 32, %v1948
          %v1950 = vshrl.u32 683565275, %v1949
          %v1951 = vshll.u32 683565275, %v1948
          %v1952 = vshrl.u32 2475754826, %v1949
          %v1953 = vor.u32 %v1951, %v1952
          %v1954 = vshll.u32 2475754826, %v1948
          %v1955 = vshrl.u32 2131351028, %v1949
          %v1956 = vor.u32 %v1954, %v1955
          %v1957 = vshll.u32 2131351028, %v1948
          %v1958 = vshrl.u32 2102212464, %v1949
          %v1959 = vor.u32 %v1957, %v1958
          %v1960 = vshll.u32 2102212464, %v1948
          %v1961 = vshrl.u32 920167782, %v1949
          %v1962 = vor.u32 %v1960, %v1961
          %v1963 = vshll.u32 920167782, %v1948
          %v1964 = vshrl.u32 1326507024, %v1949
          %v1965 = vor.u32 %v1963, %v1964
          %vm1966 = vcmp.lt.s32.totalorder %v1947, 1
          %vm1967 = vcmp.lt.s32.totalorder %v1947, 2
          %vm1968 = vcmp.lt.s32.totalorder %v1947, 3
          %vm1969 = vcmp.lt.s32.totalorder %v1947, 4
          %v1970 = vsel %vm1966, %v1950, %v1953
          %v1971 = vsel %vm1969, %v1959, 2102212464
          %v1972 = vsel %vm1968, %v1956, %v1971
          %v1973 = vsel %vm1967, %v1970, %v1972
          %v1974 = vsel %vm1966, %v1953, %v1956
          %v1975 = vsel %vm1969, %v1962, 920167782
          %v1976 = vsel %vm1968, %v1959, %v1975
          %v1977 = vsel %vm1967, %v1974, %v1976
          %v1978 = vsel %vm1966, %v1956, %v1959
          %v1979 = vsel %vm1969, %v1965, 1326507024
          %v1980 = vsel %vm1968, %v1962, %v1979
          %v1981 = vsel %vm1967, %v1978, %v1980
          %v1982 = vshll.u32 %v1942, 8
          %v1983 = vmul.u32.u64.compose %v1982, %v1981
          %v1984 = vextract.low.u32 %v1983
          %v1985 = vextract.high.u32 %v1983
          %v1986 = vmul.u32.u64.compose %v1982, %v1977
          %v1987 = vextract.low.u32 %v1986
          %v1988 = vextract.high.u32 %v1986
          %v1989 = vmul.u32 %v1982, %v1973
          %v1990 = vadd.s32 %v1985, %v1987
          %vm1991 = vc.u32 %v1985, %v1987
          %v1992 = vadd.s32 %v1988, 1
          %v1993 = vsel %vm1991, %v1992, %v1988
          %v1994 = vadd.s32 %v1989, %v1993
          %v1995 = vadd.s32 %v1994, 536870912
          %v1996 = vshrl.u32 %v1995, 30
          %v1997 = vshll.u32 %v1996, 30
          %v1998 = vsub.s32 %v1994, %v1997
          %vm1999 = vcmp.lt.s32.totalorder %v1998, 0
          %v2000 = vsub.s32 0, %v1998
          %v2001 = vsel %vm1999, %v2000, %v1998
          %v2002 = vclz %v2001
          %v2003 = vsub.s32 %v2002, 2
          %vm2004 = vcmp.gt.s32.totalorder 0, %v2003
          %v2005 = vsel %vm2004, 0, %v2003
          %v2006 = vsub.s32 32, %v2005
          %v2007 = vshll.u32 %v1998, %v2005
          %v2008 = vshrl.u32 %v1990, %v2006
          %v2009 = vor.u32 %v2007, %v2008
          %v2010 = vsub.s32 4294967266, %v2005
          %v2011 = vadd.s32 %v2010, 127
          %v2012 = vshll.u32 %v2011, 23
          %v2013 = vor.u32 4788187, %v2012
          %v2014 = vand.u32 2147483647, %v2013
          %v2016 = vcvt.s32.f32 %v2009
          %v2017 = vmul.f32 %v2016, %v2014
          %v2018 = vxor.u32 %v2017, 2147483648
          %v2019 = vsel %vm1936, %v2018, %v2017
          %v2020 = vsub.s32 4, %v1996
          %v2021 = vsel %vm1936, %v2020, %v1996
          %v2022 = vsel %vm1935, %v1904, %v2019
          %v2023 = vsel %vm1935, 0, %v2021
          %v2024 = vcosq.f32.pop %v2022
          %v2025 = vsinq.f32.pop %v2022
          %vm2026 = vweird.f32 %v1904
          %v2027 = vadd.s32 %v2023, 3
          %v2028 = vand.u32 %v2027, 3
          %vm2029 = vcmp.lt.s32.totalorder %v2028, 2
          %vm2030 = vcmp.eq.s32.totalorder %v2028, 0
          %v2031 = vxor.u32 %v2025, 2147483648
          %v2032 = vsel %vm2030, %v2024, %v2031
          %vm2033 = vcmp.eq.s32.totalorder %v2028, 2
          %v2034 = vxor.u32 %v2024, 2147483648
          %v2035 = vsel %vm2033, %v2034, %v2025
          %v2036 = vsel %vm2029, %v2032, %v2035
          %v2037 = vsel %vm2026, nan, %v2036
          %v2038 = vand.u32 2147483647, %v1905
          %vm2039 = vcmp.le.f32.partialorder %v2038, 0.7853982
          %vm2040 = vcmp.lt.s32.totalorder %v1905, 0
          %v2041 = vand.u32 %v1905, 2139095040
          %v2042 = vshrl.u32 %v2041, 23
          %v2043 = vsub.s32 %v2042, 127
          %v2044 = vand.u32 2147483647, %v1905
          %v2045 = vand.u32 %v2044, 8388607
          %v2046 = vor.u32 %v2045, 8388608
          %v2047 = vsub.s32 0, %v2046
          %v2048 = vadd.s32 %v2043, 1
          %vm2049 = vcmp.gt.s32.totalorder %v2048, 0
          %v2050 = vsel %vm2049, %v2048, 0
          %v2051 = vshrl.u32 %v2050, 5
          %v2052 = vand.u32 %v2050, 31
          %v2053 = vsub.s32 32, %v2052
          %v2054 = vshrl.u32 683565275, %v2053
          %v2055 = vshll.u32 683565275, %v2052
          %v2056 = vshrl.u32 2475754826, %v2053
          %v2057 = vor.u32 %v2055, %v2056
          %v2058 = vshll.u32 2475754826, %v2052
          %v2059 = vshrl.u32 2131351028, %v2053
          %v2060 = vor.u32 %v2058, %v2059
          %v2061 = vshll.u32 2131351028, %v2052
          %v2062 = vshrl.u32 2102212464, %v2053
          %v2063 = vor.u32 %v2061, %v2062
          %v2064 = vshll.u32 2102212464, %v2052
          %v2065 = vshrl.u32 920167782, %v2053
          %v2066 = vor.u32 %v2064, %v2065
          %v2067 = vshll.u32 920167782, %v2052
          %v2068 = vshrl.u32 1326507024, %v2053
          %v2069 = vor.u32 %v2067, %v2068
          %vm2070 = vcmp.lt.s32.totalorder %v2051, 1
          %vm2071 = vcmp.lt.s32.totalorder %v2051, 2
          %vm2072 = vcmp.lt.s32.totalorder %v2051, 3
          %vm2073 = vcmp.lt.s32.totalorder %v2051, 4
          %v2074 = vsel %vm2070, %v2054, %v2057
          %v2075 = vsel %vm2073, %v2063, 2102212464
          %v2076 = vsel %vm2072, %v2060, %v2075
          %v2077 = vsel %vm2071, %v2074, %v2076
          %v2078 = vsel %vm2070, %v2057, %v2060
          %v2079 = vsel %vm2073, %v2066, 920167782
          %v2080 = vsel %vm2072, %v2063, %v2079
          %v2081 = vsel %vm2071, %v2078, %v2080
          %v2082 = vsel %vm2070, %v2060, %v2063
          %v2083 = vsel %vm2073, %v2069, 1326507024
          %v2084 = vsel %vm2072, %v2066, %v2083
          %v2085 = vsel %vm2071, %v2082, %v2084
          %v2086 = vshll.u32 %v2046, 8
          %v2087 = vmul.u32.u64.compose %v2086, %v2085
          %v2088 = vextract.low.u32 %v2087
          %v2089 = vextract.high.u32 %v2087
          %v2090 = vmul.u32.u64.compose %v2086, %v2081
          %v2091 = vextract.low.u32 %v2090
          %v2092 = vextract.high.u32 %v2090
          %v2093 = vmul.u32 %v2086, %v2077
          %v2094 = vadd.s32 %v2089, %v2091
          %vm2095 = vc.u32 %v2089, %v2091
          %v2096 = vadd.s32 %v2092, 1
          %v2097 = vsel %vm2095, %v2096, %v2092
          %v2098 = vadd.s32 %v2093, %v2097
          %v2099 = vadd.s32 %v2098, 536870912
          %v2100 = vshrl.u32 %v2099, 30
          %v2101 = vshll.u32 %v2100, 30
          %v2102 = vsub.s32 %v2098, %v2101
          %vm2103 = vcmp.lt.s32.totalorder %v2102, 0
          %v2104 = vsub.s32 0, %v2102
          %v2105 = vsel %vm2103, %v2104, %v2102
          %v2106 = vclz %v2105
          %v2107 = vsub.s32 %v2106, 2
          %vm2108 = vcmp.gt.s32.totalorder 0, %v2107
          %v2109 = vsel %vm2108, 0, %v2107
          %v2110 = vsub.s32 32, %v2109
          %v2111 = vshll.u32 %v2102, %v2109
          %v2112 = vshrl.u32 %v2094, %v2110
          %v2113 = vor.u32 %v2111, %v2112
          %v2114 = vsub.s32 4294967266, %v2109
          %v2115 = vadd.s32 %v2114, 127
          %v2116 = vshll.u32 %v2115, 23
          %v2117 = vor.u32 4788187, %v2116
          %v2118 = vand.u32 2147483647, %v2117
          %v2120 = vcvt.s32.f32 %v2113
          %v2121 = vmul.f32 %v2120, %v2118
          %v2122 = vxor.u32 %v2121, 2147483648
          %v2123 = vsel %vm2040, %v2122, %v2121
          %v2124 = vsub.s32 4, %v2100
          %v2125 = vsel %vm2040, %v2124, %v2100
          %v2126 = vsel %vm2039, %v1905, %v2123
          %v2127 = vsel %vm2039, 0, %v2125
          %v2128 = vcosq.f32.pop %v2126
          %v2129 = vsinq.f32.pop %v2126
          %vm2130 = vweird.f32 %v1905
          %v2131 = vadd.s32 %v2127, 3
          %v2132 = vand.u32 %v2131, 3
          %vm2133 = vcmp.lt.s32.totalorder %v2132, 2
          %vm2134 = vcmp.eq.s32.totalorder %v2132, 0
          %v2135 = vxor.u32 %v2129, 2147483648
          %v2136 = vsel %vm2134, %v2128, %v2135
          %vm2137 = vcmp.eq.s32.totalorder %v2132, 2
          %v2138 = vxor.u32 %v2128, 2147483648
          %v2139 = vsel %vm2137, %v2138, %v2129
          %v2140 = vsel %vm2133, %v2136, %v2139
          %v2141 = vsel %vm2130, nan, %v2140
          %v2142 = vmax.f32 %v1926, 0.005
          %v2143 = vmax.f32 %v1927, 0.005
          %v2144 = vlog2.pop %v2142
          %v2145 = vmul.f32 %v2144, 0.6931472
          %v2146 = vlog2.pop %v2143
          %v2147 = vmul.f32 %v2146, 0.6931472
          %s2148 = sld [smem:[#allocation10 + $0x10]]
          %v2149 = vstv %s2148
          %v2150 = vmul.f32 %v2149, %v1860
          %v2151 = vmul.f32 %v2149, %v1861
          %s2152 = sld [smem:[#allocation2]]
          %v2153 = vstv %s2152
          %v2154 = vadd.f32 %v2150, %v2153
          %v2155 = vadd.f32 %v2151, %v2153
          %s2156 = sld [smem:[#allocation10 + $0x11]]
          %v2157 = vstv %s2156
          %v2158 = vmul.f32 %v2157, %v1931
          %v2159 = vmul.f32 %v2157, %v1933
          %v2160 = vadd.f32 %v2154, %v2158
          %v2161 = vadd.f32 %v2155, %v2159
          %s2162 = sld [smem:[#allocation10 + $0x12]]
          %v2163 = vstv %s2162
          %v2164 = vmul.f32 %v2163, %v2037
          %v2165 = vmul.f32 %v2163, %v2141
          %v2166 = vadd.f32 %v2160, %v2164
          %v2167 = vadd.f32 %v2161, %v2165
          %s2168 = sld [smem:[#allocation10 + $0x13]]
          %v2169 = vstv %s2168
          %v2170 = vmul.f32 %v2169, %v2145
          %v2171 = vmul.f32 %v2169, %v2147
          %v2172 = vadd.f32 %v2166, %v2170
          %v2173 = vadd.f32 %v2167, %v2171
          %s2174 = sld [smem:[#allocation10]]
          %v2175 = vstv %s2174
          %v2176 = vmul.f32 %v2175, %v323
          %v2177 = vmul.f32 %v2175, %v324
          %v2178 = vadd.f32 %v2172, %v2176
          %v2179 = vadd.f32 %v2173, %v2177
          %s2180 = sld [smem:[#allocation10 + $0x1]]
          %v2181 = vstv %s2180
          %v2182 = vmul.f32 %v2181, %v328
          %v2183 = vmul.f32 %v2181, %v329
          %v2184 = vadd.f32 %v2178, %v2182
          %v2185 = vadd.f32 %v2179, %v2183
          %s2186 = sld [smem:[#allocation10 + $0x2]]
          %v2187 = vstv %s2186
          %v2188 = vmul.f32 %v2187, %v333
          %v2189 = vmul.f32 %v2187, %v334
          %v2190 = vadd.f32 %v2184, %v2188
          %v2191 = vadd.f32 %v2185, %v2189
          %s2192 = sld [smem:[#allocation10 + $0x3]]
          %v2193 = vstv %s2192
          %v2194 = vmul.f32 %v2193, %v338
          %v2195 = vmul.f32 %v2193, %v339
          %v2196 = vadd.f32 %v2190, %v2194
          %v2197 = vadd.f32 %v2191, %v2195
          %s2198 = sld [smem:[#allocation10 + $0x4]]
          %v2199 = vstv %s2198
          %v2200 = vmul.f32 %v2199, %v736
          %v2201 = vmul.f32 %v2199, %v737
          %v2202 = vadd.f32 %v2196, %v2200
          %v2203 = vadd.f32 %v2197, %v2201
          %s2204 = sld [smem:[#allocation10 + $0x5]]
          %v2205 = vstv %s2204
          %v2206 = vmul.f32 %v2205, %v738
          %v2207 = vmul.f32 %v2205, %v739
          %v2208 = vadd.f32 %v2202, %v2206
          %v2209 = vadd.f32 %v2203, %v2207
          %s2210 = sld [smem:[#allocation10 + $0x6]]
          %v2211 = vstv %s2210
          %v2212 = vmul.f32 %v2211, %v740
          %v2213 = vmul.f32 %v2211, %v741
          %v2214 = vadd.f32 %v2208, %v2212
          %v2215 = vadd.f32 %v2209, %v2213
          %s2216 = sld [smem:[#allocation10 + $0x7]]
          %v2217 = vstv %s2216
          %v2218 = vmul.f32 %v2217, %v742
          %v2219 = vmul.f32 %v2217, %v743
          %v2220 = vadd.f32 %v2214, %v2218
          %v2221 = vadd.f32 %v2215, %v2219
          %s2222 = sld [smem:[#allocation10 + $0x8]]
          %v2223 = vstv %s2222
          %v2224 = vmul.f32 %v2223, %v1236
          %v2225 = vmul.f32 %v2223, %v1237
          %v2226 = vadd.f32 %v2220, %v2224
          %v2227 = vadd.f32 %v2221, %v2225
          %s2228 = sld [smem:[#allocation10 + $0x9]]
          %v2229 = vstv %s2228
          %v2230 = vmul.f32 %v2229, %v1238
          %v2231 = vmul.f32 %v2229, %v1239
          %v2232 = vadd.f32 %v2226, %v2230
          %v2233 = vadd.f32 %v2227, %v2231
          %s2234 = sld [smem:[#allocation10 + $0xa]]
          %v2235 = vstv %s2234
          %v2236 = vmul.f32 %v2235, %v1240
          %v2237 = vmul.f32 %v2235, %v1241
          %v2238 = vadd.f32 %v2232, %v2236
          %v2239 = vadd.f32 %v2233, %v2237
          %s2240 = sld [smem:[#allocation10 + $0xb]]
          %v2241 = vstv %s2240
          %v2242 = vmul.f32 %v2241, %v1242
          %v2243 = vmul.f32 %v2241, %v1243
          %v2244 = vadd.f32 %v2238, %v2242
          %v2245 = vadd.f32 %v2239, %v2243
          %s2246 = sld [smem:[#allocation10 + $0xc]]
          %v2247 = vstv %s2246
          %v2248 = vmul.f32 %v2247, %v1832
          %v2249 = vmul.f32 %v2247, %v1833
          %v2250 = vadd.f32 %v2244, %v2248
          %v2251 = vadd.f32 %v2245, %v2249
          %s2252 = sld [smem:[#allocation10 + $0xd]]
          %v2253 = vstv %s2252
          %v2254 = vmul.f32 %v2253, %v1834
          %v2255 = vmul.f32 %v2253, %v1835
          %v2256 = vadd.f32 %v2250, %v2254
          %v2257 = vadd.f32 %v2251, %v2255
          %s2258 = sld [smem:[#allocation10 + $0xe]]
          %v2259 = vstv %s2258
          %v2260 = vmul.f32 %v2259, %v1836
          %v2261 = vmul.f32 %v2259, %v1837
          %v2262 = vadd.f32 %v2256, %v2260
          %v2263 = vadd.f32 %v2257, %v2261
          %s2264 = sld [smem:[#allocation10 + $0xf]]
          %v2265 = vstv %s2264
          %v2266 = vmul.f32 %v2265, %v1838
          %v2267 = vmul.f32 %v2265, %v1839
          %v2268 = vadd.f32 %v2262, %v2266
          %v2269 = vadd.f32 %v2263, %v2267
          %s2270 = smul.addr %s320, 8
          %s2271 = scalar_lea.vmem %s308, %s2270 [#allocation11]
          %2272 = vst [vmem:[%s2271] sm:$0xff] %v2268
          %2273 = vst [vmem:[%s2271 + $0x8] sm:$0xff] %v2269
        $region61: #{tpu_custom_call.1} parent=39 // loop_footer
          %s316 = sadd.s32 1, %s312
        $region62: #{tpu_custom_call.1} parent=39 // loop_footer_branch
          %311 = sbr.rel target = $region58
        $region63: #{tpu_custom_call.1} parent=39 // loop_exit
          _
        %s2274 = sand.u32 %s143, 1
        %s2275 = scalar_lea.sflag [#allocation5], %s2274
        %s2276 = sand.u32 %s143, 1
        %s2277 = smul.addr %s2276, 32
        %s2278 = scalar_lea.vmem [#allocation11], %s2277
        // Predicated region
        $region64: #{tpu_custom_call.1} parent=39 // pred_check
          %p2279 = pneg %p153
        $region65: #{tpu_custom_call.1} parent=39 // pred_check_branch
          %2281 = sbr.rel (%p2279) target = $region67
        $region66: #{tpu_custom_call.1} parent=39 // pred_region
          %s2282 = smul.u32 2, %s25
          %s2284 = ssub.s32 512, 512
          %2285 = vsyncadd %s2275, %s2284
          %s2286 = smul.addr %s2282, 2
          %s2287 = smul.addr %s2286, 128
          %s2288 = scalar_lea.hbm %s5, %s2287
          %s2289 = sshll.u32 %s2278, 4
          %s2290 = int_to_ptr.vmem [resolvable:$true] %s2289
          %2295 = dma.vmem_to_hbm [thread:$0]  %s2290, 512, %s2288, %s2275, 256, 256, 16
        $region67: #{tpu_custom_call.1} parent=39 // pred_fallthru
          _
      $region40: #{tpu_custom_call.1} parent=5 // pred_fallthru
        _
      %p2296 = scmp.le.s32.totalorder 2, %s20
      // Predicated region
      $region68: #{tpu_custom_call.1} parent=5 // pred_check
        %p2297 = pneg %p2296
      $region69: #{tpu_custom_call.1} parent=5 // pred_check_branch
        %2299 = sbr.rel (%p2297) target = $region71
      $region70: #{tpu_custom_call.1} parent=5 // pred_region
        %s2300 = ssub.s32 %s20, 2
        // Predicated region
        $region72: #{tpu_custom_call.1} parent=70 // pred_check
          %p2301 = pneg %p159
        $region73: #{tpu_custom_call.1} parent=70 // pred_check_branch
          %2303 = sbr.rel (%p2301) target = $region75
        $region74: #{tpu_custom_call.1} parent=70 // pred_region
          %s2304 = sand.u32 %s144, 1
          %s2305 = scalar_lea.sflag [#allocation5], %s2304
          %s2306 = sand.u32 %s144, 1
          %s2307 = smul.addr %s2306, 32
          %s2308 = scalar_lea.vmem [#allocation11], %s2307
          %2309 = dma.done %s2305, 512
        $region75: #{tpu_custom_call.1} parent=70 // pred_fallthru
          _
      $region71: #{tpu_custom_call.1} parent=5 // pred_fallthru
        _
    $region6: #{tpu_custom_call.1} parent=1 // loop_footer
      %s24 = sadd.s32 1, %s20
    $region7: #{tpu_custom_call.1} parent=1 // loop_footer_branch
      %19 = sbr.rel target = $region3
    $region8: #{tpu_custom_call.1} parent=1 // loop_exit
      _
    %2310 = vsyncpa [#allocation4], 1
    %s2311 = scalar_lea.sflag [#allocation4], 1
    %2312 = vsyncpa %s2311, 1
    %2313 = vsyncpa [#allocation5], 1
    %s2314 = scalar_lea.sflag [#allocation5], 1
    %2315 = vsyncpa %s2314, 1
    %2316 = vsyncpa [#allocation6], 1
    %s2317 = scalar_lea.sflag [#allocation6], 1
    %2318 = vsyncpa %s2317, 1
    %2319 = vsyncpa [#allocation9], 1

</llo_original>
